<compile_context>
chip_gen: v7x
topology: tpu7x:2x2x1
jax: 0.10.0
libtpu: 0.0.40
codegen_flags: <defaults>
</compile_context>

<pallas_src>
import functools
import math

import jax
import jax.numpy as jnp
from jax import lax
from jax.experimental import pallas as pl
from jax.experimental.pallas import tpu as pltpu

BN_EPS = 1e-5
FEAT_DIM = 32                  # feature head width
HEAD_DIM = 128                 # packed head width (32 feature + clf_out logits, zero-padded)
H1, H2, H3 = 1024, 512, 128    # hidden widths (1000 lane-padded to 1024)


def _round_up(x, m):
    return (x + m - 1) // m * m


def _tpu_vmem_capacity():
    # Generation-aware VMEM sizing: 128 MiB per TC on v5e/v6e, 64 MiB on v7x.
    try:
        return int(pltpu.get_tpu_info().vmem_capacity_bytes)
    except Exception:
        return 64 << 20        # conservative fallback (v7x-sized)


def _k_tile_target():
    # v7x trades smaller VMEM (64 MiB) for ~2.3x the HBM bandwidth of v6e, so
    # per-step DMA time is tiny vs the ~0.35us grid-step overhead -> bigger tile.
    return 2048 if _tpu_vmem_capacity() <= (64 << 20) else 1024


def _layer1_k_tiling(input_dim, tk_target):
    """Returns (padded K, K tile, number of K steps) for layer 1."""
    dk128 = _round_up(input_dim, 128)
    if dk128 <= tk_target:
        return dk128, dk128, 1            # single step, no extra padding
    dk = _round_up(dk128, tk_target)      # at most one extra tile of padding
    return dk, tk_target, dk // tk_target


def _bn_relu(h, g, be):
    # BatchNorm1d train-mode forward (biased batch statistics) + ReLU, in f32.
    mean = jnp.mean(h, axis=0, keepdims=True)
    d = h - mean                                  # reused for var + normalize
    var = jnp.mean(d * d, axis=0, keepdims=True)
    return jnp.maximum(d * lax.rsqrt(var + BN_EPS) * g + be, 0.0)


def _dot_bf16(a, w_ref):
    # bf16 x bf16 MXU matmul, f32 accumulation.  Only the tiny activation
    # operand is cast; the bf16 weight tile is fed straight from VMEM.
    return jnp.dot(a.astype(jnp.bfloat16), w_ref[...],
                   preferred_element_type=jnp.float32)


def _smile_kernel(clf_out,
                  x_ref, w1_ref, w2_ref, w3_ref, wh_ref, bn_ref,
                  out_ref, acc_ref):
    k = pl.program_id(0)

    @pl.when(k == 0)
    def _():
        acc_ref[...] = jnp.zeros_like(acc_ref)

    # Layer 1, K-tiled over input_dim (grid axis 0).  x is already bf16; no
    # bias: BN's batch-mean subtraction cancels it exactly.
    acc_ref[...] += jnp.dot(x_ref[...], w1_ref[...],
                            preferred_element_type=jnp.float32)

    @pl.when(k == pl.num_programs(0) - 1)
    def _():
        # Packed BN/bias slab rows:
        #   0: g1  1: be1  2: g2  3: be2  4: g3  5: be3  6: fused head bias
        h = _bn_relu(acc_ref[...], bn_ref[0:1, :], bn_ref[1:2, :])
        h = _bn_relu(_dot_bf16(h, w2_ref), bn_ref[2:3, :H2], bn_ref[3:4, :H2])
        h = _bn_relu(_dot_bf16(h, w3_ref), bn_ref[4:5, :H3], bn_ref[5:6, :H3])

        # Fused heads: one lane-dense (128, 128) matmul (cols [0,32)=feature,
        # [32,32+clf_out)=classifier logits, rest zero).
        head = _dot_bf16(h, wh_ref) + bn_ref[6:7, :HEAD_DIM]

        lane = lax.broadcasted_iota(jnp.int32, head.shape, 1)
        is_clf = (lane >= FEAT_DIM) & (lane < FEAT_DIM + clf_out)

        # Softmax(dim=1) over the clf_out logit lanes only (full-width VPU ops,
        # no lane-sparse slicing inside the kernel).
        m = jnp.max(jnp.where(is_clf, head, -1e30), axis=1, keepdims=True)
        e = jnp.where(is_clf, jnp.exp(head - m), 0.0)
        y = e / jnp.sum(e, axis=1, keepdims=True)   # exact divide: sum(y) == 1

        # cols [0,32) = feature output, [32,32+clf_out) = probabilities, rest 0.
        out_ref[...] = jnp.where(lane < FEAT_DIM, head, y)


def _vmem_limit_bytes(B, tk, capacity):
    bf16, f32 = 2, 4
    streamed = 2 * (B * tk + tk * H1) * bf16                      # double-buffered layer-1 K blocks
    resident = 2 * (H1 * H2 + H2 * H3 + H3 * HEAD_DIM) * bf16     # grid-invariant bf16 weights
    resident += 2 * 8 * H1 * f32                                  # packed BN/bias slab
    resident += 2 * B * HEAD_DIM * f32 + B * H1 * f32             # output slab + accumulator
    total = streamed + resident + (4 << 20)                       # Mosaic scratch headroom
    return max(16 << 20, min(total, capacity // 2))


def smile_forward(x, kp, clf_out):
    """x: (B, input_dim) float32; kp: packed kernel params. Returns (f, y)."""
    B, input_dim = x.shape
    DK, tk, n_k = _layer1_k_tiling(input_dim, _k_tile_target())
    assert kp["w1"].shape[0] == DK, "pack_params / smile_forward K-tiling mismatch"

    # bf16 x stream: half the bytes, no per-block in-kernel cast.
    xp = x.astype(jnp.bfloat16)
    if DK != input_dim:
        xp = jnp.pad(xp, ((0, 0), (0, DK - input_dim)))

    args = (xp, kp["w1"], kp["w2"], kp["w3"], kp["wh"], kp["bn"])

    in_specs = [
        pl.BlockSpec((B, tk), lambda k: (0, k)),           # x: K-tiled stream
        pl.BlockSpec((tk, H1), lambda k: (k, 0)),          # w1: K-tiled stream
        pl.BlockSpec((H1, H2), lambda k: (0, 0)),          # w2: resident
        pl.BlockSpec((H2, H3), lambda k: (0, 0)),          # w3: resident
        pl.BlockSpec((H3, HEAD_DIM), lambda k: (0, 0)),    # fused head weight
        pl.BlockSpec((8, H1), lambda k: (0, 0)),           # packed BN/bias slab
    ]

    out_packed = pl.pallas_call(
        functools.partial(_smile_kernel, clf_out),
        out_shape=jax.ShapeDtypeStruct((B, HEAD_DIM), jnp.float32),
        grid_spec=pltpu.PrefetchScalarGridSpec(
            num_scalar_prefetch=0,
            grid=(n_k,),
            in_specs=in_specs,
            out_specs=pl.BlockSpec((B, HEAD_DIM), lambda k: (0, 0)),
            scratch_shapes=[pltpu.VMEM((B, H1), jnp.float32)],
        ),
        compiler_params=pltpu.CompilerParams(
            dimension_semantics=("arbitrary",),            # K reduction axis
            vmem_limit_bytes=_vmem_limit_bytes(B, tk, _tpu_vmem_capacity()),
        ),
    )(*args)

    f = out_packed[:, :FEAT_DIM]
    y = out_packed[:, FEAT_DIM:FEAT_DIM + clf_out]
    return f, y


def init_params(key, input_dim, clf_out):
    """PyTorch-layout f32 parameters: uniform ±1/sqrt(fan_in), BN gamma=1 / beta=0."""
    p = {}
    for name, din, dout in (("1", input_dim, 1000), ("2", 1000, 512), ("3", 512, 128)):
        key, kw, kb = jax.random.split(key, 3)
        bound = 1.0 / math.sqrt(din)
        p["w" + name] = jax.random.uniform(kw, (din, dout), jnp.float32, -bound, bound)
        p["b" + name] = jax.random.uniform(kb, (1, dout), jnp.float32, -bound, bound)
        p["g" + name] = jnp.ones((1, dout), jnp.float32)
        p["be" + name] = jnp.zeros((1, dout), jnp.float32)
    bound = 1.0 / math.sqrt(128)
    key, kw, kb = jax.random.split(key, 3)
    p["wf"] = jax.random.uniform(kw, (128, FEAT_DIM), jnp.float32, -bound, bound)
    p["bf"] = jax.random.uniform(kb, (1, FEAT_DIM), jnp.float32, -bound, bound)
    key, kw, kb = jax.random.split(key, 3)
    p["wc"] = jax.random.uniform(kw, (128, clf_out), jnp.float32, -bound, bound)
    p["bc"] = jax.random.uniform(kb, (1, clf_out), jnp.float32, -bound, bound)
    return p


def pack_params(p, input_dim, clf_out):
    """Kernel layout: lane-padded, head-fused, bf16 weight storage, packed f32 BN slab."""
    assert clf_out <= HEAD_DIM - FEAT_DIM, "clf_out must fit the packed 128-wide head slab"
    DK, _, _ = _layer1_k_tiling(input_dim, _k_tile_target())

    def pad2(a, rows, cols):
        return jnp.pad(a, ((0, rows - a.shape[0]), (0, cols - a.shape[1])))

    kp = {}
    # b1/b2/b3 are intentionally dropped: BatchNorm's batch-mean subtraction
    # cancels a per-feature bias exactly (train-mode batch statistics).
    kp["w1"] = pad2(p["w1"], DK, H1).astype(jnp.bfloat16)
    kp["w2"] = pad2(p["w2"], H1, H2).astype(jnp.bfloat16)
    kp["w3"] = p["w3"].astype(jnp.bfloat16)

    # Fused head weight: cols [0,32) = feature head, [32,32+clf_out) = clf head.
    wh = jnp.zeros((H3, HEAD_DIM), jnp.float32)
    wh = wh.at[:, :FEAT_DIM].set(p["wf"])
    wh = wh.at[:, FEAT_DIM:FEAT_DIM + clf_out].set(p["wc"])
    kp["wh"] = wh.astype(jnp.bfloat16)

    # One (8, H1) f32 slab instead of seven (1, H) vectors (each of which would
    # pad its sublane dim to 8 and issue its own DMA).  Padded gamma/beta stay 0
    # so padded H1 channels remain exactly 0 after BN.
    slab = jnp.zeros((8, H1), jnp.float32)
    slab = slab.at[0, :p["g1"].shape[1]].set(p["g1"][0])
    slab = slab.at[1, :p["be1"].shape[1]].set(p["be1"][0])
    slab = slab.at[2, :H2].set(p["g2"][0])
    slab = slab.at[3, :H2].set(p["be2"][0])
    slab = slab.at[4, :H3].set(p["g3"][0])
    slab = slab.at[5, :H3].set(p["be3"][0])
    slab = slab.at[6, :FEAT_DIM].set(p["bf"][0])
    slab = slab.at[6, FEAT_DIM:FEAT_DIM + clf_out].set(p["bc"][0])
    kp["bn"] = slab
    return kp


def smile_reference(x, p, clf_out):
    """Pure-JAX reference with the original module structure (1000-wide hidden,
    separate heads, biases on every Linear).  Matmul inputs are rounded through
    bf16 (f32 accumulation) to mirror the kernel's deliberate bf16-MXU-input
    policy; everything else (BN, softmax) is f32."""

    def mm(a, w):
        return jnp.dot(a.astype(jnp.bfloat16), w.astype(jnp.bfloat16),
                       preferred_element_type=jnp.float32)

    def bn_relu(h, g, be):
        mean = jnp.mean(h, axis=0, keepdims=True)
        var = jnp.mean((h - mean) ** 2, axis=0, keepdims=True)
        return jnp.maximum((h - mean) / jnp.sqrt(var + BN_EPS) * g + be, 0.0)

    h = bn_relu(mm(x, p["w1"]) + p["b1"], p["g1"], p["be1"])
    h = bn_relu(mm(h, p["w2"]) + p["b2"], p["g2"], p["be2"])
    h = bn_relu(mm(h, p["w3"]) + p["b3"], p["g3"], p["be3"])
    f = mm(h, p["wf"]) + p["bf"]
    y = jax.nn.softmax(mm(h, p["wc"]) + p["bc"], axis=1)
    return f, y


if __name__ == "__main__":
    # Small shapes consistent with the module: batch=8, input_dim=256, clf_out=10.
    B, INPUT_DIM, CLF_OUT = 8, 256, 10

    key = jax.random.PRNGKey(0)
    key, kx = jax.random.split(key)
    x = jax.random.normal(kx, (B, INPUT_DIM), jnp.float32)

    params = init_params(key, INPUT_DIM, CLF_OUT)
    kparams = pack_params(params, INPUT_DIM, CLF_OUT)

    f, y = smile_forward(x, kparams, CLF_OUT)
    f, y = jax.block_until_ready((f, y))

    f_ref, y_ref = smile_reference(x, params, CLF_OUT)
    assert f.shape == (B, FEAT_DIM) and y.shape == (B, CLF_OUT)
    # Tolerances account for the intentional bf16 MXU-input quantization (also
    # mirrored in the reference) plus accumulation-order differences; the
    # normalization check stays tight.
    assert bool(jnp.allclose(f, f_ref, atol=1e-2, rtol=1e-2))
    assert bool(jnp.allclose(y, y_ref, atol=5e-3, rtol=1e-2))
    assert bool(jnp.allclose(jnp.sum(y, axis=1), 1.0, atol=1e-5))

    print("KERNEL_OK")
</pallas_src>

<mosaic_0001>
module attributes {stable_mosaic.version = 11 : i64} {
  func.func @_smile_kernel(%arg0: i32, %arg1: memref<8x256xbf16, #tpu.memory_space<vmem>>, %arg2: memref<256x1024xbf16, #tpu.memory_space<vmem>>, %arg3: memref<1024x512xbf16, #tpu.memory_space<vmem>>, %arg4: memref<512x128xbf16, #tpu.memory_space<vmem>>, %arg5: memref<128x128xbf16, #tpu.memory_space<vmem>>, %arg6: memref<8x1024xf32, #tpu.memory_space<vmem>>, %arg7: memref<8x128xf32, #tpu.memory_space<vmem>>, %arg8: memref<8x1024xf32, #tpu.memory_space<vmem>>) attributes {dimension_semantics = [#tpu.dimension_semantics<arbitrary>], iteration_bounds = array<i64: 1>, scalar_prefetch = 0 : i64, scratch_operands = 1 : i64, tpu.core_type = #tpu.core_type<tc>, window_params = [{transform_indices = @transform_0, window_bounds = array<i64: 8, 256>}, {transform_indices = @transform_1, window_bounds = array<i64: 256, 1024>}, {pipeline_mode = #tpu.pipeline_mode<synchronous>, transform_indices = @transform_2, window_bounds = array<i64: 1024, 512>}, {pipeline_mode = #tpu.pipeline_mode<synchronous>, transform_indices = @transform_3, window_bounds = array<i64: 512, 128>}, {pipeline_mode = #tpu.pipeline_mode<synchronous>, transform_indices = @transform_4, window_bounds = array<i64: 128, 128>}, {pipeline_mode = #tpu.pipeline_mode<synchronous>, transform_indices = @transform_5, window_bounds = array<i64: 8, 1024>}, {pipeline_mode = #tpu.pipeline_mode<synchronous>, transform_indices = @transform_6, window_bounds = array<i64: 8, 128>}]} {
    %c0_i32 = arith.constant 0 : i32
    %0 = arith.cmpi eq, %arg0, %c0_i32 : i32
    %1 = arith.extui %0 : i1 to i32
    %c0_i32_0 = arith.constant 0 : i32
    %2 = arith.cmpi ne, %1, %c0_i32_0 : i32
    scf.if %2 {
      %cst_10 = arith.constant 0.000000e+00 : f32
      %12 = vector.broadcast %cst_10 : f32 to vector<8x1024xf32>
      %c0_11 = arith.constant 0 : index
      %c0_12 = arith.constant 0 : index
      %13 = vector.load %arg8[%c0_11, %c0_12] : memref<8x1024xf32, #tpu.memory_space<vmem>>, vector<8x1024xf32>
      tpu.vector_store %arg8[%c0_11, %c0_12], %12 {strides = array<i32>} : memref<8x1024xf32, #tpu.memory_space<vmem>>, vector<8x1024xf32>,
    } else {
    }
    %c0 = arith.constant 0 : index
    %c0_1 = arith.constant 0 : index
    %3 = vector.load %arg8[%c0, %c0_1] : memref<8x1024xf32, #tpu.memory_space<vmem>>, vector<8x1024xf32>
    %c0_2 = arith.constant 0 : index
    %c0_3 = arith.constant 0 : index
    %4 = vector.load %arg1[%c0_2, %c0_3] : memref<8x256xbf16, #tpu.memory_space<vmem>>, vector<8x256xbf16>
    %c0_4 = arith.constant 0 : index
    %c0_5 = arith.constant 0 : index
    %5 = vector.load %arg2[%c0_4, %c0_5] : memref<256x1024xbf16, #tpu.memory_space<vmem>>, vector<256x1024xbf16>
    %cst = arith.constant dense<0.000000e+00> : vector<8x1024xf32>
    %6 = tpu.matmul %4, %5, %cst {dimension_numbers = #tpu.dot_dimension_numbers<[1], [0], [0], [1], [0, 0, 1, 1], [], []>} : vector<8x256xbf16>, vector<256x1024xbf16>, vector<8x1024xf32> -> vector<8x1024xf32>
    %7 = arith.addf %3, %6 : vector<8x1024xf32>
    %c0_6 = arith.constant 0 : index
    %c0_7 = arith.constant 0 : index
    %8 = vector.load %arg8[%c0_6, %c0_7] : memref<8x1024xf32, #tpu.memory_space<vmem>>, vector<8x1024xf32>
    tpu.vector_store %arg8[%c0_6, %c0_7], %7 {strides = array<i32>} : memref<8x1024xf32, #tpu.memory_space<vmem>>, vector<8x1024xf32>,
    %c0_i32_8 = arith.constant 0 : i32
    %9 = arith.cmpi eq, %arg0, %c0_i32_8 : i32
    %10 = arith.extui %9 : i1 to i32
    %c0_i32_9 = arith.constant 0 : i32
    %11 = arith.cmpi ne, %10, %c0_i32_9 : i32
    scf.if %11 {
      %c0_10 = arith.constant 0 : index
      %c0_11 = arith.constant 0 : index
      %12 = vector.load %arg8[%c0_10, %c0_11] : memref<8x1024xf32, #tpu.memory_space<vmem>>, vector<8x1024xf32>
      %c0_12 = arith.constant 0 : index
      %c0_13 = arith.constant 0 : index
      %13 = vector.load %arg6[%c0_12, %c0_13] : memref<8x1024xf32, #tpu.memory_space<vmem>>, vector<1x1024xf32>
      %c1 = arith.constant 1 : index
      %c0_14 = arith.constant 0 : index
      %14 = vector.load %arg6[%c1, %c0_14] : memref<8x1024xf32, #tpu.memory_space<vmem>>, vector<1x1024xf32>
      %cst_15 = arith.constant dense<0.000000e+00> : vector<1024xf32>
      %15 = vector.multi_reduction <add>, %12, %cst_15 [0] : vector<8x1024xf32> to vector<1024xf32>
      %16 = vector.shape_cast %15 : vector<1024xf32> to vector<1x1024xf32>
      %cst_16 = arith.constant 8.000000e+00 : f32
      %17 = vector.broadcast %cst_16 : f32 to vector<1x1024xf32>
      %18 = arith.divf %16, %17 : vector<1x1024xf32>
      %19 = vector.broadcast %18 : vector<1x1024xf32> to vector<8x1024xf32>
      %20 = arith.subf %12, %19 : vector<8x1024xf32>
      %21 = arith.mulf %20, %20 : vector<8x1024xf32>
      %cst_17 = arith.constant dense<0.000000e+00> : vector<1024xf32>
      %22 = vector.multi_reduction <add>, %21, %cst_17 [0] : vector<8x1024xf32> to vector<1024xf32>
      %23 = vector.shape_cast %22 : vector<1024xf32> to vector<1x1024xf32>
      %cst_18 = arith.constant 8.000000e+00 : f32
      %24 = vector.broadcast %cst_18 : f32 to vector<1x1024xf32>
      %25 = arith.divf %23, %24 : vector<1x1024xf32>
      %cst_19 = arith.constant 9.99999974E-6 : f32
      %26 = vector.broadcast %cst_19 : f32 to vector<1x1024xf32>
      %27 = arith.addf %25, %26 : vector<1x1024xf32>
      %28 = math.rsqrt %27 : vector<1x1024xf32>
      %29 = vector.broadcast %28 : vector<1x1024xf32> to vector<8x1024xf32>
      %30 = arith.mulf %20, %29 : vector<8x1024xf32>
      %31 = vector.broadcast %13 : vector<1x1024xf32> to vector<8x1024xf32>
      %32 = arith.mulf %30, %31 : vector<8x1024xf32>
      %33 = vector.broadcast %14 : vector<1x1024xf32> to vector<8x1024xf32>
      %34 = arith.addf %32, %33 : vector<8x1024xf32>
      %cst_20 = arith.constant 0.000000e+00 : f32
      %35 = vector.broadcast %cst_20 : f32 to vector<8x1024xf32>
      %36 = arith.maximumf %34, %35 : vector<8x1024xf32>
      %37 = arith.truncf %36 : vector<8x1024xf32> to vector<8x1024xbf16>
      %c0_21 = arith.constant 0 : index
      %c0_22 = arith.constant 0 : index
      %38 = vector.load %arg3[%c0_21, %c0_22] : memref<1024x512xbf16, #tpu.memory_space<vmem>>, vector<1024x512xbf16>
      %cst_23 = arith.constant dense<0.000000e+00> : vector<8x512xf32>
      %39 = tpu.matmul %37, %38, %cst_23 {dimension_numbers = #tpu.dot_dimension_numbers<[1], [0], [0], [1], [0, 0, 1, 1], [], []>} : vector<8x1024xbf16>, vector<1024x512xbf16>, vector<8x512xf32> -> vector<8x512xf32>
      %c2 = arith.constant 2 : index
      %c0_24 = arith.constant 0 : index
      %40 = vector.load %arg6[%c2, %c0_24] : memref<8x1024xf32, #tpu.memory_space<vmem>>, vector<1x512xf32>
      %c3 = arith.constant 3 : index
      %c0_25 = arith.constant 0 : index
      %41 = vector.load %arg6[%c3, %c0_25] : memref<8x1024xf32, #tpu.memory_space<vmem>>, vector<1x512xf32>
      %cst_26 = arith.constant dense<0.000000e+00> : vector<512xf32>
      %42 = vector.multi_reduction <add>, %39, %cst_26 [0] : vector<8x512xf32> to vector<512xf32>
      %43 = vector.shape_cast %42 : vector<512xf32> to vector<1x512xf32>
      %cst_27 = arith.constant 8.000000e+00 : f32
      %44 = vector.broadcast %cst_27 : f32 to vector<1x512xf32>
      %45 = arith.divf %43, %44 : vector<1x512xf32>
      %46 = vector.broadcast %45 : vector<1x512xf32> to vector<8x512xf32>
      %47 = arith.subf %39, %46 : vector<8x512xf32>
      %48 = arith.mulf %47, %47 : vector<8x512xf32>
      %cst_28 = arith.constant dense<0.000000e+00> : vector<512xf32>
      %49 = vector.multi_reduction <add>, %48, %cst_28 [0] : vector<8x512xf32> to vector<512xf32>
      %50 = vector.shape_cast %49 : vector<512xf32> to vector<1x512xf32>
      %cst_29 = arith.constant 8.000000e+00 : f32
      %51 = vector.broadcast %cst_29 : f32 to vector<1x512xf32>
      %52 = arith.divf %50, %51 : vector<1x512xf32>
      %cst_30 = arith.constant 9.99999974E-6 : f32
      %53 = vector.broadcast %cst_30 : f32 to vector<1x512xf32>
      %54 = arith.addf %52, %53 : vector<1x512xf32>
      %55 = math.rsqrt %54 : vector<1x512xf32>
      %56 = vector.broadcast %55 : vector<1x512xf32> to vector<8x512xf32>
      %57 = arith.mulf %47, %56 : vector<8x512xf32>
      %58 = vector.broadcast %40 : vector<1x512xf32> to vector<8x512xf32>
      %59 = arith.mulf %57, %58 : vector<8x512xf32>
      %60 = vector.broadcast %41 : vector<1x512xf32> to vector<8x512xf32>
      %61 = arith.addf %59, %60 : vector<8x512xf32>
      %cst_31 = arith.constant 0.000000e+00 : f32
      %62 = vector.broadcast %cst_31 : f32 to vector<8x512xf32>
      %63 = arith.maximumf %61, %62 : vector<8x512xf32>
      %64 = arith.truncf %63 : vector<8x512xf32> to vector<8x512xbf16>
      %c0_32 = arith.constant 0 : index
      %c0_33 = arith.constant 0 : index
      %65 = vector.load %arg4[%c0_32, %c0_33] : memref<512x128xbf16, #tpu.memory_space<vmem>>, vector<512x128xbf16>
      %cst_34 = arith.constant dense<0.000000e+00> : vector<8x128xf32>
      %66 = tpu.matmul %64, %65, %cst_34 {dimension_numbers = #tpu.dot_dimension_numbers<[1], [0], [0], [1], [0, 0, 1, 1], [], []>} : vector<8x512xbf16>, vector<512x128xbf16>, vector<8x128xf32> -> vector<8x128xf32>
      %c4 = arith.constant 4 : index
      %c0_35 = arith.constant 0 : index
      %67 = vector.load %arg6[%c4, %c0_35] : memref<8x1024xf32, #tpu.memory_space<vmem>>, vector<1x128xf32>
      %c5 = arith.constant 5 : index
      %c0_36 = arith.constant 0 : index
      %68 = vector.load %arg6[%c5, %c0_36] : memref<8x1024xf32, #tpu.memory_space<vmem>>, vector<1x128xf32>
      %cst_37 = arith.constant dense<0.000000e+00> : vector<128xf32>
      %69 = vector.multi_reduction <add>, %66, %cst_37 [0] : vector<8x128xf32> to vector<128xf32>
      %70 = vector.shape_cast %69 : vector<128xf32> to vector<1x128xf32>
      %cst_38 = arith.constant 8.000000e+00 : f32
      %71 = vector.broadcast %cst_38 : f32 to vector<1x128xf32>
      %72 = arith.divf %70, %71 : vector<1x128xf32>
      %73 = vector.broadcast %72 : vector<1x128xf32> to vector<8x128xf32>
      %74 = arith.subf %66, %73 : vector<8x128xf32>
      %75 = arith.mulf %74, %74 : vector<8x128xf32>
      %cst_39 = arith.constant dense<0.000000e+00> : vector<128xf32>
      %76 = vector.multi_reduction <add>, %75, %cst_39 [0] : vector<8x128xf32> to vector<128xf32>
      %77 = vector.shape_cast %76 : vector<128xf32> to vector<1x128xf32>
      %cst_40 = arith.constant 8.000000e+00 : f32
      %78 = vector.broadcast %cst_40 : f32 to vector<1x128xf32>
      %79 = arith.divf %77, %78 : vector<1x128xf32>
      %cst_41 = arith.constant 9.99999974E-6 : f32
      %80 = vector.broadcast %cst_41 : f32 to vector<1x128xf32>
      %81 = arith.addf %79, %80 : vector<1x128xf32>
      %82 = math.rsqrt %81 : vector<1x128xf32>
      %83 = vector.broadcast %82 : vector<1x128xf32> to vector<8x128xf32>
      %84 = arith.mulf %74, %83 : vector<8x128xf32>
      %85 = vector.broadcast %67 : vector<1x128xf32> to vector<8x128xf32>
      %86 = arith.mulf %84, %85 : vector<8x128xf32>
      %87 = vector.broadcast %68 : vector<1x128xf32> to vector<8x128xf32>
      %88 = arith.addf %86, %87 : vector<8x128xf32>
      %cst_42 = arith.constant 0.000000e+00 : f32
      %89 = vector.broadcast %cst_42 : f32 to vector<8x128xf32>
      %90 = arith.maximumf %88, %89 : vector<8x128xf32>
      %91 = arith.truncf %90 : vector<8x128xf32> to vector<8x128xbf16>
      %c0_43 = arith.constant 0 : index
      %c0_44 = arith.constant 0 : index
      %92 = vector.load %arg5[%c0_43, %c0_44] : memref<128x128xbf16, #tpu.memory_space<vmem>>, vector<128x128xbf16>
      %cst_45 = arith.constant dense<0.000000e+00> : vector<8x128xf32>
      %93 = tpu.matmul %91, %92, %cst_45 {dimension_numbers = #tpu.dot_dimension_numbers<[1], [0], [0], [1], [0, 0, 1, 1], [], []>} : vector<8x128xbf16>, vector<128x128xbf16>, vector<8x128xf32> -> vector<8x128xf32>
      %c6 = arith.constant 6 : index
      %c0_46 = arith.constant 0 : index
      %94 = vector.load %arg6[%c6, %c0_46] : memref<8x1024xf32, #tpu.memory_space<vmem>>, vector<1x128xf32>
      %95 = vector.broadcast %94 : vector<1x128xf32> to vector<8x128xf32>
      %96 = arith.addf %93, %95 : vector<8x128xf32>
      %97 = tpu.iota {dimensions = array<i32: 1>} : vector<8x128xi32>
      %c32_i32 = arith.constant 32 : i32
      %98 = vector.broadcast %c32_i32 : i32 to vector<8x128xi32>
      %99 = arith.cmpi sge, %97, %98 : vector<8x128xi32>
      %c42_i32 = arith.constant 42 : i32
      %100 = vector.broadcast %c42_i32 : i32 to vector<8x128xi32>
      %101 = arith.cmpi slt, %97, %100 : vector<8x128xi32>
      %102 = arith.andi %99, %101 : vector<8x128xi1>
      %cst_47 = arith.constant -1.000000e+30 : f32
      %103 = vector.broadcast %cst_47 : f32 to vector<8x128xf32>
      %104 = arith.select %102, %96, %103 : vector<8x128xi1>, vector<8x128xf32>
      %cst_48 = arith.constant dense<0xFF800000> : vector<8xf32>
      %105 = vector.multi_reduction <maximumf>, %104, %cst_48 [1] : vector<8x128xf32> to vector<8xf32>
      %106 = vector.shape_cast %105 : vector<8xf32> to vector<8x1xf32>
      %107 = vector.broadcast %106 : vector<8x1xf32> to vector<8x128xf32>
      %108 = arith.subf %96, %107 : vector<8x128xf32>
      %109 = math.exp %108 : vector<8x128xf32>
      %cst_49 = arith.constant 0.000000e+00 : f32
      %110 = vector.broadcast %cst_49 : f32 to vector<8x128xf32>
      %111 = arith.select %102, %109, %110 : vector<8x128xi1>, vector<8x128xf32>
      %cst_50 = arith.constant dense<0.000000e+00> : vector<8xf32>
      %112 = vector.multi_reduction <add>, %111, %cst_50 [1] : vector<8x128xf32> to vector<8xf32>
      %113 = vector.shape_cast %112 : vector<8xf32> to vector<8x1xf32>
      %114 = vector.broadcast %113 : vector<8x1xf32> to vector<8x128xf32>
      %115 = arith.divf %111, %114 : vector<8x128xf32>
      %c32_i32_51 = arith.constant 32 : i32
      %116 = vector.broadcast %c32_i32_51 : i32 to vector<8x128xi32>
      %117 = arith.cmpi slt, %97, %116 : vector<8x128xi32>
      %118 = arith.select %117, %96, %115 : vector<8x128xi1>, vector<8x128xf32>
      %c0_52 = arith.constant 0 : index
      %c0_53 = arith.constant 0 : index
      %119 = vector.load %arg7[%c0_52, %c0_53] : memref<8x128xf32, #tpu.memory_space<vmem>>, vector<8x128xf32>
      tpu.vector_store %arg7[%c0_52, %c0_53], %118 {strides = array<i32>} : memref<8x128xf32, #tpu.memory_space<vmem>>, vector<8x128xf32>,
    } else {
    }
    return
  }
  func.func @transform_0(%arg0: i32) -> (i32, i32) {
    %c0_i32 = arith.constant 0 : i32
    %c0_i32_0 = arith.constant 0 : i32
    return %c0_i32, %arg0 : i32, i32
  }
  func.func @transform_1(%arg0: i32) -> (i32, i32) {
    %c0_i32 = arith.constant 0 : i32
    %c0_i32_0 = arith.constant 0 : i32
    return %arg0, %c0_i32 : i32, i32
  }
  func.func @transform_2(%arg0: i32) -> (i32, i32) {
    %c0_i32 = arith.constant 0 : i32
    %c0_i32_0 = arith.constant 0 : i32
    %c0_i32_1 = arith.constant 0 : i32
    return %c0_i32, %c0_i32_0 : i32, i32
  }
  func.func @transform_3(%arg0: i32) -> (i32, i32) {
    %c0_i32 = arith.constant 0 : i32
    %c0_i32_0 = arith.constant 0 : i32
    %c0_i32_1 = arith.constant 0 : i32
    return %c0_i32, %c0_i32_0 : i32, i32
  }
  func.func @transform_4(%arg0: i32) -> (i32, i32) {
    %c0_i32 = arith.constant 0 : i32
    %c0_i32_0 = arith.constant 0 : i32
    %c0_i32_1 = arith.constant 0 : i32
    return %c0_i32, %c0_i32_0 : i32, i32
  }
  func.func @transform_5(%arg0: i32) -> (i32, i32) {
    %c0_i32 = arith.constant 0 : i32
    %c0_i32_0 = arith.constant 0 : i32
    %c0_i32_1 = arith.constant 0 : i32
    return %c0_i32, %c0_i32_0 : i32, i32
  }
  func.func @transform_6(%arg0: i32) -> (i32, i32) {
    %c0_i32 = arith.constant 0 : i32
    %c0_i32_0 = arith.constant 0 : i32
    %c0_i32_1 = arith.constant 0 : i32
    return %c0_i32, %c0_i32_0 : i32, i32
  }
}

</mosaic_0001>

<llo_original>
// kernel: tpu_custom_call.1
$region0: #{tpu_custom_call.1}
  #allocation0 [shape = 'u32[]', space=smem, size = 0x4, offset = 0x4, fixed_abs, tag = 'smem constant byte address 0x4 - core index']
  #allocation1 [shape = 'u32[144,128]{1,0:T(1,128)}', space=vmem, size = 0x12000, scoped, tag = 'internal scratch']
  #allocation2 [shape = 'f32[8,1024]{1,0:T(8,128)}', space=vmem, size = 0x8000, scoped, tag = 'scratch operand']
  %s0 = inlined_call_operand.hbm [shape: bf16[8,256], index: 0, kind: input, shape index: {}]
  %s1 = inlined_call_operand.hbm [shape: bf16[256,1024], index: 1, kind: input, shape index: {}]
  %s2 = inlined_call_operand.hbm [shape: bf16[1024,512], index: 2, kind: input, shape index: {}]
  %s3 = inlined_call_operand.hbm [shape: bf16[512,128], index: 3, kind: input, shape index: {}]
  %s4 = inlined_call_operand.hbm [shape: bf16[128,128], index: 4, kind: input, shape index: {}]
  %s5 = inlined_call_operand.hbm [shape: f32[8,1024], index: 5, kind: input, shape index: {}]
  %s6 = inlined_call_operand.hbm [shape: f32[8,128], index: 6, kind: output, shape index: {}]
  %s7 = sld [smem:[#allocation0]]
  $region66: #{tpu_custom_call.1} parent=0
    _
  %s9 = ssub.s32 1, %s7
  %s10 = scalar_select 0, %s9, %s7
  $region1: #{tpu_custom_call.1} parent=0
    #allocation3 [shape = 'u8[4096]{0}', space=vmem, size = 0x1000, scoped, tag = 'input window, operand 0, single buffered']
    #allocation4 [shape = 's32[1]{0}', space=sflag, size = 0x4, scoped, tag = 'scoped memory for tpu_custom_call.1']
    #allocation5 [shape = 's32[1]{0}', space=sflag, size = 0x4, scoped, tag = 'scoped memory for tpu_custom_call.1']
    #allocation6 [shape = 'u8[524288]{0}', space=vmem, size = 0x80000, scoped, tag = 'input window, operand 1, single buffered']
    #allocation7 [shape = 's32[1]{0}', space=sflag, size = 0x4, scoped, tag = 'scoped memory for tpu_custom_call.1']
    #allocation8 [shape = 'u8[1048576]{0}', space=vmem, size = 0x100000, scoped, tag = 'input window, operand 2, single buffered']
    #allocation9 [shape = 'u8[131072]{0}', space=vmem, size = 0x20000, scoped, tag = 'input window, operand 3, single buffered']
    #allocation10 [shape = 's32[1]{0}', space=sflag, size = 0x4, scoped, tag = 'scoped memory for tpu_custom_call.1']
    #allocation11 [shape = 'u8[32768]{0}', space=vmem, size = 0x8000, scoped, tag = 'input window, operand 4, single buffered']
    #allocation12 [shape = 'u8[32768]{0}', space=vmem, size = 0x8000, scoped, tag = 'input window, operand 5, single buffered']
    #allocation13 [shape = 's32[1]{0}', space=sflag, size = 0x4, scoped, tag = 'scoped memory for tpu_custom_call.1']
    #allocation14 [shape = 'u8[4096]{0}', space=vmem, size = 0x1000, scoped, tag = 'output window, operand 0, single buffered']
    %11 = vsyncpa [#allocation4], 0
    %12 = vsyncpa [#allocation7], 0
    %13 = vsyncpa [#allocation10], 0
    %14 = vsyncpa [#allocation13], 0
    %15 = vsyncpa [#allocation5], 0
    // Predicated region
    $region2: #{tpu_custom_call.1} parent=1 // pred_check
      _
    $region3: #{tpu_custom_call.1} parent=1 // pred_check_branch
      %17 = sbr.rel (0) target = $region5
    $region4: #{tpu_custom_call.1} parent=1 // pred_region
      %s19 = ssub.s32 128, 128
      %20 = vsyncadd [#allocation4], %s19
      %s22 = sshll.u32 [#allocation3], 4
      %s23 = int_to_ptr.vmem [resolvable:$true] %s22
      %25 = dma.hbm_to_vmem [thread:$0]  %s0, 128, %s23, [#allocation4]
    $region5: #{tpu_custom_call.1} parent=1 // pred_fallthru
      _
    // Predicated region
    $region6: #{tpu_custom_call.1} parent=1 // pred_check
      _
    $region7: #{tpu_custom_call.1} parent=1 // pred_check_branch
      %27 = sbr.rel (0) target = $region9
    $region8: #{tpu_custom_call.1} parent=1 // pred_region
      %s29 = ssub.s32 16384, 16384
      %30 = vsyncadd [#allocation7], %s29
      %s31 = sshll.u32 [#allocation6], 4
      %s32 = int_to_ptr.vmem [resolvable:$true] %s31
      %37 = dma.hbm_to_vmem [thread:$0]  %s1, 16384, %s32, [#allocation7], 512, 512, 32
    $region9: #{tpu_custom_call.1} parent=1 // pred_fallthru
      _
    // Predicated region
    $region10: #{tpu_custom_call.1} parent=1 // pred_check
      _
    $region11: #{tpu_custom_call.1} parent=1 // pred_check_branch
      %39 = sbr.rel (0) target = $region13
    $region12: #{tpu_custom_call.1} parent=1 // pred_region
      %s41 = ssub.s32 32768, 32768
      %42 = vsyncadd [#allocation7], %s41
      %s43 = sshll.u32 [#allocation8], 4
      %s44 = int_to_ptr.vmem [resolvable:$true] %s43
      %49 = dma.hbm_to_vmem [thread:$0]  %s2, 32768, %s44, [#allocation7], 256, 256, 16
    $region13: #{tpu_custom_call.1} parent=1 // pred_fallthru
      _
    // Predicated region
    $region14: #{tpu_custom_call.1} parent=1 // pred_check
      _
    $region15: #{tpu_custom_call.1} parent=1 // pred_check_branch
      %51 = sbr.rel (0) target = $region17
    $region16: #{tpu_custom_call.1} parent=1 // pred_region
      %s53 = ssub.s32 4096, 4096
      %54 = vsyncadd [#allocation10], %s53
      %s55 = sshll.u32 [#allocation9], 4
      %s56 = int_to_ptr.vmem [resolvable:$true] %s55
      %61 = dma.hbm_to_vmem [thread:$0]  %s3, 4096, %s56, [#allocation10], 64, 64, 4
    $region17: #{tpu_custom_call.1} parent=1 // pred_fallthru
      _
    // Predicated region
    $region18: #{tpu_custom_call.1} parent=1 // pred_check
      _
    $region19: #{tpu_custom_call.1} parent=1 // pred_check_branch
      %63 = sbr.rel (0) target = $region21
    $region20: #{tpu_custom_call.1} parent=1 // pred_region
      %s65 = ssub.s32 1024, 1024
      %66 = vsyncadd [#allocation10], %s65
      %s67 = sshll.u32 [#allocation11], 4
      %s68 = int_to_ptr.vmem [resolvable:$true] %s67
      %73 = dma.hbm_to_vmem [thread:$0]  %s4, 1024, %s68, [#allocation10], 64, 64, 4
    $region21: #{tpu_custom_call.1} parent=1 // pred_fallthru
      _
    // Predicated region
    $region22: #{tpu_custom_call.1} parent=1 // pred_check
      _
    $region23: #{tpu_custom_call.1} parent=1 // pred_check_branch
      %75 = sbr.rel (0) target = $region25
    $region24: #{tpu_custom_call.1} parent=1 // pred_region
      %s77 = ssub.s32 1024, 1024
      %78 = vsyncadd [#allocation13], %s77
      %s80 = sshll.u32 [#allocation12], 4
      %s81 = int_to_ptr.vmem [resolvable:$true] %s80
      %83 = dma.hbm_to_vmem [thread:$0]  %s5, 1024, %s81, [#allocation13]
    $region25: #{tpu_custom_call.1} parent=1 // pred_fallthru
      _
    // Predicated region
    $region26: #{tpu_custom_call.1} parent=1 // pred_check
      _
    $region27: #{tpu_custom_call.1} parent=1 // pred_check_branch
      %85 = sbr.rel (0) target = $region29
    $region28: #{tpu_custom_call.1} parent=1 // pred_region
      %86 = dma.done [#allocation4], 128
    $region29: #{tpu_custom_call.1} parent=1 // pred_fallthru
      _
    // Predicated region
    $region30: #{tpu_custom_call.1} parent=1 // pred_check
      _
    $region31: #{tpu_custom_call.1} parent=1 // pred_check_branch
      %88 = sbr.rel (0) target = $region33
    $region32: #{tpu_custom_call.1} parent=1 // pred_region
      %89 = dma.done [#allocation7], 16384
    $region33: #{tpu_custom_call.1} parent=1 // pred_fallthru
      _
    // Predicated region
    $region34: #{tpu_custom_call.1} parent=1 // pred_check
      _
    $region35: #{tpu_custom_call.1} parent=1 // pred_check_branch
      %91 = sbr.rel (0) target = $region37
    $region36: #{tpu_custom_call.1} parent=1 // pred_region
      %92 = dma.done [#allocation7], 32768
    $region37: #{tpu_custom_call.1} parent=1 // pred_fallthru
      _
    // Predicated region
    $region38: #{tpu_custom_call.1} parent=1 // pred_check
      _
    $region39: #{tpu_custom_call.1} parent=1 // pred_check_branch
      %94 = sbr.rel (0) target = $region41
    $region40: #{tpu_custom_call.1} parent=1 // pred_region
      %95 = dma.done [#allocation10], 4096
    $region41: #{tpu_custom_call.1} parent=1 // pred_fallthru
      _
    // Predicated region
    $region42: #{tpu_custom_call.1} parent=1 // pred_check
      _
    $region43: #{tpu_custom_call.1} parent=1 // pred_check_branch
      %97 = sbr.rel (0) target = $region45
    $region44: #{tpu_custom_call.1} parent=1 // pred_region
      %98 = dma.done [#allocation10], 1024
    $region45: #{tpu_custom_call.1} parent=1 // pred_fallthru
      _
    // Predicated region
    $region46: #{tpu_custom_call.1} parent=1 // pred_check
      _
    $region47: #{tpu_custom_call.1} parent=1 // pred_check_branch
      %100 = sbr.rel (0) target = $region49
    $region48: #{tpu_custom_call.1} parent=1 // pred_region
      %101 = dma.done [#allocation13], 1024
    $region49: #{tpu_custom_call.1} parent=1 // pred_fallthru
      _
    %p103 = scmp.eq.s32.totalorder 0, 0
    // Predicated region
    $region50: #{tpu_custom_call.1} parent=1 // pred_check
      %p104 = pneg %p103
    $region51: #{tpu_custom_call.1} parent=1 // pred_check_branch
      %106 = sbr.rel (%p104) target = $region53
    $region52: #{tpu_custom_call.1} parent=1 // pred_region
      %107 = vst [vmem:[#allocation2] sm:$0xff] 0.0
      %108 = vst [vmem:[#allocation2 + $0x8] sm:$0xff] 0.0
      %109 = vst [vmem:[#allocation2 + $0x10] sm:$0xff] 0.0
      %110 = vst [vmem:[#allocation2 + $0x18] sm:$0xff] 0.0
      %111 = vst [vmem:[#allocation2 + $0x20] sm:$0xff] 0.0
      %112 = vst [vmem:[#allocation2 + $0x28] sm:$0xff] 0.0
      %113 = vst [vmem:[#allocation2 + $0x30] sm:$0xff] 0.0
      %114 = vst [vmem:[#allocation2 + $0x38] sm:$0xff] 0.0
    $region53: #{tpu_custom_call.1} parent=1 // pred_fallthru
      _
    %v115 = vld [vmem:[#allocation2] sm:$0xff]
    %v116 = vld [vmem:[#allocation2 + $0x8] sm:$0xff]
    %v117 = vld [vmem:[#allocation2 + $0x10] sm:$0xff]
    %v118 = vld [vmem:[#allocation2 + $0x18] sm:$0xff]
    %v119 = vld [vmem:[#allocation2 + $0x20] sm:$0xff]
    %v120 = vld [vmem:[#allocation2 + $0x28] sm:$0xff]
    %v121 = vld [vmem:[#allocation2 + $0x30] sm:$0xff]
    %v122 = vld [vmem:[#allocation2 + $0x38] sm:$0xff]
    %v123 = vld [vmem:[#allocation3] sm:$0xff]
    %v124 = vld [vmem:[#allocation6] sm:$0xff]
    %v125 = vld [vmem:[#allocation6 + $0x8] sm:$0xff]
    %v126 = vld [vmem:[#allocation6 + $0x10] sm:$0xff]
    %v127 = vld [vmem:[#allocation6 + $0x18] sm:$0xff]
    %v128 = vld [vmem:[#allocation6 + $0x20] sm:$0xff]
    %v129 = vld [vmem:[#allocation6 + $0x28] sm:$0xff]
    %v130 = vld [vmem:[#allocation6 + $0x30] sm:$0xff]
    %v131 = vld [vmem:[#allocation6 + $0x38] sm:$0xff]
    %v132 = vld [vmem:[#allocation6 + $0x40] sm:$0xff]
    %v133 = vld [vmem:[#allocation6 + $0x48] sm:$0xff]
    %v134 = vld [vmem:[#allocation6 + $0x50] sm:$0xff]
    %v135 = vld [vmem:[#allocation6 + $0x58] sm:$0xff]
    %v136 = vld [vmem:[#allocation6 + $0x60] sm:$0xff]
    %v137 = vld [vmem:[#allocation6 + $0x68] sm:$0xff]
    %v138 = vld [vmem:[#allocation6 + $0x70] sm:$0xff]
    %v139 = vld [vmem:[#allocation6 + $0x78] sm:$0xff]
    %v140 = vld [vmem:[#allocation6 + $0x80] sm:$0xff]
    %v141 = vld [vmem:[#allocation6 + $0x88] sm:$0xff]
    %v142 = vld [vmem:[#allocation6 + $0x90] sm:$0xff]
    %v143 = vld [vmem:[#allocation6 + $0x98] sm:$0xff]
    %v144 = vld [vmem:[#allocation6 + $0xa0] sm:$0xff]
    %v145 = vld [vmem:[#allocation6 + $0xa8] sm:$0xff]
    %v146 = vld [vmem:[#allocation6 + $0xb0] sm:$0xff]
    %v147 = vld [vmem:[#allocation6 + $0xb8] sm:$0xff]
    %v148 = vld [vmem:[#allocation6 + $0xc0] sm:$0xff]
    %v149 = vld [vmem:[#allocation6 + $0xc8] sm:$0xff]
    %v150 = vld [vmem:[#allocation6 + $0xd0] sm:$0xff]
    %v151 = vld [vmem:[#allocation6 + $0xd8] sm:$0xff]
    %v152 = vld [vmem:[#allocation6 + $0xe0] sm:$0xff]
    %v153 = vld [vmem:[#allocation6 + $0xe8] sm:$0xff]
    %v154 = vld [vmem:[#allocation6 + $0xf0] sm:$0xff]
    %v155 = vld [vmem:[#allocation6 + $0xf8] sm:$0xff]
    %v156 = vld [vmem:[#allocation6 + $0x100] sm:$0xff]
    %v157 = vld [vmem:[#allocation6 + $0x108] sm:$0xff]
    %v158 = vld [vmem:[#allocation6 + $0x110] sm:$0xff]
    %v159 = vld [vmem:[#allocation6 + $0x118] sm:$0xff]
    %v160 = vld [vmem:[#allocation6 + $0x120] sm:$0xff]
    %v161 = vld [vmem:[#allocation6 + $0x128] sm:$0xff]
    %v162 = vld [vmem:[#allocation6 + $0x130] sm:$0xff]
    %v163 = vld [vmem:[#allocation6 + $0x138] sm:$0xff]
    %v164 = vld [vmem:[#allocation6 + $0x140] sm:$0xff]
    %v165 = vld [vmem:[#allocation6 + $0x148] sm:$0xff]
    %v166 = vld [vmem:[#allocation6 + $0x150] sm:$0xff]
    %v167 = vld [vmem:[#allocation6 + $0x158] sm:$0xff]
    %v168 = vld [vmem:[#allocation6 + $0x160] sm:$0xff]
    %v169 = vld [vmem:[#allocation6 + $0x168] sm:$0xff]
    %v170 = vld [vmem:[#allocation6 + $0x170] sm:$0xff]
    %v171 = vld [vmem:[#allocation6 + $0x178] sm:$0xff]
    %v172 = vld [vmem:[#allocation6 + $0x180] sm:$0xff]
    %v173 = vld [vmem:[#allocation6 + $0x188] sm:$0xff]
    %v174 = vld [vmem:[#allocation6 + $0x190] sm:$0xff]
    %v175 = vld [vmem:[#allocation6 + $0x198] sm:$0xff]
    %v176 = vld [vmem:[#allocation6 + $0x1a0] sm:$0xff]
    %v177 = vld [vmem:[#allocation6 + $0x1a8] sm:$0xff]
    %v178 = vld [vmem:[#allocation6 + $0x1b0] sm:$0xff]
    %v179 = vld [vmem:[#allocation6 + $0x1b8] sm:$0xff]
    %v180 = vld [vmem:[#allocation6 + $0x1c0] sm:$0xff]
    %v181 = vld [vmem:[#allocation6 + $0x1c8] sm:$0xff]
    %v182 = vld [vmem:[#allocation6 + $0x1d0] sm:$0xff]
    %v183 = vld [vmem:[#allocation6 + $0x1d8] sm:$0xff]
    %v184 = vld [vmem:[#allocation6 + $0x1e0] sm:$0xff]
    %v185 = vld [vmem:[#allocation6 + $0x1e8] sm:$0xff]
    %v186 = vld [vmem:[#allocation6 + $0x1f0] sm:$0xff]
    %v187 = vld [vmem:[#allocation6 + $0x1f8] sm:$0xff]
    %v188 = vld [vmem:[#allocation6 + $0x200] sm:$0xff]
    %v189 = vld [vmem:[#allocation6 + $0x208] sm:$0xff]
    %v190 = vld [vmem:[#allocation6 + $0x210] sm:$0xff]
    %v191 = vld [vmem:[#allocation6 + $0x218] sm:$0xff]
    %v192 = vld [vmem:[#allocation6 + $0x220] sm:$0xff]
    %v193 = vld [vmem:[#allocation6 + $0x228] sm:$0xff]
    %v194 = vld [vmem:[#allocation6 + $0x230] sm:$0xff]
    %v195 = vld [vmem:[#allocation6 + $0x238] sm:$0xff]
    %v196 = vld [vmem:[#allocation6 + $0x240] sm:$0xff]
    %v197 = vld [vmem:[#allocation6 + $0x248] sm:$0xff]
    %v198 = vld [vmem:[#allocation6 + $0x250] sm:$0xff]
    %v199 = vld [vmem:[#allocation6 + $0x258] sm:$0xff]
    %v200 = vld [vmem:[#allocation6 + $0x260] sm:$0xff]
    %v201 = vld [vmem:[#allocation6 + $0x268] sm:$0xff]
    %v202 = vld [vmem:[#allocation6 + $0x270] sm:$0xff]
    %v203 = vld [vmem:[#allocation6 + $0x278] sm:$0xff]
    %v204 = vld [vmem:[#allocation6 + $0x280] sm:$0xff]
    %v205 = vld [vmem:[#allocation6 + $0x288] sm:$0xff]
    %v206 = vld [vmem:[#allocation6 + $0x290] sm:$0xff]
    %v207 = vld [vmem:[#allocation6 + $0x298] sm:$0xff]
    %v208 = vld [vmem:[#allocation6 + $0x2a0] sm:$0xff]
    %v209 = vld [vmem:[#allocation6 + $0x2a8] sm:$0xff]
    %v210 = vld [vmem:[#allocation6 + $0x2b0] sm:$0xff]
    %v211 = vld [vmem:[#allocation6 + $0x2b8] sm:$0xff]
    %v212 = vld [vmem:[#allocation6 + $0x2c0] sm:$0xff]
    %v213 = vld [vmem:[#allocation6 + $0x2c8] sm:$0xff]
    %v214 = vld [vmem:[#allocation6 + $0x2d0] sm:$0xff]
    %v215 = vld [vmem:[#allocation6 + $0x2d8] sm:$0xff]
    %v216 = vld [vmem:[#allocation6 + $0x2e0] sm:$0xff]
    %v217 = vld [vmem:[#allocation6 + $0x2e8] sm:$0xff]
    %v218 = vld [vmem:[#allocation6 + $0x2f0] sm:$0xff]
    %v219 = vld [vmem:[#allocation6 + $0x2f8] sm:$0xff]
    %v220 = vld [vmem:[#allocation6 + $0x300] sm:$0xff]
    %v221 = vld [vmem:[#allocation6 + $0x308] sm:$0xff]
    %v222 = vld [vmem:[#allocation6 + $0x310] sm:$0xff]
    %v223 = vld [vmem:[#allocation6 + $0x318] sm:$0xff]
    %v224 = vld [vmem:[#allocation6 + $0x320] sm:$0xff]
    %v225 = vld [vmem:[#allocation6 + $0x328] sm:$0xff]
    %v226 = vld [vmem:[#allocation6 + $0x330] sm:$0xff]
    %v227 = vld [vmem:[#allocation6 + $0x338] sm:$0xff]
    %v228 = vld [vmem:[#allocation6 + $0x340] sm:$0xff]
    %v229 = vld [vmem:[#allocation6 + $0x348] sm:$0xff]
    %v230 = vld [vmem:[#allocation6 + $0x350] sm:$0xff]
    %v231 = vld [vmem:[#allocation6 + $0x358] sm:$0xff]
    %v232 = vld [vmem:[#allocation6 + $0x360] sm:$0xff]
    %v233 = vld [vmem:[#allocation6 + $0x368] sm:$0xff]
    %v234 = vld [vmem:[#allocation6 + $0x370] sm:$0xff]
    %v235 = vld [vmem:[#allocation6 + $0x378] sm:$0xff]
    %v236 = vld [vmem:[#allocation6 + $0x380] sm:$0xff]
    %v237 = vld [vmem:[#allocation6 + $0x388] sm:$0xff]
    %v238 = vld [vmem:[#allocation6 + $0x390] sm:$0xff]
    %v239 = vld [vmem:[#allocation6 + $0x398] sm:$0xff]
    %v240 = vld [vmem:[#allocation6 + $0x3a0] sm:$0xff]
    %v241 = vld [vmem:[#allocation6 + $0x3a8] sm:$0xff]
    %v242 = vld [vmem:[#allocation6 + $0x3b0] sm:$0xff]
    %v243 = vld [vmem:[#allocation6 + $0x3b8] sm:$0xff]
    %v244 = vld [vmem:[#allocation6 + $0x3c0] sm:$0xff]
    %v245 = vld [vmem:[#allocation6 + $0x3c8] sm:$0xff]
    %v246 = vld [vmem:[#allocation6 + $0x3d0] sm:$0xff]
    %v247 = vld [vmem:[#allocation6 + $0x3d8] sm:$0xff]
    %v248 = vld [vmem:[#allocation6 + $0x3e0] sm:$0xff]
    %v249 = vld [vmem:[#allocation6 + $0x3e8] sm:$0xff]
    %v250 = vld [vmem:[#allocation6 + $0x3f0] sm:$0xff]
    %v251 = vld [vmem:[#allocation6 + $0x3f8] sm:$0xff]
    %v253 = vunpack.c.l.b16 %v123
    %v254 = vunpack.c.h.b16 %v123
    %v255 = vpack.c.b16 %v253, %v253
    %v256 = vpack.c.b16 %v254, %v254
    %v387 = vunpack.c.l.b16 %v124
    %v388 = vunpack.c.h.b16 %v124
    %v389 = vunpack.c.l.b16 %v125
    %v390 = vunpack.c.h.b16 %v125
    %v391 = vunpack.c.l.b16 %v126
    %v392 = vunpack.c.h.b16 %v126
    %v393 = vunpack.c.l.b16 %v127
    %v394 = vunpack.c.h.b16 %v127
    %v395 = vunpack.c.l.b16 %v128
    %v396 = vunpack.c.h.b16 %v128
    %v397 = vunpack.c.l.b16 %v129
    %v398 = vunpack.c.h.b16 %v129
    %v399 = vunpack.c.l.b16 %v130
    %v400 = vunpack.c.h.b16 %v130
    %v401 = vunpack.c.l.b16 %v131
    %v402 = vunpack.c.h.b16 %v131
    %v403 = vunpack.c.l.b16 %v132
    %v404 = vunpack.c.h.b16 %v132
    %v405 = vunpack.c.l.b16 %v133
    %v406 = vunpack.c.h.b16 %v133
    %v407 = vunpack.c.l.b16 %v134
    %v408 = vunpack.c.h.b16 %v134
    %v409 = vunpack.c.l.b16 %v135
    %v410 = vunpack.c.h.b16 %v135
    %v411 = vunpack.c.l.b16 %v136
    %v412 = vunpack.c.h.b16 %v136
    %v413 = vunpack.c.l.b16 %v137
    %v414 = vunpack.c.h.b16 %v137
    %v415 = vunpack.c.l.b16 %v138
    %v416 = vunpack.c.h.b16 %v138
    %v417 = vunpack.c.l.b16 %v139
    %v418 = vunpack.c.h.b16 %v139
    %v419 = vunpack.c.l.b16 %v140
    %v420 = vunpack.c.h.b16 %v140
    %v421 = vunpack.c.l.b16 %v141
    %v422 = vunpack.c.h.b16 %v141
    %v423 = vunpack.c.l.b16 %v142
    %v424 = vunpack.c.h.b16 %v142
    %v425 = vunpack.c.l.b16 %v143
    %v426 = vunpack.c.h.b16 %v143
    %v427 = vunpack.c.l.b16 %v144
    %v428 = vunpack.c.h.b16 %v144
    %v429 = vunpack.c.l.b16 %v145
    %v430 = vunpack.c.h.b16 %v145
    %v431 = vunpack.c.l.b16 %v146
    %v432 = vunpack.c.h.b16 %v146
    %v433 = vunpack.c.l.b16 %v147
    %v434 = vunpack.c.h.b16 %v147
    %v435 = vunpack.c.l.b16 %v148
    %v436 = vunpack.c.h.b16 %v148
    %v437 = vunpack.c.l.b16 %v149
    %v438 = vunpack.c.h.b16 %v149
    %v439 = vunpack.c.l.b16 %v150
    %v440 = vunpack.c.h.b16 %v150
    %v441 = vunpack.c.l.b16 %v151
    %v442 = vunpack.c.h.b16 %v151
    %v443 = vunpack.c.l.b16 %v152
    %v444 = vunpack.c.h.b16 %v152
    %v445 = vunpack.c.l.b16 %v153
    %v446 = vunpack.c.h.b16 %v153
    %v447 = vunpack.c.l.b16 %v154
    %v448 = vunpack.c.h.b16 %v154
    %v449 = vunpack.c.l.b16 %v155
    %v450 = vunpack.c.h.b16 %v155
    %v451 = vunpack.c.l.b16 %v156
    %v452 = vunpack.c.h.b16 %v156
    %v453 = vunpack.c.l.b16 %v157
    %v454 = vunpack.c.h.b16 %v157
    %v455 = vunpack.c.l.b16 %v158
    %v456 = vunpack.c.h.b16 %v158
    %v457 = vunpack.c.l.b16 %v159
    %v458 = vunpack.c.h.b16 %v159
    %v459 = vunpack.c.l.b16 %v160
    %v460 = vunpack.c.h.b16 %v160
    %v461 = vunpack.c.l.b16 %v161
    %v462 = vunpack.c.h.b16 %v161
    %v463 = vunpack.c.l.b16 %v162
    %v464 = vunpack.c.h.b16 %v162
    %v465 = vunpack.c.l.b16 %v163
    %v466 = vunpack.c.h.b16 %v163
    %v467 = vunpack.c.l.b16 %v164
    %v468 = vunpack.c.h.b16 %v164
    %v469 = vunpack.c.l.b16 %v165
    %v470 = vunpack.c.h.b16 %v165
    %v471 = vunpack.c.l.b16 %v166
    %v472 = vunpack.c.h.b16 %v166
    %v473 = vunpack.c.l.b16 %v167
    %v474 = vunpack.c.h.b16 %v167
    %v475 = vunpack.c.l.b16 %v168
    %v476 = vunpack.c.h.b16 %v168
    %v477 = vunpack.c.l.b16 %v169
    %v478 = vunpack.c.h.b16 %v169
    %v479 = vunpack.c.l.b16 %v170
    %v480 = vunpack.c.h.b16 %v170
    %v481 = vunpack.c.l.b16 %v171
    %v482 = vunpack.c.h.b16 %v171
    %v483 = vunpack.c.l.b16 %v172
    %v484 = vunpack.c.h.b16 %v172
    %v485 = vunpack.c.l.b16 %v173
    %v486 = vunpack.c.h.b16 %v173
    %v487 = vunpack.c.l.b16 %v174
    %v488 = vunpack.c.h.b16 %v174
    %v489 = vunpack.c.l.b16 %v175
    %v490 = vunpack.c.h.b16 %v175
    %v491 = vunpack.c.l.b16 %v176
    %v492 = vunpack.c.h.b16 %v176
    %v493 = vunpack.c.l.b16 %v177
    %v494 = vunpack.c.h.b16 %v177
    %v495 = vunpack.c.l.b16 %v178
    %v496 = vunpack.c.h.b16 %v178
    %v497 = vunpack.c.l.b16 %v179
    %v498 = vunpack.c.h.b16 %v179
    %v499 = vunpack.c.l.b16 %v180
    %v500 = vunpack.c.h.b16 %v180
    %v501 = vunpack.c.l.b16 %v181
    %v502 = vunpack.c.h.b16 %v181
    %v503 = vunpack.c.l.b16 %v182
    %v504 = vunpack.c.h.b16 %v182
    %v505 = vunpack.c.l.b16 %v183
    %v506 = vunpack.c.h.b16 %v183
    %v507 = vunpack.c.l.b16 %v184
    %v508 = vunpack.c.h.b16 %v184
    %v509 = vunpack.c.l.b16 %v185
    %v510 = vunpack.c.h.b16 %v185
    %v511 = vunpack.c.l.b16 %v186
    %v512 = vunpack.c.h.b16 %v186
    %v513 = vunpack.c.l.b16 %v187
    %v514 = vunpack.c.h.b16 %v187
    %v515 = vunpack.c.l.b16 %v188
    %v516 = vunpack.c.h.b16 %v188
    %v517 = vunpack.c.l.b16 %v189
    %v518 = vunpack.c.h.b16 %v189
    %v519 = vunpack.c.l.b16 %v190
    %v520 = vunpack.c.h.b16 %v190
    %v521 = vunpack.c.l.b16 %v191
    %v522 = vunpack.c.h.b16 %v191
    %v523 = vunpack.c.l.b16 %v192
    %v524 = vunpack.c.h.b16 %v192
    %v525 = vunpack.c.l.b16 %v193
    %v526 = vunpack.c.h.b16 %v193
    %v527 = vunpack.c.l.b16 %v194
    %v528 = vunpack.c.h.b16 %v194
    %v529 = vunpack.c.l.b16 %v195
    %v530 = vunpack.c.h.b16 %v195
    %v531 = vunpack.c.l.b16 %v196
    %v532 = vunpack.c.h.b16 %v196
    %v533 = vunpack.c.l.b16 %v197
    %v534 = vunpack.c.h.b16 %v197
    %v535 = vunpack.c.l.b16 %v198
    %v536 = vunpack.c.h.b16 %v198
    %v537 = vunpack.c.l.b16 %v199
    %v538 = vunpack.c.h.b16 %v199
    %v539 = vunpack.c.l.b16 %v200
    %v540 = vunpack.c.h.b16 %v200
    %v541 = vunpack.c.l.b16 %v201
    %v542 = vunpack.c.h.b16 %v201
    %v543 = vunpack.c.l.b16 %v202
    %v544 = vunpack.c.h.b16 %v202
    %v545 = vunpack.c.l.b16 %v203
    %v546 = vunpack.c.h.b16 %v203
    %v547 = vunpack.c.l.b16 %v204
    %v548 = vunpack.c.h.b16 %v204
    %v549 = vunpack.c.l.b16 %v205
    %v550 = vunpack.c.h.b16 %v205
    %v551 = vunpack.c.l.b16 %v206
    %v552 = vunpack.c.h.b16 %v206
    %v553 = vunpack.c.l.b16 %v207
    %v554 = vunpack.c.h.b16 %v207
    %v555 = vunpack.c.l.b16 %v208
    %v556 = vunpack.c.h.b16 %v208
    %v557 = vunpack.c.l.b16 %v209
    %v558 = vunpack.c.h.b16 %v209
    %v559 = vunpack.c.l.b16 %v210
    %v560 = vunpack.c.h.b16 %v210
    %v561 = vunpack.c.l.b16 %v211
    %v562 = vunpack.c.h.b16 %v211
    %v563 = vunpack.c.l.b16 %v212
    %v564 = vunpack.c.h.b16 %v212
    %v565 = vunpack.c.l.b16 %v213
    %v566 = vunpack.c.h.b16 %v213
    %v567 = vunpack.c.l.b16 %v214
    %v568 = vunpack.c.h.b16 %v214
    %v569 = vunpack.c.l.b16 %v215
    %v570 = vunpack.c.h.b16 %v215
    %v571 = vunpack.c.l.b16 %v216
    %v572 = vunpack.c.h.b16 %v216
    %v573 = vunpack.c.l.b16 %v217
    %v574 = vunpack.c.h.b16 %v217
    %v575 = vunpack.c.l.b16 %v218
    %v576 = vunpack.c.h.b16 %v218
    %v577 = vunpack.c.l.b16 %v219
    %v578 = vunpack.c.h.b16 %v219
    %v579 = vunpack.c.l.b16 %v220
    %v580 = vunpack.c.h.b16 %v220
    %v581 = vunpack.c.l.b16 %v221
    %v582 = vunpack.c.h.b16 %v221
    %v583 = vunpack.c.l.b16 %v222
    %v584 = vunpack.c.h.b16 %v222
    %v585 = vunpack.c.l.b16 %v223
    %v586 = vunpack.c.h.b16 %v223
    %v587 = vunpack.c.l.b16 %v224
    %v588 = vunpack.c.h.b16 %v224
    %v589 = vunpack.c.l.b16 %v225
    %v590 = vunpack.c.h.b16 %v225
    %v591 = vunpack.c.l.b16 %v226
    %v592 = vunpack.c.h.b16 %v226
    %v593 = vunpack.c.l.b16 %v227
    %v594 = vunpack.c.h.b16 %v227
    %v595 = vunpack.c.l.b16 %v228
    %v596 = vunpack.c.h.b16 %v228
    %v597 = vunpack.c.l.b16 %v229
    %v598 = vunpack.c.h.b16 %v229
    %v599 = vunpack.c.l.b16 %v230
    %v600 = vunpack.c.h.b16 %v230
    %v601 = vunpack.c.l.b16 %v231
    %v602 = vunpack.c.h.b16 %v231
    %v603 = vunpack.c.l.b16 %v232
    %v604 = vunpack.c.h.b16 %v232
    %v605 = vunpack.c.l.b16 %v233
    %v606 = vunpack.c.h.b16 %v233
    %v607 = vunpack.c.l.b16 %v234
    %v608 = vunpack.c.h.b16 %v234
    %v609 = vunpack.c.l.b16 %v235
    %v610 = vunpack.c.h.b16 %v235
    %v611 = vunpack.c.l.b16 %v236
    %v612 = vunpack.c.h.b16 %v236
    %v613 = vunpack.c.l.b16 %v237
    %v614 = vunpack.c.h.b16 %v237
    %v615 = vunpack.c.l.b16 %v238
    %v616 = vunpack.c.h.b16 %v238
    %v617 = vunpack.c.l.b16 %v239
    %v618 = vunpack.c.h.b16 %v239
    %v619 = vunpack.c.l.b16 %v240
    %v620 = vunpack.c.h.b16 %v240
    %v621 = vunpack.c.l.b16 %v241
    %v622 = vunpack.c.h.b16 %v241
    %v623 = vunpack.c.l.b16 %v242
    %v624 = vunpack.c.h.b16 %v242
    %v625 = vunpack.c.l.b16 %v243
    %v626 = vunpack.c.h.b16 %v243
    %v627 = vunpack.c.l.b16 %v244
    %v628 = vunpack.c.h.b16 %v244
    %v629 = vunpack.c.l.b16 %v245
    %v630 = vunpack.c.h.b16 %v245
    %v631 = vunpack.c.l.b16 %v246
    %v632 = vunpack.c.h.b16 %v246
    %v633 = vunpack.c.l.b16 %v247
    %v634 = vunpack.c.h.b16 %v247
    %v635 = vunpack.c.l.b16 %v248
    %v636 = vunpack.c.h.b16 %v248
    %v637 = vunpack.c.l.b16 %v249
    %v638 = vunpack.c.h.b16 %v249
    %v639 = vunpack.c.l.b16 %v250
    %v640 = vunpack.c.h.b16 %v250
    %v641 = vunpack.c.l.b16 %v251
    %v642 = vunpack.c.h.b16 %v251
    %v643 = vpack.c.b16 %v395, %v387
    %v644 = vpack.c.b16 %v396, %v388
    %v645 = vpack.c.b16 %v397, %v389
    %v646 = vpack.c.b16 %v398, %v390
    %v647 = vpack.c.b16 %v399, %v391
    %v648 = vpack.c.b16 %v400, %v392
    %v649 = vpack.c.b16 %v401, %v393
    %v650 = vpack.c.b16 %v402, %v394
    %v651 = vpack.c.b16 %v411, %v403
    %v652 = vpack.c.b16 %v412, %v404
    %v653 = vpack.c.b16 %v413, %v405
    %v654 = vpack.c.b16 %v414, %v406
    %v655 = vpack.c.b16 %v415, %v407
    %v656 = vpack.c.b16 %v416, %v408
    %v657 = vpack.c.b16 %v417, %v409
    %v658 = vpack.c.b16 %v418, %v410
    %v659 = vpack.c.b16 %v427, %v419
    %v660 = vpack.c.b16 %v428, %v420
    %v661 = vpack.c.b16 %v429, %v421
    %v662 = vpack.c.b16 %v430, %v422
    %v663 = vpack.c.b16 %v431, %v423
    %v664 = vpack.c.b16 %v432, %v424
    %v665 = vpack.c.b16 %v433, %v425
    %v666 = vpack.c.b16 %v434, %v426
    %v667 = vpack.c.b16 %v443, %v435
    %v668 = vpack.c.b16 %v444, %v436
    %v669 = vpack.c.b16 %v445, %v437
    %v670 = vpack.c.b16 %v446, %v438
    %v671 = vpack.c.b16 %v447, %v439
    %v672 = vpack.c.b16 %v448, %v440
    %v673 = vpack.c.b16 %v449, %v441
    %v674 = vpack.c.b16 %v450, %v442
    %v675 = vpack.c.b16 %v459, %v451
    %v676 = vpack.c.b16 %v460, %v452
    %v677 = vpack.c.b16 %v461, %v453
    %v678 = vpack.c.b16 %v462, %v454
    %v679 = vpack.c.b16 %v463, %v455
    %v680 = vpack.c.b16 %v464, %v456
    %v681 = vpack.c.b16 %v465, %v457
    %v682 = vpack.c.b16 %v466, %v458
    %v683 = vpack.c.b16 %v475, %v467
    %v684 = vpack.c.b16 %v476, %v468
    %v685 = vpack.c.b16 %v477, %v469
    %v686 = vpack.c.b16 %v478, %v470
    %v687 = vpack.c.b16 %v479, %v471
    %v688 = vpack.c.b16 %v480, %v472
    %v689 = vpack.c.b16 %v481, %v473
    %v690 = vpack.c.b16 %v482, %v474
    %v691 = vpack.c.b16 %v491, %v483
    %v692 = vpack.c.b16 %v492, %v484
    %v693 = vpack.c.b16 %v493, %v485
    %v694 = vpack.c.b16 %v494, %v486
    %v695 = vpack.c.b16 %v495, %v487
    %v696 = vpack.c.b16 %v496, %v488
    %v697 = vpack.c.b16 %v497, %v489
    %v698 = vpack.c.b16 %v498, %v490
    %v699 = vpack.c.b16 %v507, %v499
    %v700 = vpack.c.b16 %v508, %v500
    %v701 = vpack.c.b16 %v509, %v501
    %v702 = vpack.c.b16 %v510, %v502
    %v703 = vpack.c.b16 %v511, %v503
    %v704 = vpack.c.b16 %v512, %v504
    %v705 = vpack.c.b16 %v513, %v505
    %v706 = vpack.c.b16 %v514, %v506
    %v707 = vpack.c.b16 %v523, %v515
    %v708 = vpack.c.b16 %v524, %v516
    %v709 = vpack.c.b16 %v525, %v517
    %v710 = vpack.c.b16 %v526, %v518
    %v711 = vpack.c.b16 %v527, %v519
    %v712 = vpack.c.b16 %v528, %v520
    %v713 = vpack.c.b16 %v529, %v521
    %v714 = vpack.c.b16 %v530, %v522
    %v715 = vpack.c.b16 %v539, %v531
    %v716 = vpack.c.b16 %v540, %v532
    %v717 = vpack.c.b16 %v541, %v533
    %v718 = vpack.c.b16 %v542, %v534
    %v719 = vpack.c.b16 %v543, %v535
    %v720 = vpack.c.b16 %v544, %v536
    %v721 = vpack.c.b16 %v545, %v537
    %v722 = vpack.c.b16 %v546, %v538
    %v723 = vpack.c.b16 %v555, %v547
    %v724 = vpack.c.b16 %v556, %v548
    %v725 = vpack.c.b16 %v557, %v549
    %v726 = vpack.c.b16 %v558, %v550
    %v727 = vpack.c.b16 %v559, %v551
    %v728 = vpack.c.b16 %v560, %v552
    %v729 = vpack.c.b16 %v561, %v553
    %v730 = vpack.c.b16 %v562, %v554
    %v731 = vpack.c.b16 %v571, %v563
    %v732 = vpack.c.b16 %v572, %v564
    %v733 = vpack.c.b16 %v573, %v565
    %v734 = vpack.c.b16 %v574, %v566
    %v735 = vpack.c.b16 %v575, %v567
    %v736 = vpack.c.b16 %v576, %v568
    %v737 = vpack.c.b16 %v577, %v569
    %v738 = vpack.c.b16 %v578, %v570
    %v739 = vpack.c.b16 %v587, %v579
    %v740 = vpack.c.b16 %v588, %v580
    %v741 = vpack.c.b16 %v589, %v581
    %v742 = vpack.c.b16 %v590, %v582
    %v743 = vpack.c.b16 %v591, %v583
    %v744 = vpack.c.b16 %v592, %v584
    %v745 = vpack.c.b16 %v593, %v585
    %v746 = vpack.c.b16 %v594, %v586
    %v747 = vpack.c.b16 %v603, %v595
    %v748 = vpack.c.b16 %v604, %v596
    %v749 = vpack.c.b16 %v605, %v597
    %v750 = vpack.c.b16 %v606, %v598
    %v751 = vpack.c.b16 %v607, %v599
    %v752 = vpack.c.b16 %v608, %v600
    %v753 = vpack.c.b16 %v609, %v601
    %v754 = vpack.c.b16 %v610, %v602
    %v755 = vpack.c.b16 %v619, %v611
    %v756 = vpack.c.b16 %v620, %v612
    %v757 = vpack.c.b16 %v621, %v613
    %v758 = vpack.c.b16 %v622, %v614
    %v759 = vpack.c.b16 %v623, %v615
    %v760 = vpack.c.b16 %v624, %v616
    %v761 = vpack.c.b16 %v625, %v617
    %v762 = vpack.c.b16 %v626, %v618
    %v763 = vpack.c.b16 %v635, %v627
    %v764 = vpack.c.b16 %v636, %v628
    %v765 = vpack.c.b16 %v637, %v629
    %v766 = vpack.c.b16 %v638, %v630
    %v767 = vpack.c.b16 %v639, %v631
    %v768 = vpack.c.b16 %v640, %v632
    %v769 = vpack.c.b16 %v641, %v633
    %v770 = vpack.c.b16 %v642, %v634
    %899 = vmatprep.subr.bf16.mxu0 %v644
    %900 = vmatpush1.bf16.msra.mxu0 %v643
    %901 = vmatprep.subr.bf16.mxu0 %v652
    %902 = vmatpush1.bf16.msra.mxu0 %v651
    %903 = vmatprep.subr.bf16.mxu0 %v660
    %904 = vmatpush1.bf16.msra.mxu0 %v659
    %905 = vmatprep.subr.bf16.mxu0 %v668
    %906 = vmatpush1.bf16.msra.mxu0 %v667
    %907 = vmatprep.subr.bf16.mxu0 %v676
    %908 = vmatpush1.bf16.msra.mxu0 %v675
    %909 = vmatprep.subr.bf16.mxu0 %v684
    %910 = vmatpush1.bf16.msra.mxu0 %v683
    %911 = vmatprep.subr.bf16.mxu0 %v692
    %912 = vmatpush1.bf16.msra.mxu0 %v691
    %913 = vmatprep.subr.bf16.mxu0 %v700
    %914 = vmatpush1.bf16.msra.mxu0 %v699
    %915 = vmatprep.subr.bf16.mxu0 %v708
    %916 = vmatpush1.bf16.msra.mxu0 %v707
    %917 = vmatprep.subr.bf16.mxu0 %v716
    %918 = vmatpush1.bf16.msra.mxu0 %v715
    %919 = vmatprep.subr.bf16.mxu0 %v724
    %920 = vmatpush1.bf16.msra.mxu0 %v723
    %921 = vmatprep.subr.bf16.mxu0 %v732
    %922 = vmatpush1.bf16.msra.mxu0 %v731
    %923 = vmatprep.subr.bf16.mxu0 %v740
    %924 = vmatpush1.bf16.msra.mxu0 %v739
    %925 = vmatprep.subr.bf16.mxu0 %v748
    %926 = vmatpush1.bf16.msra.mxu0 %v747
    %927 = vmatprep.subr.bf16.mxu0 %v756
    %928 = vmatpush1.bf16.msra.mxu0 %v755
    %929 = vmatprep.subr.bf16.mxu0 %v764
    %930 = vmatpush1.bf16.msra.mxu0 %v763
    %931 = vmatprep.mubr.bf16.mxu0 %v256
    %932 = vmatmul.mubr.bf16.gmra.mrb[0].mxu0 %v255
    %v933 = vpop.f32.mrb[0].mxu0
    %v934 = vadd.f32 0.0, %v933
    %v935 = vpop.f32.mrb[0].mxu0
    %v936 = vadd.f32 0.0, %v935
    %v937 = vpop.f32.mrb[0].mxu0
    %v938 = vpop.f32.mrb[0].mxu0
    %939 = vdwg.mxu0
    %940 = vmatprep.subr.bf16.mxu0 %v646
    %941 = vmatpush1.bf16.msra.mxu0 %v645
    %942 = vmatprep.subr.bf16.mxu0 %v654
    %943 = vmatpush1.bf16.msra.mxu0 %v653
    %944 = vmatprep.subr.bf16.mxu0 %v662
    %945 = vmatpush1.bf16.msra.mxu0 %v661
    %946 = vmatprep.subr.bf16.mxu0 %v670
    %947 = vmatpush1.bf16.msra.mxu0 %v669
    %948 = vmatprep.subr.bf16.mxu0 %v678
    %949 = vmatpush1.bf16.msra.mxu0 %v677
    %950 = vmatprep.subr.bf16.mxu0 %v686
    %951 = vmatpush1.bf16.msra.mxu0 %v685
    %952 = vmatprep.subr.bf16.mxu0 %v694
    %953 = vmatpush1.bf16.msra.mxu0 %v693
    %954 = vmatprep.subr.bf16.mxu0 %v702
    %955 = vmatpush1.bf16.msra.mxu0 %v701
    %956 = vmatprep.subr.bf16.mxu0 %v710
    %957 = vmatpush1.bf16.msra.mxu0 %v709
    %958 = vmatprep.subr.bf16.mxu0 %v718
    %959 = vmatpush1.bf16.msra.mxu0 %v717
    %960 = vmatprep.subr.bf16.mxu0 %v726
    %961 = vmatpush1.bf16.msra.mxu0 %v725
    %962 = vmatprep.subr.bf16.mxu0 %v734
    %963 = vmatpush1.bf16.msra.mxu0 %v733
    %964 = vmatprep.subr.bf16.mxu0 %v742
    %965 = vmatpush1.bf16.msra.mxu0 %v741
    %966 = vmatprep.subr.bf16.mxu0 %v750
    %967 = vmatpush1.bf16.msra.mxu0 %v749
    %968 = vmatprep.subr.bf16.mxu0 %v758
    %969 = vmatpush1.bf16.msra.mxu0 %v757
    %970 = vmatprep.subr.bf16.mxu0 %v766
    %971 = vmatpush1.bf16.msra.mxu0 %v765
    %972 = vmatprep.mubr.bf16.mxu0 %v256
    %973 = vmatmul.mubr.bf16.gmra.mrb[0].mxu0 %v255
    %v974 = vpop.f32.mrb[0].mxu0
    %v975 = vadd.f32 0.0, %v974
    %v976 = vpop.f32.mrb[0].mxu0
    %v977 = vadd.f32 0.0, %v976
    %v978 = vpop.f32.mrb[0].mxu0
    %v979 = vpop.f32.mrb[0].mxu0
    %980 = vdwg.mxu0
    %981 = vmatprep.subr.bf16.mxu0 %v648
    %982 = vmatpush1.bf16.msra.mxu0 %v647
    %983 = vmatprep.subr.bf16.mxu0 %v656
    %984 = vmatpush1.bf16.msra.mxu0 %v655
    %985 = vmatprep.subr.bf16.mxu0 %v664
    %986 = vmatpush1.bf16.msra.mxu0 %v663
    %987 = vmatprep.subr.bf16.mxu0 %v672
    %988 = vmatpush1.bf16.msra.mxu0 %v671
    %989 = vmatprep.subr.bf16.mxu0 %v680
    %990 = vmatpush1.bf16.msra.mxu0 %v679
    %991 = vmatprep.subr.bf16.mxu0 %v688
    %992 = vmatpush1.bf16.msra.mxu0 %v687
    %993 = vmatprep.subr.bf16.mxu0 %v696
    %994 = vmatpush1.bf16.msra.mxu0 %v695
    %995 = vmatprep.subr.bf16.mxu0 %v704
    %996 = vmatpush1.bf16.msra.mxu0 %v703
    %997 = vmatprep.subr.bf16.mxu0 %v712
    %998 = vmatpush1.bf16.msra.mxu0 %v711
    %999 = vmatprep.subr.bf16.mxu0 %v720
    %1000 = vmatpush1.bf16.msra.mxu0 %v719
    %1001 = vmatprep.subr.bf16.mxu0 %v728
    %1002 = vmatpush1.bf16.msra.mxu0 %v727
    %1003 = vmatprep.subr.bf16.mxu0 %v736
    %1004 = vmatpush1.bf16.msra.mxu0 %v735
    %1005 = vmatprep.subr.bf16.mxu0 %v744
    %1006 = vmatpush1.bf16.msra.mxu0 %v743
    %1007 = vmatprep.subr.bf16.mxu0 %v752
    %1008 = vmatpush1.bf16.msra.mxu0 %v751
    %1009 = vmatprep.subr.bf16.mxu0 %v760
    %1010 = vmatpush1.bf16.msra.mxu0 %v759
    %1011 = vmatprep.subr.bf16.mxu0 %v768
    %1012 = vmatpush1.bf16.msra.mxu0 %v767
    %1013 = vmatprep.mubr.bf16.mxu0 %v256
    %1014 = vmatmul.mubr.bf16.gmra.mrb[0].mxu0 %v255
    %v1015 = vpop.f32.mrb[0].mxu0
    %v1016 = vadd.f32 0.0, %v1015
    %v1017 = vpop.f32.mrb[0].mxu0
    %v1018 = vadd.f32 0.0, %v1017
    %v1019 = vpop.f32.mrb[0].mxu0
    %v1020 = vpop.f32.mrb[0].mxu0
    %1021 = vdwg.mxu0
    %1022 = vmatprep.subr.bf16.mxu0 %v650
    %1023 = vmatpush1.bf16.msra.mxu0 %v649
    %1024 = vmatprep.subr.bf16.mxu0 %v658
    %1025 = vmatpush1.bf16.msra.mxu0 %v657
    %1026 = vmatprep.subr.bf16.mxu0 %v666
    %1027 = vmatpush1.bf16.msra.mxu0 %v665
    %1028 = vmatprep.subr.bf16.mxu0 %v674
    %1029 = vmatpush1.bf16.msra.mxu0 %v673
    %1030 = vmatprep.subr.bf16.mxu0 %v682
    %1031 = vmatpush1.bf16.msra.mxu0 %v681
    %1032 = vmatprep.subr.bf16.mxu0 %v690
    %1033 = vmatpush1.bf16.msra.mxu0 %v689
    %1034 = vmatprep.subr.bf16.mxu0 %v698
    %1035 = vmatpush1.bf16.msra.mxu0 %v697
    %1036 = vmatprep.subr.bf16.mxu0 %v706
    %1037 = vmatpush1.bf16.msra.mxu0 %v705
    %1038 = vmatprep.subr.bf16.mxu0 %v714
    %1039 = vmatpush1.bf16.msra.mxu0 %v713
    %1040 = vmatprep.subr.bf16.mxu0 %v722
    %1041 = vmatpush1.bf16.msra.mxu0 %v721
    %1042 = vmatprep.subr.bf16.mxu0 %v730
    %1043 = vmatpush1.bf16.msra.mxu0 %v729
    %1044 = vmatprep.subr.bf16.mxu0 %v738
    %1045 = vmatpush1.bf16.msra.mxu0 %v737
    %1046 = vmatprep.subr.bf16.mxu0 %v746
    %1047 = vmatpush1.bf16.msra.mxu0 %v745
    %1048 = vmatprep.subr.bf16.mxu0 %v754
    %1049 = vmatpush1.bf16.msra.mxu0 %v753
    %1050 = vmatprep.subr.bf16.mxu0 %v762
    %1051 = vmatpush1.bf16.msra.mxu0 %v761
    %1052 = vmatprep.subr.bf16.mxu0 %v770
    %1053 = vmatpush1.bf16.msra.mxu0 %v769
    %1054 = vmatprep.mubr.bf16.mxu0 %v256
    %1055 = vmatmul.mubr.bf16.gmra.mrb[0].mxu0 %v255
    %v1056 = vpop.f32.mrb[0].mxu0
    %v1057 = vadd.f32 0.0, %v1056
    %v1058 = vpop.f32.mrb[0].mxu0
    %v1059 = vadd.f32 0.0, %v1058
    %v1060 = vpop.f32.mrb[0].mxu0
    %v1061 = vpop.f32.mrb[0].mxu0
    %1062 = vdwg.mxu0
    %v1063 = vadd.f32 %v115, %v934
    %v1064 = vadd.f32 %v116, %v936
    %v1065 = vadd.f32 %v117, %v975
    %v1066 = vadd.f32 %v118, %v977
    %v1067 = vadd.f32 %v119, %v1016
    %v1068 = vadd.f32 %v120, %v1018
    %v1069 = vadd.f32 %v121, %v1057
    %v1070 = vadd.f32 %v122, %v1059
    %1071 = vst [vmem:[#allocation2] sm:$0xff] %v1063
    %1072 = vst [vmem:[#allocation2 + $0x8] sm:$0xff] %v1064
    %1073 = vst [vmem:[#allocation2 + $0x10] sm:$0xff] %v1065
    %1074 = vst [vmem:[#allocation2 + $0x18] sm:$0xff] %v1066
    %1075 = vst [vmem:[#allocation2 + $0x20] sm:$0xff] %v1067
    %1076 = vst [vmem:[#allocation2 + $0x28] sm:$0xff] %v1068
    %1077 = vst [vmem:[#allocation2 + $0x30] sm:$0xff] %v1069
    %1078 = vst [vmem:[#allocation2 + $0x38] sm:$0xff] %v1070
    // Predicated region
    $region54: #{tpu_custom_call.1} parent=1 // pred_check
      %p1079 = pneg %p103
    $region55: #{tpu_custom_call.1} parent=1 // pred_check_branch
      %1081 = sbr.rel (%p1079) target = $region57
    $region56: #{tpu_custom_call.1} parent=1 // pred_region
      %v1082 = vld [vmem:[#allocation2] sm:$0xff]
      %v1083 = vld [vmem:[#allocation2 + $0x8] sm:$0xff]
      %v1084 = vld [vmem:[#allocation2 + $0x10] sm:$0xff]
      %v1085 = vld [vmem:[#allocation2 + $0x18] sm:$0xff]
      %v1086 = vld [vmem:[#allocation2 + $0x20] sm:$0xff]
      %v1087 = vld [vmem:[#allocation2 + $0x28] sm:$0xff]
      %v1088 = vld [vmem:[#allocation2 + $0x30] sm:$0xff]
      %v1089 = vld [vmem:[#allocation2 + $0x38] sm:$0xff]
      %v1090 = vld [vmem:[#allocation12] ss:$8 sm:$0xf]
      %v1091 = vld [vmem:[#allocation12] ss:$8 sm:$0xf0]
      %v1092 = vor.u32 %v1090, %v1091
      %s1093 = scalar_lea.vmem [#allocation12], 1
      %v1094 = vld [vmem:[%s1093] ss:$8 sm:$0xf]
      %v1095 = vld [vmem:[%s1093] ss:$8 sm:$0xf0]
      %v1096 = vor.u32 %v1094, %v1095
      %v1097 = vrot.slane %v1082, 4
      %v1098 = vadd.f32 %v1082, %v1097
      %v1099 = vrot.slane %v1098, 2
      %v1100 = vadd.f32 %v1098, %v1099
      %v1101 = vrot.slane %v1100, 1
      %v1102 = vadd.f32 %v1100, %v1101
      %v1103 = vrot.slane %v1083, 4
      %v1104 = vadd.f32 %v1083, %v1103
      %v1105 = vrot.slane %v1104, 2
      %v1106 = vadd.f32 %v1104, %v1105
      %v1107 = vrot.slane %v1106, 1
      %v1108 = vadd.f32 %v1106, %v1107
      %v1109 = vrot.slane %v1084, 4
      %v1110 = vadd.f32 %v1084, %v1109
      %v1111 = vrot.slane %v1110, 2
      %v1112 = vadd.f32 %v1110, %v1111
      %v1113 = vrot.slane %v1112, 1
      %v1114 = vadd.f32 %v1112, %v1113
      %v1115 = vrot.slane %v1085, 4
      %v1116 = vadd.f32 %v1085, %v1115
      %v1117 = vrot.slane %v1116, 2
      %v1118 = vadd.f32 %v1116, %v1117
      %v1119 = vrot.slane %v1118, 1
      %v1120 = vadd.f32 %v1118, %v1119
      %v1121 = vrot.slane %v1086, 4
      %v1122 = vadd.f32 %v1086, %v1121
      %v1123 = vrot.slane %v1122, 2
      %v1124 = vadd.f32 %v1122, %v1123
      %v1125 = vrot.slane %v1124, 1
      %v1126 = vadd.f32 %v1124, %v1125
      %v1127 = vrot.slane %v1087, 4
      %v1128 = vadd.f32 %v1087, %v1127
      %v1129 = vrot.slane %v1128, 2
      %v1130 = vadd.f32 %v1128, %v1129
      %v1131 = vrot.slane %v1130, 1
      %v1132 = vadd.f32 %v1130, %v1131
      %v1133 = vrot.slane %v1088, 4
      %v1134 = vadd.f32 %v1088, %v1133
      %v1135 = vrot.slane %v1134, 2
      %v1136 = vadd.f32 %v1134, %v1135
      %v1137 = vrot.slane %v1136, 1
      %v1138 = vadd.f32 %v1136, %v1137
      %v1139 = vrot.slane %v1089, 4
      %v1140 = vadd.f32 %v1089, %v1139
      %v1141 = vrot.slane %v1140, 2
      %v1142 = vadd.f32 %v1140, %v1141
      %v1143 = vrot.slane %v1142, 1
      %v1144 = vadd.f32 %v1142, %v1143
      %v1145 = vrcp.pop 8.0
      %v1146 = vmul.f32 %v1102, %v1145
      %v1147 = vmul.f32 %v1108, %v1145
      %v1148 = vmul.f32 %v1114, %v1145
      %v1149 = vmul.f32 %v1120, %v1145
      %v1150 = vmul.f32 %v1126, %v1145
      %v1151 = vmul.f32 %v1132, %v1145
      %v1152 = vmul.f32 %v1138, %v1145
      %v1153 = vmul.f32 %v1144, %v1145
      %v1154 = vsub.f32 %v1082, %v1146
      %v1155 = vsub.f32 %v1083, %v1147
      %v1156 = vsub.f32 %v1084, %v1148
      %v1157 = vsub.f32 %v1085, %v1149
      %v1158 = vsub.f32 %v1086, %v1150
      %v1159 = vsub.f32 %v1087, %v1151
      %v1160 = vsub.f32 %v1088, %v1152
      %v1161 = vsub.f32 %v1089, %v1153
      %v1162 = vmul.f32 %v1154, %v1154
      %v1163 = vmul.f32 %v1155, %v1155
      %v1164 = vmul.f32 %v1156, %v1156
      %v1165 = vmul.f32 %v1157, %v1157
      %v1166 = vmul.f32 %v1158, %v1158
      %v1167 = vmul.f32 %v1159, %v1159
      %v1168 = vmul.f32 %v1160, %v1160
      %v1169 = vmul.f32 %v1161, %v1161
      %v1170 = vrot.slane %v1162, 4
      %v1171 = vadd.f32 %v1162, %v1170
      %v1172 = vrot.slane %v1171, 2
      %v1173 = vadd.f32 %v1171, %v1172
      %v1174 = vrot.slane %v1173, 1
      %v1175 = vadd.f32 %v1173, %v1174
      %v1176 = vrot.slane %v1163, 4
      %v1177 = vadd.f32 %v1163, %v1176
      %v1178 = vrot.slane %v1177, 2
      %v1179 = vadd.f32 %v1177, %v1178
      %v1180 = vrot.slane %v1179, 1
      %v1181 = vadd.f32 %v1179, %v1180
      %v1182 = vrot.slane %v1164, 4
      %v1183 = vadd.f32 %v1164, %v1182
      %v1184 = vrot.slane %v1183, 2
      %v1185 = vadd.f32 %v1183, %v1184
      %v1186 = vrot.slane %v1185, 1
      %v1187 = vadd.f32 %v1185, %v1186
      %v1188 = vrot.slane %v1165, 4
      %v1189 = vadd.f32 %v1165, %v1188
      %v1190 = vrot.slane %v1189, 2
      %v1191 = vadd.f32 %v1189, %v1190
      %v1192 = vrot.slane %v1191, 1
      %v1193 = vadd.f32 %v1191, %v1192
      %v1194 = vrot.slane %v1166, 4
      %v1195 = vadd.f32 %v1166, %v1194
      %v1196 = vrot.slane %v1195, 2
      %v1197 = vadd.f32 %v1195, %v1196
      %v1198 = vrot.slane %v1197, 1
      %v1199 = vadd.f32 %v1197, %v1198
      %v1200 = vrot.slane %v1167, 4
      %v1201 = vadd.f32 %v1167, %v1200
      %v1202 = vrot.slane %v1201, 2
      %v1203 = vadd.f32 %v1201, %v1202
      %v1204 = vrot.slane %v1203, 1
      %v1205 = vadd.f32 %v1203, %v1204
      %v1206 = vrot.slane %v1168, 4
      %v1207 = vadd.f32 %v1168, %v1206
      %v1208 = vrot.slane %v1207, 2
      %v1209 = vadd.f32 %v1207, %v1208
      %v1210 = vrot.slane %v1209, 1
      %v1211 = vadd.f32 %v1209, %v1210
      %v1212 = vrot.slane %v1169, 4
      %v1213 = vadd.f32 %v1169, %v1212
      %v1214 = vrot.slane %v1213, 2
      %v1215 = vadd.f32 %v1213, %v1214
      %v1216 = vrot.slane %v1215, 1
      %v1217 = vadd.f32 %v1215, %v1216
      %v1218 = vmul.f32 %v1175, %v1145
      %v1219 = vmul.f32 %v1181, %v1145
      %v1220 = vmul.f32 %v1187, %v1145
      %v1221 = vmul.f32 %v1193, %v1145
      %v1222 = vmul.f32 %v1199, %v1145
      %v1223 = vmul.f32 %v1205, %v1145
      %v1224 = vmul.f32 %v1211, %v1145
      %v1225 = vmul.f32 %v1217, %v1145
      %v1226 = vadd.f32 %v1218, 1e-05
      %v1227 = vadd.f32 %v1219, 1e-05
      %v1228 = vadd.f32 %v1220, 1e-05
      %v1229 = vadd.f32 %v1221, 1e-05
      %v1230 = vadd.f32 %v1222, 1e-05
      %v1231 = vadd.f32 %v1223, 1e-05
      %v1232 = vadd.f32 %v1224, 1e-05
      %v1233 = vadd.f32 %v1225, 1e-05
      %v1234 = vrsqrt.pop %v1226
      %v1235 = vrsqrt.pop %v1227
      %v1236 = vrsqrt.pop %v1228
      %v1237 = vrsqrt.pop %v1229
      %v1238 = vrsqrt.pop %v1230
      %v1239 = vrsqrt.pop %v1231
      %v1240 = vrsqrt.pop %v1232
      %v1241 = vrsqrt.pop %v1233
      %v1242 = vmul.f32 %v1154, %v1234
      %v1243 = vmul.f32 %v1155, %v1235
      %v1244 = vmul.f32 %v1156, %v1236
      %v1245 = vmul.f32 %v1157, %v1237
      %v1246 = vmul.f32 %v1158, %v1238
      %v1247 = vmul.f32 %v1159, %v1239
      %v1248 = vmul.f32 %v1160, %v1240
      %v1249 = vmul.f32 %v1161, %v1241
      %v1251 = vlaneseq
      %v1252 = vshrl.u32 %v1251, 7
      %v1253 = vsub.s32 0, %v1252
      %v1254 = vrot.slane %v1092, %v1253
      %v1255 = vlaneseq
      %v1256 = vshrl.u32 %v1255, 7
      %v1257 = vsub.s32 1, %v1256
      %v1258 = vrot.slane %v1092, %v1257
      %v1259 = vlaneseq
      %v1260 = vshrl.u32 %v1259, 7
      %v1261 = vsub.s32 2, %v1260
      %v1262 = vrot.slane %v1092, %v1261
      %v1263 = vlaneseq
      %v1264 = vshrl.u32 %v1263, 7
      %v1265 = vsub.s32 3, %v1264
      %v1266 = vrot.slane %v1092, %v1265
      %v1267 = vlaneseq
      %v1268 = vshrl.u32 %v1267, 7
      %v1269 = vsub.s32 4, %v1268
      %v1270 = vrot.slane %v1092, %v1269
      %v1271 = vlaneseq
      %v1272 = vshrl.u32 %v1271, 7
      %v1273 = vsub.s32 5, %v1272
      %v1274 = vrot.slane %v1092, %v1273
      %v1275 = vlaneseq
      %v1276 = vshrl.u32 %v1275, 7
      %v1277 = vsub.s32 6, %v1276
      %v1278 = vrot.slane %v1092, %v1277
      %v1279 = vlaneseq
      %v1280 = vshrl.u32 %v1279, 7
      %v1281 = vsub.s32 7, %v1280
      %v1282 = vrot.slane %v1092, %v1281
      %v1291 = vmul.f32 %v1242, %v1254
      %v1292 = vmul.f32 %v1243, %v1258
      %v1293 = vmul.f32 %v1244, %v1262
      %v1294 = vmul.f32 %v1245, %v1266
      %v1295 = vmul.f32 %v1246, %v1270
      %v1296 = vmul.f32 %v1247, %v1274
      %v1297 = vmul.f32 %v1248, %v1278
      %v1298 = vmul.f32 %v1249, %v1282
      %v1300 = vlaneseq
      %v1301 = vshrl.u32 %v1300, 7
      %v1302 = vsub.s32 0, %v1301
      %v1303 = vrot.slane %v1096, %v1302
      %v1304 = vlaneseq
      %v1305 = vshrl.u32 %v1304, 7
      %v1306 = vsub.s32 1, %v1305
      %v1307 = vrot.slane %v1096, %v1306
      %v1308 = vlaneseq
      %v1309 = vshrl.u32 %v1308, 7
      %v1310 = vsub.s32 2, %v1309
      %v1311 = vrot.slane %v1096, %v1310
      %v1312 = vlaneseq
      %v1313 = vshrl.u32 %v1312, 7
      %v1314 = vsub.s32 3, %v1313
      %v1315 = vrot.slane %v1096, %v1314
      %v1316 = vlaneseq
      %v1317 = vshrl.u32 %v1316, 7
      %v1318 = vsub.s32 4, %v1317
      %v1319 = vrot.slane %v1096, %v1318
      %v1320 = vlaneseq
      %v1321 = vshrl.u32 %v1320, 7
      %v1322 = vsub.s32 5, %v1321
      %v1323 = vrot.slane %v1096, %v1322
      %v1324 = vlaneseq
      %v1325 = vshrl.u32 %v1324, 7
      %v1326 = vsub.s32 6, %v1325
      %v1327 = vrot.slane %v1096, %v1326
      %v1328 = vlaneseq
      %v1329 = vshrl.u32 %v1328, 7
      %v1330 = vsub.s32 7, %v1329
      %v1331 = vrot.slane %v1096, %v1330
      %v1340 = vadd.f32 %v1291, %v1303
      %v1341 = vadd.f32 %v1292, %v1307
      %v1342 = vadd.f32 %v1293, %v1311
      %v1343 = vadd.f32 %v1294, %v1315
      %v1344 = vadd.f32 %v1295, %v1319
      %v1345 = vadd.f32 %v1296, %v1323
      %v1346 = vadd.f32 %v1297, %v1327
      %v1347 = vadd.f32 %v1298, %v1331
      %v1348 = vmax.f32 %v1340, 0.0
      %v1349 = vmax.f32 %v1341, 0.0
      %v1350 = vmax.f32 %v1342, 0.0
      %v1351 = vmax.f32 %v1343, 0.0
      %v1352 = vmax.f32 %v1344, 0.0
      %v1353 = vmax.f32 %v1345, 0.0
      %v1354 = vmax.f32 %v1346, 0.0
      %v1355 = vmax.f32 %v1347, 0.0
      %v1356 = vpack.c.bf16 %v1348, %v1348
      %v1357 = vpack.c.bf16 %v1349, %v1349
      %v1358 = vpack.c.bf16 %v1350, %v1350
      %v1359 = vpack.c.bf16 %v1351, %v1351
      %v1360 = vpack.c.bf16 %v1352, %v1352
      %v1361 = vpack.c.bf16 %v1353, %v1353
      %v1362 = vpack.c.bf16 %v1354, %v1354
      %v1363 = vpack.c.bf16 %v1355, %v1355
      %v1364 = vld [vmem:[#allocation8] sm:$0xff]
      %v1365 = vld [vmem:[#allocation8 + $0x8] sm:$0xff]
      %v1366 = vld [vmem:[#allocation8 + $0x10] sm:$0xff]
      %v1367 = vld [vmem:[#allocation8 + $0x18] sm:$0xff]
      %v1368 = vld [vmem:[#allocation8 + $0x20] sm:$0xff]
      %v1369 = vld [vmem:[#allocation8 + $0x28] sm:$0xff]
      %v1370 = vld [vmem:[#allocation8 + $0x30] sm:$0xff]
      %v1371 = vld [vmem:[#allocation8 + $0x38] sm:$0xff]
      %v1372 = vld [vmem:[#allocation8 + $0x40] sm:$0xff]
      %v1373 = vld [vmem:[#allocation8 + $0x48] sm:$0xff]
      %v1374 = vld [vmem:[#allocation8 + $0x50] sm:$0xff]
      %v1375 = vld [vmem:[#allocation8 + $0x58] sm:$0xff]
      %v1376 = vld [vmem:[#allocation8 + $0x60] sm:$0xff]
      %v1377 = vld [vmem:[#allocation8 + $0x68] sm:$0xff]
      %v1378 = vld [vmem:[#allocation8 + $0x70] sm:$0xff]
      %v1379 = vld [vmem:[#allocation8 + $0x78] sm:$0xff]
      %v1380 = vld [vmem:[#allocation8 + $0x80] sm:$0xff]
      %v1381 = vld [vmem:[#allocation8 + $0x88] sm:$0xff]
      %v1382 = vld [vmem:[#allocation8 + $0x90] sm:$0xff]
      %v1383 = vld [vmem:[#allocation8 + $0x98] sm:$0xff]
      %v1384 = vld [vmem:[#allocation8 + $0xa0] sm:$0xff]
      %v1385 = vld [vmem:[#allocation8 + $0xa8] sm:$0xff]
      %v1386 = vld [vmem:[#allocation8 + $0xb0] sm:$0xff]
      %v1387 = vld [vmem:[#allocation8 + $0xb8] sm:$0xff]
      %v1388 = vld [vmem:[#allocation8 + $0xc0] sm:$0xff]
      %v1389 = vld [vmem:[#allocation8 + $0xc8] sm:$0xff]
      %v1390 = vld [vmem:[#allocation8 + $0xd0] sm:$0xff]
      %v1391 = vld [vmem:[#allocation8 + $0xd8] sm:$0xff]
      %v1392 = vld [vmem:[#allocation8 + $0xe0] sm:$0xff]
      %v1393 = vld [vmem:[#allocation8 + $0xe8] sm:$0xff]
      %v1394 = vld [vmem:[#allocation8 + $0xf0] sm:$0xff]
      %v1395 = vld [vmem:[#allocation8 + $0xf8] sm:$0xff]
      %v1396 = vld [vmem:[#allocation8 + $0x100] sm:$0xff]
      %v1397 = vld [vmem:[#allocation8 + $0x108] sm:$0xff]
      %v1398 = vld [vmem:[#allocation8 + $0x110] sm:$0xff]
      %v1399 = vld [vmem:[#allocation8 + $0x118] sm:$0xff]
      %v1400 = vld [vmem:[#allocation8 + $0x120] sm:$0xff]
      %v1401 = vld [vmem:[#allocation8 + $0x128] sm:$0xff]
      %v1402 = vld [vmem:[#allocation8 + $0x130] sm:$0xff]
      %v1403 = vld [vmem:[#allocation8 + $0x138] sm:$0xff]
      %v1404 = vld [vmem:[#allocation8 + $0x140] sm:$0xff]
      %v1405 = vld [vmem:[#allocation8 + $0x148] sm:$0xff]
      %v1406 = vld [vmem:[#allocation8 + $0x150] sm:$0xff]
      %v1407 = vld [vmem:[#allocation8 + $0x158] sm:$0xff]
      %v1408 = vld [vmem:[#allocation8 + $0x160] sm:$0xff]
      %v1409 = vld [vmem:[#allocation8 + $0x168] sm:$0xff]
      %v1410 = vld [vmem:[#allocation8 + $0x170] sm:$0xff]
      %v1411 = vld [vmem:[#allocation8 + $0x178] sm:$0xff]
      %v1412 = vld [vmem:[#allocation8 + $0x180] sm:$0xff]
      %v1413 = vld [vmem:[#allocation8 + $0x188] sm:$0xff]
      %v1414 = vld [vmem:[#allocation8 + $0x190] sm:$0xff]
      %v1415 = vld [vmem:[#allocation8 + $0x198] sm:$0xff]
      %v1416 = vld [vmem:[#allocation8 + $0x1a0] sm:$0xff]
      %v1417 = vld [vmem:[#allocation8 + $0x1a8] sm:$0xff]
      %v1418 = vld [vmem:[#allocation8 + $0x1b0] sm:$0xff]
      %v1419 = vld [vmem:[#allocation8 + $0x1b8] sm:$0xff]
      %v1420 = vld [vmem:[#allocation8 + $0x1c0] sm:$0xff]
      %v1421 = vld [vmem:[#allocation8 + $0x1c8] sm:$0xff]
      %v1422 = vld [vmem:[#allocation8 + $0x1d0] sm:$0xff]
      %v1423 = vld [vmem:[#allocation8 + $0x1d8] sm:$0xff]
      %v1424 = vld [vmem:[#allocation8 + $0x1e0] sm:$0xff]
      %v1425 = vld [vmem:[#allocation8 + $0x1e8] sm:$0xff]
      %v1426 = vld [vmem:[#allocation8 + $0x1f0] sm:$0xff]
      %v1427 = vld [vmem:[#allocation8 + $0x1f8] sm:$0xff]
      %v1428 = vld [vmem:[#allocation8 + $0x200] sm:$0xff]
      %v1429 = vld [vmem:[#allocation8 + $0x208] sm:$0xff]
      %v1430 = vld [vmem:[#allocation8 + $0x210] sm:$0xff]
      %v1431 = vld [vmem:[#allocation8 + $0x218] sm:$0xff]
      %v1432 = vld [vmem:[#allocation8 + $0x220] sm:$0xff]
      %v1433 = vld [vmem:[#allocation8 + $0x228] sm:$0xff]
      %v1434 = vld [vmem:[#allocation8 + $0x230] sm:$0xff]
      %v1435 = vld [vmem:[#allocation8 + $0x238] sm:$0xff]
      %v1436 = vld [vmem:[#allocation8 + $0x240] sm:$0xff]
      %v1437 = vld [vmem:[#allocation8 + $0x248] sm:$0xff]
      %v1438 = vld [vmem:[#allocation8 + $0x250] sm:$0xff]
      %v1439 = vld [vmem:[#allocation8 + $0x258] sm:$0xff]
      %v1440 = vld [vmem:[#allocation8 + $0x260] sm:$0xff]
      %v1441 = vld [vmem:[#allocation8 + $0x268] sm:$0xff]
      %v1442 = vld [vmem:[#allocation8 + $0x270] sm:$0xff]
      %v1443 = vld [vmem:[#allocation8 + $0x278] sm:$0xff]
      %v1444 = vld [vmem:[#allocation8 + $0x280] sm:$0xff]
      %v1445 = vld [vmem:[#allocation8 + $0x288] sm:$0xff]
      %v1446 = vld [vmem:[#allocation8 + $0x290] sm:$0xff]
      %v1447 = vld [vmem:[#allocation8 + $0x298] sm:$0xff]
      %v1448 = vld [vmem:[#allocation8 + $0x2a0] sm:$0xff]
      %v1449 = vld [vmem:[#allocation8 + $0x2a8] sm:$0xff]
      %v1450 = vld [vmem:[#allocation8 + $0x2b0] sm:$0xff]
      %v1451 = vld [vmem:[#allocation8 + $0x2b8] sm:$0xff]
      %v1452 = vld [vmem:[#allocation8 + $0x2c0] sm:$0xff]
      %v1453 = vld [vmem:[#allocation8 + $0x2c8] sm:$0xff]
      %v1454 = vld [vmem:[#allocation8 + $0x2d0] sm:$0xff]
      %v1455 = vld [vmem:[#allocation8 + $0x2d8] sm:$0xff]
      %v1456 = vld [vmem:[#allocation8 + $0x2e0] sm:$0xff]
      %v1457 = vld [vmem:[#allocation8 + $0x2e8] sm:$0xff]
      %v1458 = vld [vmem:[#allocation8 + $0x2f0] sm:$0xff]
      %v1459 = vld [vmem:[#allocation8 + $0x2f8] sm:$0xff]
      %v1460 = vld [vmem:[#allocation8 + $0x300] sm:$0xff]
      %v1461 = vld [vmem:[#allocation8 + $0x308] sm:$0xff]
      %v1462 = vld [vmem:[#allocation8 + $0x310] sm:$0xff]
      %v1463 = vld [vmem:[#allocation8 + $0x318] sm:$0xff]
      %v1464 = vld [vmem:[#allocation8 + $0x320] sm:$0xff]
      %v1465 = vld [vmem:[#allocation8 + $0x328] sm:$0xff]
      %v1466 = vld [vmem:[#allocation8 + $0x330] sm:$0xff]
      %v1467 = vld [vmem:[#allocation8 + $0x338] sm:$0xff]
      %v1468 = vld [vmem:[#allocation8 + $0x340] sm:$0xff]
      %v1469 = vld [vmem:[#allocation8 + $0x348] sm:$0xff]
      %v1470 = vld [vmem:[#allocation8 + $0x350] sm:$0xff]
      %v1471 = vld [vmem:[#allocation8 + $0x358] sm:$0xff]
      %v1472 = vld [vmem:[#allocation8 + $0x360] sm:$0xff]
      %v1473 = vld [vmem:[#allocation8 + $0x368] sm:$0xff]
      %v1474 = vld [vmem:[#allocation8 + $0x370] sm:$0xff]
      %v1475 = vld [vmem:[#allocation8 + $0x378] sm:$0xff]
      %v1476 = vld [vmem:[#allocation8 + $0x380] sm:$0xff]
      %v1477 = vld [vmem:[#allocation8 + $0x388] sm:$0xff]
      %v1478 = vld [vmem:[#allocation8 + $0x390] sm:$0xff]
      %v1479 = vld [vmem:[#allocation8 + $0x398] sm:$0xff]
      %v1480 = vld [vmem:[#allocation8 + $0x3a0] sm:$0xff]
      %v1481 = vld [vmem:[#allocation8 + $0x3a8] sm:$0xff]
      %v1482 = vld [vmem:[#allocation8 + $0x3b0] sm:$0xff]
      %v1483 = vld [vmem:[#allocation8 + $0x3b8] sm:$0xff]
      %v1484 = vld [vmem:[#allocation8 + $0x3c0] sm:$0xff]
      %v1485 = vld [vmem:[#allocation8 + $0x3c8] sm:$0xff]
      %v1486 = vld [vmem:[#allocation8 + $0x3d0] sm:$0xff]
      %v1487 = vld [vmem:[#allocation8 + $0x3d8] sm:$0xff]
      %v1488 = vld [vmem:[#allocation8 + $0x3e0] sm:$0xff]
      %v1489 = vld [vmem:[#allocation8 + $0x3e8] sm:$0xff]
      %v1490 = vld [vmem:[#allocation8 + $0x3f0] sm:$0xff]
      %v1491 = vld [vmem:[#allocation8 + $0x3f8] sm:$0xff]
      %v1492 = vld [vmem:[#allocation8 + $0x400] sm:$0xff]
      %v1493 = vld [vmem:[#allocation8 + $0x408] sm:$0xff]
      %v1494 = vld [vmem:[#allocation8 + $0x410] sm:$0xff]
      %v1495 = vld [vmem:[#allocation8 + $0x418] sm:$0xff]
      %v1496 = vld [vmem:[#allocation8 + $0x420] sm:$0xff]
      %v1497 = vld [vmem:[#allocation8 + $0x428] sm:$0xff]
      %v1498 = vld [vmem:[#allocation8 + $0x430] sm:$0xff]
      %v1499 = vld [vmem:[#allocation8 + $0x438] sm:$0xff]
      %v1500 = vld [vmem:[#allocation8 + $0x440] sm:$0xff]
      %v1501 = vld [vmem:[#allocation8 + $0x448] sm:$0xff]
      %v1502 = vld [vmem:[#allocation8 + $0x450] sm:$0xff]
      %v1503 = vld [vmem:[#allocation8 + $0x458] sm:$0xff]
      %v1504 = vld [vmem:[#allocation8 + $0x460] sm:$0xff]
      %v1505 = vld [vmem:[#allocation8 + $0x468] sm:$0xff]
      %v1506 = vld [vmem:[#allocation8 + $0x470] sm:$0xff]
      %v1507 = vld [vmem:[#allocation8 + $0x478] sm:$0xff]
      %v1508 = vld [vmem:[#allocation8 + $0x480] sm:$0xff]
      %v1509 = vld [vmem:[#allocation8 + $0x488] sm:$0xff]
      %v1510 = vld [vmem:[#allocation8 + $0x490] sm:$0xff]
      %v1511 = vld [vmem:[#allocation8 + $0x498] sm:$0xff]
      %v1512 = vld [vmem:[#allocation8 + $0x4a0] sm:$0xff]
      %v1513 = vld [vmem:[#allocation8 + $0x4a8] sm:$0xff]
      %v1514 = vld [vmem:[#allocation8 + $0x4b0] sm:$0xff]
      %v1515 = vld [vmem:[#allocation8 + $0x4b8] sm:$0xff]
      %v1516 = vld [vmem:[#allocation8 + $0x4c0] sm:$0xff]
      %v1517 = vld [vmem:[#allocation8 + $0x4c8] sm:$0xff]
      %v1518 = vld [vmem:[#allocation8 + $0x4d0] sm:$0xff]
      %v1519 = vld [vmem:[#allocation8 + $0x4d8] sm:$0xff]
      %v1520 = vld [vmem:[#allocation8 + $0x4e0] sm:$0xff]
      %v1521 = vld [vmem:[#allocation8 + $0x4e8] sm:$0xff]
      %v1522 = vld [vmem:[#allocation8 + $0x4f0] sm:$0xff]
      %v1523 = vld [vmem:[#allocation8 + $0x4f8] sm:$0xff]
      %v1524 = vld [vmem:[#allocation8 + $0x500] sm:$0xff]
      %v1525 = vld [vmem:[#allocation8 + $0x508] sm:$0xff]
      %v1526 = vld [vmem:[#allocation8 + $0x510] sm:$0xff]
      %v1527 = vld [vmem:[#allocation8 + $0x518] sm:$0xff]
      %v1528 = vld [vmem:[#allocation8 + $0x520] sm:$0xff]
      %v1529 = vld [vmem:[#allocation8 + $0x528] sm:$0xff]
      %v1530 = vld [vmem:[#allocation8 + $0x530] sm:$0xff]
      %v1531 = vld [vmem:[#allocation8 + $0x538] sm:$0xff]
      %v1532 = vld [vmem:[#allocation8 + $0x540] sm:$0xff]
      %v1533 = vld [vmem:[#allocation8 + $0x548] sm:$0xff]
      %v1534 = vld [vmem:[#allocation8 + $0x550] sm:$0xff]
      %v1535 = vld [vmem:[#allocation8 + $0x558] sm:$0xff]
      %v1536 = vld [vmem:[#allocation8 + $0x560] sm:$0xff]
      %v1537 = vld [vmem:[#allocation8 + $0x568] sm:$0xff]
      %v1538 = vld [vmem:[#allocation8 + $0x570] sm:$0xff]
      %v1539 = vld [vmem:[#allocation8 + $0x578] sm:$0xff]
      %v1540 = vld [vmem:[#allocation8 + $0x580] sm:$0xff]
      %v1541 = vld [vmem:[#allocation8 + $0x588] sm:$0xff]
      %v1542 = vld [vmem:[#allocation8 + $0x590] sm:$0xff]
      %v1543 = vld [vmem:[#allocation8 + $0x598] sm:$0xff]
      %v1544 = vld [vmem:[#allocation8 + $0x5a0] sm:$0xff]
      %v1545 = vld [vmem:[#allocation8 + $0x5a8] sm:$0xff]
      %v1546 = vld [vmem:[#allocation8 + $0x5b0] sm:$0xff]
      %v1547 = vld [vmem:[#allocation8 + $0x5b8] sm:$0xff]
      %v1548 = vld [vmem:[#allocation8 + $0x5c0] sm:$0xff]
      %v1549 = vld [vmem:[#allocation8 + $0x5c8] sm:$0xff]
      %v1550 = vld [vmem:[#allocation8 + $0x5d0] sm:$0xff]
      %v1551 = vld [vmem:[#allocation8 + $0x5d8] sm:$0xff]
      %v1552 = vld [vmem:[#allocation8 + $0x5e0] sm:$0xff]
      %v1553 = vld [vmem:[#allocation8 + $0x5e8] sm:$0xff]
      %v1554 = vld [vmem:[#allocation8 + $0x5f0] sm:$0xff]
      %v1555 = vld [vmem:[#allocation8 + $0x5f8] sm:$0xff]
      %v1556 = vld [vmem:[#allocation8 + $0x600] sm:$0xff]
      %v1557 = vld [vmem:[#allocation8 + $0x608] sm:$0xff]
      %v1558 = vld [vmem:[#allocation8 + $0x610] sm:$0xff]
      %v1559 = vld [vmem:[#allocation8 + $0x618] sm:$0xff]
      %v1560 = vld [vmem:[#allocation8 + $0x620] sm:$0xff]
      %v1561 = vld [vmem:[#allocation8 + $0x628] sm:$0xff]
      %v1562 = vld [vmem:[#allocation8 + $0x630] sm:$0xff]
      %v1563 = vld [vmem:[#allocation8 + $0x638] sm:$0xff]
      %v1564 = vld [vmem:[#allocation8 + $0x640] sm:$0xff]
      %v1565 = vld [vmem:[#allocation8 + $0x648] sm:$0xff]
      %v1566 = vld [vmem:[#allocation8 + $0x650] sm:$0xff]
      %v1567 = vld [vmem:[#allocation8 + $0x658] sm:$0xff]
      %v1568 = vld [vmem:[#allocation8 + $0x660] sm:$0xff]
      %v1569 = vld [vmem:[#allocation8 + $0x668] sm:$0xff]
      %v1570 = vld [vmem:[#allocation8 + $0x670] sm:$0xff]
      %v1571 = vld [vmem:[#allocation8 + $0x678] sm:$0xff]
      %v1572 = vld [vmem:[#allocation8 + $0x680] sm:$0xff]
      %v1573 = vld [vmem:[#allocation8 + $0x688] sm:$0xff]
      %v1574 = vld [vmem:[#allocation8 + $0x690] sm:$0xff]
      %v1575 = vld [vmem:[#allocation8 + $0x698] sm:$0xff]
      %v1576 = vld [vmem:[#allocation8 + $0x6a0] sm:$0xff]
      %v1577 = vld [vmem:[#allocation8 + $0x6a8] sm:$0xff]
      %v1578 = vld [vmem:[#allocation8 + $0x6b0] sm:$0xff]
      %v1579 = vld [vmem:[#allocation8 + $0x6b8] sm:$0xff]
      %v1580 = vld [vmem:[#allocation8 + $0x6c0] sm:$0xff]
      %v1581 = vld [vmem:[#allocation8 + $0x6c8] sm:$0xff]
      %v1582 = vld [vmem:[#allocation8 + $0x6d0] sm:$0xff]
      %v1583 = vld [vmem:[#allocation8 + $0x6d8] sm:$0xff]
      %v1584 = vld [vmem:[#allocation8 + $0x6e0] sm:$0xff]
      %v1585 = vld [vmem:[#allocation8 + $0x6e8] sm:$0xff]
      %v1586 = vld [vmem:[#allocation8 + $0x6f0] sm:$0xff]
      %v1587 = vld [vmem:[#allocation8 + $0x6f8] sm:$0xff]
      %v1588 = vld [vmem:[#allocation8 + $0x700] sm:$0xff]
      %v1589 = vld [vmem:[#allocation8 + $0x708] sm:$0xff]
      %v1590 = vld [vmem:[#allocation8 + $0x710] sm:$0xff]
      %v1591 = vld [vmem:[#allocation8 + $0x718] sm:$0xff]
      %v1592 = vld [vmem:[#allocation8 + $0x720] sm:$0xff]
      %v1593 = vld [vmem:[#allocation8 + $0x728] sm:$0xff]
      %v1594 = vld [vmem:[#allocation8 + $0x730] sm:$0xff]
      %v1595 = vld [vmem:[#allocation8 + $0x738] sm:$0xff]
      %v1596 = vld [vmem:[#allocation8 + $0x740] sm:$0xff]
      %v1597 = vld [vmem:[#allocation8 + $0x748] sm:$0xff]
      %v1598 = vld [vmem:[#allocation8 + $0x750] sm:$0xff]
      %v1599 = vld [vmem:[#allocation8 + $0x758] sm:$0xff]
      %v1600 = vld [vmem:[#allocation8 + $0x760] sm:$0xff]
      %v1601 = vld [vmem:[#allocation8 + $0x768] sm:$0xff]
      %v1602 = vld [vmem:[#allocation8 + $0x770] sm:$0xff]
      %v1603 = vld [vmem:[#allocation8 + $0x778] sm:$0xff]
      %v1604 = vld [vmem:[#allocation8 + $0x780] sm:$0xff]
      %v1605 = vld [vmem:[#allocation8 + $0x788] sm:$0xff]
      %v1606 = vld [vmem:[#allocation8 + $0x790] sm:$0xff]
      %v1607 = vld [vmem:[#allocation8 + $0x798] sm:$0xff]
      %v1608 = vld [vmem:[#allocation8 + $0x7a0] sm:$0xff]
      %v1609 = vld [vmem:[#allocation8 + $0x7a8] sm:$0xff]
      %v1610 = vld [vmem:[#allocation8 + $0x7b0] sm:$0xff]
      %v1611 = vld [vmem:[#allocation8 + $0x7b8] sm:$0xff]
      %v1612 = vld [vmem:[#allocation8 + $0x7c0] sm:$0xff]
      %v1613 = vld [vmem:[#allocation8 + $0x7c8] sm:$0xff]
      %v1614 = vld [vmem:[#allocation8 + $0x7d0] sm:$0xff]
      %v1615 = vld [vmem:[#allocation8 + $0x7d8] sm:$0xff]
      %v1616 = vld [vmem:[#allocation8 + $0x7e0] sm:$0xff]
      %v1617 = vld [vmem:[#allocation8 + $0x7e8] sm:$0xff]
      %v1618 = vld [vmem:[#allocation8 + $0x7f0] sm:$0xff]
      %v1619 = vld [vmem:[#allocation8 + $0x7f8] sm:$0xff]
      %v1876 = vunpack.c.l.b16 %v1364
      %v1877 = vunpack.c.h.b16 %v1364
      %v1878 = vunpack.c.l.b16 %v1365
      %v1879 = vunpack.c.h.b16 %v1365
      %v1880 = vunpack.c.l.b16 %v1366
      %v1881 = vunpack.c.h.b16 %v1366
      %v1882 = vunpack.c.l.b16 %v1367
      %v1883 = vunpack.c.h.b16 %v1367
      %v1884 = vunpack.c.l.b16 %v1368
      %v1885 = vunpack.c.h.b16 %v1368
      %v1886 = vunpack.c.l.b16 %v1369
      %v1887 = vunpack.c.h.b16 %v1369
      %v1888 = vunpack.c.l.b16 %v1370
      %v1889 = vunpack.c.h.b16 %v1370
      %v1890 = vunpack.c.l.b16 %v1371
      %v1891 = vunpack.c.h.b16 %v1371
      %v1892 = vunpack.c.l.b16 %v1372
      %v1893 = vunpack.c.h.b16 %v1372
      %v1894 = vunpack.c.l.b16 %v1373
      %v1895 = vunpack.c.h.b16 %v1373
      %v1896 = vunpack.c.l.b16 %v1374
      %v1897 = vunpack.c.h.b16 %v1374
      %v1898 = vunpack.c.l.b16 %v1375
      %v1899 = vunpack.c.h.b16 %v1375
      %v1900 = vunpack.c.l.b16 %v1376
      %v1901 = vunpack.c.h.b16 %v1376
      %v1902 = vunpack.c.l.b16 %v1377
      %v1903 = vunpack.c.h.b16 %v1377
      %v1904 = vunpack.c.l.b16 %v1378
      %v1905 = vunpack.c.h.b16 %v1378
      %v1906 = vunpack.c.l.b16 %v1379
      %v1907 = vunpack.c.h.b16 %v1379
      %v1908 = vunpack.c.l.b16 %v1380
      %v1909 = vunpack.c.h.b16 %v1380
      %v1910 = vunpack.c.l.b16 %v1381
      %v1911 = vunpack.c.h.b16 %v1381
      %v1912 = vunpack.c.l.b16 %v1382
      %v1913 = vunpack.c.h.b16 %v1382
      %v1914 = vunpack.c.l.b16 %v1383
      %v1915 = vunpack.c.h.b16 %v1383
      %v1916 = vunpack.c.l.b16 %v1384
      %v1917 = vunpack.c.h.b16 %v1384
      %v1918 = vunpack.c.l.b16 %v1385
      %v1919 = vunpack.c.h.b16 %v1385
      %v1920 = vunpack.c.l.b16 %v1386
      %v1921 = vunpack.c.h.b16 %v1386
      %v1922 = vunpack.c.l.b16 %v1387
      %v1923 = vunpack.c.h.b16 %v1387
      %v1924 = vunpack.c.l.b16 %v1388
      %v1925 = vunpack.c.h.b16 %v1388
      %v1926 = vunpack.c.l.b16 %v1389
      %v1927 = vunpack.c.h.b16 %v1389
      %v1928 = vunpack.c.l.b16 %v1390
      %v1929 = vunpack.c.h.b16 %v1390
      %v1930 = vunpack.c.l.b16 %v1391
      %v1931 = vunpack.c.h.b16 %v1391
      %v1932 = vunpack.c.l.b16 %v1392
      %v1933 = vunpack.c.h.b16 %v1392
      %v1934 = vunpack.c.l.b16 %v1393
      %v1935 = vunpack.c.h.b16 %v1393
      %v1936 = vunpack.c.l.b16 %v1394
      %v1937 = vunpack.c.h.b16 %v1394
      %v1938 = vunpack.c.l.b16 %v1395
      %v1939 = vunpack.c.h.b16 %v1395
      %v1940 = vunpack.c.l.b16 %v1396
      %v1941 = vunpack.c.h.b16 %v1396
      %v1942 = vunpack.c.l.b16 %v1397
      %v1943 = vunpack.c.h.b16 %v1397
      %v1944 = vunpack.c.l.b16 %v1398
      %v1945 = vunpack.c.h.b16 %v1398
      %v1946 = vunpack.c.l.b16 %v1399
      %v1947 = vunpack.c.h.b16 %v1399
      %v1948 = vunpack.c.l.b16 %v1400
      %v1949 = vunpack.c.h.b16 %v1400
      %v1950 = vunpack.c.l.b16 %v1401
      %v1951 = vunpack.c.h.b16 %v1401
      %v1952 = vunpack.c.l.b16 %v1402
      %v1953 = vunpack.c.h.b16 %v1402
      %v1954 = vunpack.c.l.b16 %v1403
      %v1955 = vunpack.c.h.b16 %v1403
      %v1956 = vunpack.c.l.b16 %v1404
      %v1957 = vunpack.c.h.b16 %v1404
      %v1958 = vunpack.c.l.b16 %v1405
      %v1959 = vunpack.c.h.b16 %v1405
      %v1960 = vunpack.c.l.b16 %v1406
      %v1961 = vunpack.c.h.b16 %v1406
      %v1962 = vunpack.c.l.b16 %v1407
      %v1963 = vunpack.c.h.b16 %v1407
      %v1964 = vunpack.c.l.b16 %v1408
      %v1965 = vunpack.c.h.b16 %v1408
      %v1966 = vunpack.c.l.b16 %v1409
      %v1967 = vunpack.c.h.b16 %v1409
      %v1968 = vunpack.c.l.b16 %v1410
      %v1969 = vunpack.c.h.b16 %v1410
      %v1970 = vunpack.c.l.b16 %v1411
      %v1971 = vunpack.c.h.b16 %v1411
      %v1972 = vunpack.c.l.b16 %v1412
      %v1973 = vunpack.c.h.b16 %v1412
      %v1974 = vunpack.c.l.b16 %v1413
      %v1975 = vunpack.c.h.b16 %v1413
      %v1976 = vunpack.c.l.b16 %v1414
      %v1977 = vunpack.c.h.b16 %v1414
      %v1978 = vunpack.c.l.b16 %v1415
      %v1979 = vunpack.c.h.b16 %v1415
      %v1980 = vunpack.c.l.b16 %v1416
      %v1981 = vunpack.c.h.b16 %v1416
      %v1982 = vunpack.c.l.b16 %v1417
      %v1983 = vunpack.c.h.b16 %v1417
      %v1984 = vunpack.c.l.b16 %v1418
      %v1985 = vunpack.c.h.b16 %v1418
      %v1986 = vunpack.c.l.b16 %v1419
      %v1987 = vunpack.c.h.b16 %v1419
      %v1988 = vunpack.c.l.b16 %v1420
      %v1989 = vunpack.c.h.b16 %v1420
      %v1990 = vunpack.c.l.b16 %v1421
      %v1991 = vunpack.c.h.b16 %v1421
      %v1992 = vunpack.c.l.b16 %v1422
      %v1993 = vunpack.c.h.b16 %v1422
      %v1994 = vunpack.c.l.b16 %v1423
      %v1995 = vunpack.c.h.b16 %v1423
      %v1996 = vunpack.c.l.b16 %v1424
      %v1997 = vunpack.c.h.b16 %v1424
      %v1998 = vunpack.c.l.b16 %v1425
      %v1999 = vunpack.c.h.b16 %v1425
      %v2000 = vunpack.c.l.b16 %v1426
      %v2001 = vunpack.c.h.b16 %v1426
      %v2002 = vunpack.c.l.b16 %v1427
      %v2003 = vunpack.c.h.b16 %v1427
      %v2004 = vunpack.c.l.b16 %v1428
      %v2005 = vunpack.c.h.b16 %v1428
      %v2006 = vunpack.c.l.b16 %v1429
      %v2007 = vunpack.c.h.b16 %v1429
      %v2008 = vunpack.c.l.b16 %v1430
      %v2009 = vunpack.c.h.b16 %v1430
      %v2010 = vunpack.c.l.b16 %v1431
      %v2011 = vunpack.c.h.b16 %v1431
      %v2012 = vunpack.c.l.b16 %v1432
      %v2013 = vunpack.c.h.b16 %v1432
      %v2014 = vunpack.c.l.b16 %v1433
      %v2015 = vunpack.c.h.b16 %v1433
      %v2016 = vunpack.c.l.b16 %v1434
      %v2017 = vunpack.c.h.b16 %v1434
      %v2018 = vunpack.c.l.b16 %v1435
      %v2019 = vunpack.c.h.b16 %v1435
      %v2020 = vunpack.c.l.b16 %v1436
      %v2021 = vunpack.c.h.b16 %v1436
      %v2022 = vunpack.c.l.b16 %v1437
      %v2023 = vunpack.c.h.b16 %v1437
      %v2024 = vunpack.c.l.b16 %v1438
      %v2025 = vunpack.c.h.b16 %v1438
      %v2026 = vunpack.c.l.b16 %v1439
      %v2027 = vunpack.c.h.b16 %v1439
      %v2028 = vunpack.c.l.b16 %v1440
      %v2029 = vunpack.c.h.b16 %v1440
      %v2030 = vunpack.c.l.b16 %v1441
      %v2031 = vunpack.c.h.b16 %v1441
      %v2032 = vunpack.c.l.b16 %v1442
      %v2033 = vunpack.c.h.b16 %v1442
      %v2034 = vunpack.c.l.b16 %v1443
      %v2035 = vunpack.c.h.b16 %v1443
      %v2036 = vunpack.c.l.b16 %v1444
      %v2037 = vunpack.c.h.b16 %v1444
      %v2038 = vunpack.c.l.b16 %v1445
      %v2039 = vunpack.c.h.b16 %v1445
      %v2040 = vunpack.c.l.b16 %v1446
      %v2041 = vunpack.c.h.b16 %v1446
      %v2042 = vunpack.c.l.b16 %v1447
      %v2043 = vunpack.c.h.b16 %v1447
      %v2044 = vunpack.c.l.b16 %v1448
      %v2045 = vunpack.c.h.b16 %v1448
      %v2046 = vunpack.c.l.b16 %v1449
      %v2047 = vunpack.c.h.b16 %v1449
      %v2048 = vunpack.c.l.b16 %v1450
      %v2049 = vunpack.c.h.b16 %v1450
      %v2050 = vunpack.c.l.b16 %v1451
      %v2051 = vunpack.c.h.b16 %v1451
      %v2052 = vunpack.c.l.b16 %v1452
      %v2053 = vunpack.c.h.b16 %v1452
      %v2054 = vunpack.c.l.b16 %v1453
      %v2055 = vunpack.c.h.b16 %v1453
      %v2056 = vunpack.c.l.b16 %v1454
      %v2057 = vunpack.c.h.b16 %v1454
      %v2058 = vunpack.c.l.b16 %v1455
      %v2059 = vunpack.c.h.b16 %v1455
      %v2060 = vunpack.c.l.b16 %v1456
      %v2061 = vunpack.c.h.b16 %v1456
      %v2062 = vunpack.c.l.b16 %v1457
      %v2063 = vunpack.c.h.b16 %v1457
      %v2064 = vunpack.c.l.b16 %v1458
      %v2065 = vunpack.c.h.b16 %v1458
      %v2066 = vunpack.c.l.b16 %v1459
      %v2067 = vunpack.c.h.b16 %v1459
      %v2068 = vunpack.c.l.b16 %v1460
      %v2069 = vunpack.c.h.b16 %v1460
      %v2070 = vunpack.c.l.b16 %v1461
      %v2071 = vunpack.c.h.b16 %v1461
      %v2072 = vunpack.c.l.b16 %v1462
      %v2073 = vunpack.c.h.b16 %v1462
      %v2074 = vunpack.c.l.b16 %v1463
      %v2075 = vunpack.c.h.b16 %v1463
      %v2076 = vunpack.c.l.b16 %v1464
      %v2077 = vunpack.c.h.b16 %v1464
      %v2078 = vunpack.c.l.b16 %v1465
      %v2079 = vunpack.c.h.b16 %v1465
      %v2080 = vunpack.c.l.b16 %v1466
      %v2081 = vunpack.c.h.b16 %v1466
      %v2082 = vunpack.c.l.b16 %v1467
      %v2083 = vunpack.c.h.b16 %v1467
      %v2084 = vunpack.c.l.b16 %v1468
      %v2085 = vunpack.c.h.b16 %v1468
      %v2086 = vunpack.c.l.b16 %v1469
      %v2087 = vunpack.c.h.b16 %v1469
      %v2088 = vunpack.c.l.b16 %v1470
      %v2089 = vunpack.c.h.b16 %v1470
      %v2090 = vunpack.c.l.b16 %v1471
      %v2091 = vunpack.c.h.b16 %v1471
      %v2092 = vunpack.c.l.b16 %v1472
      %v2093 = vunpack.c.h.b16 %v1472
      %v2094 = vunpack.c.l.b16 %v1473
      %v2095 = vunpack.c.h.b16 %v1473
      %v2096 = vunpack.c.l.b16 %v1474
      %v2097 = vunpack.c.h.b16 %v1474
      %v2098 = vunpack.c.l.b16 %v1475
      %v2099 = vunpack.c.h.b16 %v1475
      %v2100 = vunpack.c.l.b16 %v1476
      %v2101 = vunpack.c.h.b16 %v1476
      %v2102 = vunpack.c.l.b16 %v1477
      %v2103 = vunpack.c.h.b16 %v1477
      %v2104 = vunpack.c.l.b16 %v1478
      %v2105 = vunpack.c.h.b16 %v1478
      %v2106 = vunpack.c.l.b16 %v1479
      %v2107 = vunpack.c.h.b16 %v1479
      %v2108 = vunpack.c.l.b16 %v1480
      %v2109 = vunpack.c.h.b16 %v1480
      %v2110 = vunpack.c.l.b16 %v1481
      %v2111 = vunpack.c.h.b16 %v1481
      %v2112 = vunpack.c.l.b16 %v1482
      %v2113 = vunpack.c.h.b16 %v1482
      %v2114 = vunpack.c.l.b16 %v1483
      %v2115 = vunpack.c.h.b16 %v1483
      %v2116 = vunpack.c.l.b16 %v1484
      %v2117 = vunpack.c.h.b16 %v1484
      %v2118 = vunpack.c.l.b16 %v1485
      %v2119 = vunpack.c.h.b16 %v1485
      %v2120 = vunpack.c.l.b16 %v1486
      %v2121 = vunpack.c.h.b16 %v1486
      %v2122 = vunpack.c.l.b16 %v1487
      %v2123 = vunpack.c.h.b16 %v1487
      %v2124 = vunpack.c.l.b16 %v1488
      %v2125 = vunpack.c.h.b16 %v1488
      %v2126 = vunpack.c.l.b16 %v1489
      %v2127 = vunpack.c.h.b16 %v1489
      %v2128 = vunpack.c.l.b16 %v1490
      %v2129 = vunpack.c.h.b16 %v1490
      %v2130 = vunpack.c.l.b16 %v1491
      %v2131 = vunpack.c.h.b16 %v1491
      %v2132 = vunpack.c.l.b16 %v1492
      %v2133 = vunpack.c.h.b16 %v1492
      %v2134 = vunpack.c.l.b16 %v1493
      %v2135 = vunpack.c.h.b16 %v1493
      %v2136 = vunpack.c.l.b16 %v1494
      %v2137 = vunpack.c.h.b16 %v1494
      %v2138 = vunpack.c.l.b16 %v1495
      %v2139 = vunpack.c.h.b16 %v1495
      %v2140 = vunpack.c.l.b16 %v1496
      %v2141 = vunpack.c.h.b16 %v1496
      %v2142 = vunpack.c.l.b16 %v1497
      %v2143 = vunpack.c.h.b16 %v1497
      %v2144 = vunpack.c.l.b16 %v1498
      %v2145 = vunpack.c.h.b16 %v1498
      %v2146 = vunpack.c.l.b16 %v1499
      %v2147 = vunpack.c.h.b16 %v1499
      %v2148 = vunpack.c.l.b16 %v1500
      %v2149 = vunpack.c.h.b16 %v1500
      %v2150 = vunpack.c.l.b16 %v1501
      %v2151 = vunpack.c.h.b16 %v1501
      %v2152 = vunpack.c.l.b16 %v1502
      %v2153 = vunpack.c.h.b16 %v1502
      %v2154 = vunpack.c.l.b16 %v1503
      %v2155 = vunpack.c.h.b16 %v1503
      %v2156 = vunpack.c.l.b16 %v1504
      %v2157 = vunpack.c.h.b16 %v1504
      %v2158 = vunpack.c.l.b16 %v1505
      %v2159 = vunpack.c.h.b16 %v1505
      %v2160 = vunpack.c.l.b16 %v1506
      %v2161 = vunpack.c.h.b16 %v1506
      %v2162 = vunpack.c.l.b16 %v1507
      %v2163 = vunpack.c.h.b16 %v1507
      %v2164 = vunpack.c.l.b16 %v1508
      %v2165 = vunpack.c.h.b16 %v1508
      %v2166 = vunpack.c.l.b16 %v1509
      %v2167 = vunpack.c.h.b16 %v1509
      %v2168 = vunpack.c.l.b16 %v1510
      %v2169 = vunpack.c.h.b16 %v1510
      %v2170 = vunpack.c.l.b16 %v1511
      %v2171 = vunpack.c.h.b16 %v1511
      %v2172 = vunpack.c.l.b16 %v1512
      %v2173 = vunpack.c.h.b16 %v1512
      %v2174 = vunpack.c.l.b16 %v1513
      %v2175 = vunpack.c.h.b16 %v1513
      %v2176 = vunpack.c.l.b16 %v1514
      %v2177 = vunpack.c.h.b16 %v1514
      %v2178 = vunpack.c.l.b16 %v1515
      %v2179 = vunpack.c.h.b16 %v1515
      %v2180 = vunpack.c.l.b16 %v1516
      %v2181 = vunpack.c.h.b16 %v1516
      %v2182 = vunpack.c.l.b16 %v1517
      %v2183 = vunpack.c.h.b16 %v1517
      %v2184 = vunpack.c.l.b16 %v1518
      %v2185 = vunpack.c.h.b16 %v1518
      %v2186 = vunpack.c.l.b16 %v1519
      %v2187 = vunpack.c.h.b16 %v1519
      %v2188 = vunpack.c.l.b16 %v1520
      %v2189 = vunpack.c.h.b16 %v1520
      %v2190 = vunpack.c.l.b16 %v1521
      %v2191 = vunpack.c.h.b16 %v1521
      %v2192 = vunpack.c.l.b16 %v1522
      %v2193 = vunpack.c.h.b16 %v1522
      %v2194 = vunpack.c.l.b16 %v1523
      %v2195 = vunpack.c.h.b16 %v1523
      %v2196 = vunpack.c.l.b16 %v1524
      %v2197 = vunpack.c.h.b16 %v1524
      %v2198 = vunpack.c.l.b16 %v1525
      %v2199 = vunpack.c.h.b16 %v1525
      %v2200 = vunpack.c.l.b16 %v1526
      %v2201 = vunpack.c.h.b16 %v1526
      %v2202 = vunpack.c.l.b16 %v1527
      %v2203 = vunpack.c.h.b16 %v1527
      %v2204 = vunpack.c.l.b16 %v1528
      %v2205 = vunpack.c.h.b16 %v1528
      %v2206 = vunpack.c.l.b16 %v1529
      %v2207 = vunpack.c.h.b16 %v1529
      %v2208 = vunpack.c.l.b16 %v1530
      %v2209 = vunpack.c.h.b16 %v1530
      %v2210 = vunpack.c.l.b16 %v1531
      %v2211 = vunpack.c.h.b16 %v1531
      %v2212 = vunpack.c.l.b16 %v1532
      %v2213 = vunpack.c.h.b16 %v1532
      %v2214 = vunpack.c.l.b16 %v1533
      %v2215 = vunpack.c.h.b16 %v1533
      %v2216 = vunpack.c.l.b16 %v1534
      %v2217 = vunpack.c.h.b16 %v1534
      %v2218 = vunpack.c.l.b16 %v1535
      %v2219 = vunpack.c.h.b16 %v1535
      %v2220 = vunpack.c.l.b16 %v1536
      %v2221 = vunpack.c.h.b16 %v1536
      %v2222 = vunpack.c.l.b16 %v1537
      %v2223 = vunpack.c.h.b16 %v1537
      %v2224 = vunpack.c.l.b16 %v1538
      %v2225 = vunpack.c.h.b16 %v1538
      %v2226 = vunpack.c.l.b16 %v1539
      %v2227 = vunpack.c.h.b16 %v1539
      %v2228 = vunpack.c.l.b16 %v1540
      %v2229 = vunpack.c.h.b16 %v1540
      %v2230 = vunpack.c.l.b16 %v1541
      %v2231 = vunpack.c.h.b16 %v1541
      %v2232 = vunpack.c.l.b16 %v1542
      %v2233 = vunpack.c.h.b16 %v1542
      %v2234 = vunpack.c.l.b16 %v1543
      %v2235 = vunpack.c.h.b16 %v1543
      %v2236 = vunpack.c.l.b16 %v1544
      %v2237 = vunpack.c.h.b16 %v1544
      %v2238 = vunpack.c.l.b16 %v1545
      %v2239 = vunpack.c.h.b16 %v1545
      %v2240 = vunpack.c.l.b16 %v1546
      %v2241 = vunpack.c.h.b16 %v1546
      %v2242 = vunpack.c.l.b16 %v1547
      %v2243 = vunpack.c.h.b16 %v1547
      %v2244 = vunpack.c.l.b16 %v1548
      %v2245 = vunpack.c.h.b16 %v1548
      %v2246 = vunpack.c.l.b16 %v1549
      %v2247 = vunpack.c.h.b16 %v1549
      %v2248 = vunpack.c.l.b16 %v1550
      %v2249 = vunpack.c.h.b16 %v1550
      %v2250 = vunpack.c.l.b16 %v1551
      %v2251 = vunpack.c.h.b16 %v1551
      %v2252 = vunpack.c.l.b16 %v1552
      %v2253 = vunpack.c.h.b16 %v1552
      %v2254 = vunpack.c.l.b16 %v1553
      %v2255 = vunpack.c.h.b16 %v1553
      %v2256 = vunpack.c.l.b16 %v1554
      %v2257 = vunpack.c.h.b16 %v1554
      %v2258 = vunpack.c.l.b16 %v1555
      %v2259 = vunpack.c.h.b16 %v1555
      %v2260 = vunpack.c.l.b16 %v1556
      %v2261 = vunpack.c.h.b16 %v1556
      %v2262 = vunpack.c.l.b16 %v1557
      %v2263 = vunpack.c.h.b16 %v1557
      %v2264 = vunpack.c.l.b16 %v1558
      %v2265 = vunpack.c.h.b16 %v1558
      %v2266 = vunpack.c.l.b16 %v1559
      %v2267 = vunpack.c.h.b16 %v1559
      %v2268 = vunpack.c.l.b16 %v1560
      %v2269 = vunpack.c.h.b16 %v1560
      %v2270 = vunpack.c.l.b16 %v1561
      %v2271 = vunpack.c.h.b16 %v1561
      %v2272 = vunpack.c.l.b16 %v1562
      %v2273 = vunpack.c.h.b16 %v1562
      %v2274 = vunpack.c.l.b16 %v1563
      %v2275 = vunpack.c.h.b16 %v1563
      %v2276 = vunpack.c.l.b16 %v1564
      %v2277 = vunpack.c.h.b16 %v1564
      %v2278 = vunpack.c.l.b16 %v1565
      %v2279 = vunpack.c.h.b16 %v1565
      %v2280 = vunpack.c.l.b16 %v1566
      %v2281 = vunpack.c.h.b16 %v1566
      %v2282 = vunpack.c.l.b16 %v1567
      %v2283 = vunpack.c.h.b16 %v1567
      %v2284 = vunpack.c.l.b16 %v1568
      %v2285 = vunpack.c.h.b16 %v1568
      %v2286 = vunpack.c.l.b16 %v1569
      %v2287 = vunpack.c.h.b16 %v1569
      %v2288 = vunpack.c.l.b16 %v1570
      %v2289 = vunpack.c.h.b16 %v1570
      %v2290 = vunpack.c.l.b16 %v1571
      %v2291 = vunpack.c.h.b16 %v1571
      %v2292 = vunpack.c.l.b16 %v1572
      %v2293 = vunpack.c.h.b16 %v1572
      %v2294 = vunpack.c.l.b16 %v1573
      %v2295 = vunpack.c.h.b16 %v1573
      %v2296 = vunpack.c.l.b16 %v1574
      %v2297 = vunpack.c.h.b16 %v1574
      %v2298 = vunpack.c.l.b16 %v1575
      %v2299 = vunpack.c.h.b16 %v1575
      %v2300 = vunpack.c.l.b16 %v1576
      %v2301 = vunpack.c.h.b16 %v1576
      %v2302 = vunpack.c.l.b16 %v1577
      %v2303 = vunpack.c.h.b16 %v1577
      %v2304 = vunpack.c.l.b16 %v1578
      %v2305 = vunpack.c.h.b16 %v1578
      %v2306 = vunpack.c.l.b16 %v1579
      %v2307 = vunpack.c.h.b16 %v1579
      %v2308 = vunpack.c.l.b16 %v1580
      %v2309 = vunpack.c.h.b16 %v1580
      %v2310 = vunpack.c.l.b16 %v1581
      %v2311 = vunpack.c.h.b16 %v1581
      %v2312 = vunpack.c.l.b16 %v1582
      %v2313 = vunpack.c.h.b16 %v1582
      %v2314 = vunpack.c.l.b16 %v1583
      %v2315 = vunpack.c.h.b16 %v1583
      %v2316 = vunpack.c.l.b16 %v1584
      %v2317 = vunpack.c.h.b16 %v1584
      %v2318 = vunpack.c.l.b16 %v1585
      %v2319 = vunpack.c.h.b16 %v1585
      %v2320 = vunpack.c.l.b16 %v1586
      %v2321 = vunpack.c.h.b16 %v1586
      %v2322 = vunpack.c.l.b16 %v1587
      %v2323 = vunpack.c.h.b16 %v1587
      %v2324 = vunpack.c.l.b16 %v1588
      %v2325 = vunpack.c.h.b16 %v1588
      %v2326 = vunpack.c.l.b16 %v1589
      %v2327 = vunpack.c.h.b16 %v1589
      %v2328 = vunpack.c.l.b16 %v1590
      %v2329 = vunpack.c.h.b16 %v1590
      %v2330 = vunpack.c.l.b16 %v1591
      %v2331 = vunpack.c.h.b16 %v1591
      %v2332 = vunpack.c.l.b16 %v1592
      %v2333 = vunpack.c.h.b16 %v1592
      %v2334 = vunpack.c.l.b16 %v1593
      %v2335 = vunpack.c.h.b16 %v1593
      %v2336 = vunpack.c.l.b16 %v1594
      %v2337 = vunpack.c.h.b16 %v1594
      %v2338 = vunpack.c.l.b16 %v1595
      %v2339 = vunpack.c.h.b16 %v1595
      %v2340 = vunpack.c.l.b16 %v1596
      %v2341 = vunpack.c.h.b16 %v1596
      %v2342 = vunpack.c.l.b16 %v1597
      %v2343 = vunpack.c.h.b16 %v1597
      %v2344 = vunpack.c.l.b16 %v1598
      %v2345 = vunpack.c.h.b16 %v1598
      %v2346 = vunpack.c.l.b16 %v1599
      %v2347 = vunpack.c.h.b16 %v1599
      %v2348 = vunpack.c.l.b16 %v1600
      %v2349 = vunpack.c.h.b16 %v1600
      %v2350 = vunpack.c.l.b16 %v1601
      %v2351 = vunpack.c.h.b16 %v1601
      %v2352 = vunpack.c.l.b16 %v1602
      %v2353 = vunpack.c.h.b16 %v1602
      %v2354 = vunpack.c.l.b16 %v1603
      %v2355 = vunpack.c.h.b16 %v1603
      %v2356 = vunpack.c.l.b16 %v1604
      %v2357 = vunpack.c.h.b16 %v1604
      %v2358 = vunpack.c.l.b16 %v1605
      %v2359 = vunpack.c.h.b16 %v1605
      %v2360 = vunpack.c.l.b16 %v1606
      %v2361 = vunpack.c.h.b16 %v1606
      %v2362 = vunpack.c.l.b16 %v1607
      %v2363 = vunpack.c.h.b16 %v1607
      %v2364 = vunpack.c.l.b16 %v1608
      %v2365 = vunpack.c.h.b16 %v1608
      %v2366 = vunpack.c.l.b16 %v1609
      %v2367 = vunpack.c.h.b16 %v1609
      %v2368 = vunpack.c.l.b16 %v1610
      %v2369 = vunpack.c.h.b16 %v1610
      %v2370 = vunpack.c.l.b16 %v1611
      %v2371 = vunpack.c.h.b16 %v1611
      %v2372 = vunpack.c.l.b16 %v1612
      %v2373 = vunpack.c.h.b16 %v1612
      %v2374 = vunpack.c.l.b16 %v1613
      %v2375 = vunpack.c.h.b16 %v1613
      %v2376 = vunpack.c.l.b16 %v1614
      %v2377 = vunpack.c.h.b16 %v1614
      %v2378 = vunpack.c.l.b16 %v1615
      %v2379 = vunpack.c.h.b16 %v1615
      %v2380 = vunpack.c.l.b16 %v1616
      %v2381 = vunpack.c.h.b16 %v1616
      %v2382 = vunpack.c.l.b16 %v1617
      %v2383 = vunpack.c.h.b16 %v1617
      %v2384 = vunpack.c.l.b16 %v1618
      %v2385 = vunpack.c.h.b16 %v1618
      %v2386 = vunpack.c.l.b16 %v1619
      %v2387 = vunpack.c.h.b16 %v1619
      %v2388 = vpack.c.b16 %v1880, %v1876
      %v2389 = vpack.c.b16 %v1881, %v1877
      %v2390 = vpack.c.b16 %v1882, %v1878
      %v2391 = vpack.c.b16 %v1883, %v1879
      %v2392 = vpack.c.b16 %v1888, %v1884
      %v2393 = vpack.c.b16 %v1889, %v1885
      %v2394 = vpack.c.b16 %v1890, %v1886
      %v2395 = vpack.c.b16 %v1891, %v1887
      %v2396 = vpack.c.b16 %v1896, %v1892
      %v2397 = vpack.c.b16 %v1897, %v1893
      %v2398 = vpack.c.b16 %v1898, %v1894
      %v2399 = vpack.c.b16 %v1899, %v1895
      %v2400 = vpack.c.b16 %v1904, %v1900
      %v2401 = vpack.c.b16 %v1905, %v1901
      %v2402 = vpack.c.b16 %v1906, %v1902
      %v2403 = vpack.c.b16 %v1907, %v1903
      %v2404 = vpack.c.b16 %v1912, %v1908
      %v2405 = vpack.c.b16 %v1913, %v1909
      %v2406 = vpack.c.b16 %v1914, %v1910
      %v2407 = vpack.c.b16 %v1915, %v1911
      %v2408 = vpack.c.b16 %v1920, %v1916
      %v2409 = vpack.c.b16 %v1921, %v1917
      %v2410 = vpack.c.b16 %v1922, %v1918
      %v2411 = vpack.c.b16 %v1923, %v1919
      %v2412 = vpack.c.b16 %v1928, %v1924
      %v2413 = vpack.c.b16 %v1929, %v1925
      %v2414 = vpack.c.b16 %v1930, %v1926
      %v2415 = vpack.c.b16 %v1931, %v1927
      %v2416 = vpack.c.b16 %v1936, %v1932
      %v2417 = vpack.c.b16 %v1937, %v1933
      %v2418 = vpack.c.b16 %v1938, %v1934
      %v2419 = vpack.c.b16 %v1939, %v1935
      %v2420 = vpack.c.b16 %v1944, %v1940
      %v2421 = vpack.c.b16 %v1945, %v1941
      %v2422 = vpack.c.b16 %v1946, %v1942
      %v2423 = vpack.c.b16 %v1947, %v1943
      %v2424 = vpack.c.b16 %v1952, %v1948
      %v2425 = vpack.c.b16 %v1953, %v1949
      %v2426 = vpack.c.b16 %v1954, %v1950
      %v2427 = vpack.c.b16 %v1955, %v1951
      %v2428 = vpack.c.b16 %v1960, %v1956
      %v2429 = vpack.c.b16 %v1961, %v1957
      %v2430 = vpack.c.b16 %v1962, %v1958
      %v2431 = vpack.c.b16 %v1963, %v1959
      %v2432 = vpack.c.b16 %v1968, %v1964
      %v2433 = vpack.c.b16 %v1969, %v1965
      %v2434 = vpack.c.b16 %v1970, %v1966
      %v2435 = vpack.c.b16 %v1971, %v1967
      %v2436 = vpack.c.b16 %v1976, %v1972
      %v2437 = vpack.c.b16 %v1977, %v1973
      %v2438 = vpack.c.b16 %v1978, %v1974
      %v2439 = vpack.c.b16 %v1979, %v1975
      %v2440 = vpack.c.b16 %v1984, %v1980
      %v2441 = vpack.c.b16 %v1985, %v1981
      %v2442 = vpack.c.b16 %v1986, %v1982
      %v2443 = vpack.c.b16 %v1987, %v1983
      %v2444 = vpack.c.b16 %v1992, %v1988
      %v2445 = vpack.c.b16 %v1993, %v1989
      %v2446 = vpack.c.b16 %v1994, %v1990
      %v2447 = vpack.c.b16 %v1995, %v1991
      %v2448 = vpack.c.b16 %v2000, %v1996
      %v2449 = vpack.c.b16 %v2001, %v1997
      %v2450 = vpack.c.b16 %v2002, %v1998
      %v2451 = vpack.c.b16 %v2003, %v1999
      %v2452 = vpack.c.b16 %v2008, %v2004
      %v2453 = vpack.c.b16 %v2009, %v2005
      %v2454 = vpack.c.b16 %v2010, %v2006
      %v2455 = vpack.c.b16 %v2011, %v2007
      %v2456 = vpack.c.b16 %v2016, %v2012
      %v2457 = vpack.c.b16 %v2017, %v2013
      %v2458 = vpack.c.b16 %v2018, %v2014
      %v2459 = vpack.c.b16 %v2019, %v2015
      %v2460 = vpack.c.b16 %v2024, %v2020
      %v2461 = vpack.c.b16 %v2025, %v2021
      %v2462 = vpack.c.b16 %v2026, %v2022
      %v2463 = vpack.c.b16 %v2027, %v2023
      %v2464 = vpack.c.b16 %v2032, %v2028
      %v2465 = vpack.c.b16 %v2033, %v2029
      %v2466 = vpack.c.b16 %v2034, %v2030
      %v2467 = vpack.c.b16 %v2035, %v2031
      %v2468 = vpack.c.b16 %v2040, %v2036
      %v2469 = vpack.c.b16 %v2041, %v2037
      %v2470 = vpack.c.b16 %v2042, %v2038
      %v2471 = vpack.c.b16 %v2043, %v2039
      %v2472 = vpack.c.b16 %v2048, %v2044
      %v2473 = vpack.c.b16 %v2049, %v2045
      %v2474 = vpack.c.b16 %v2050, %v2046
      %v2475 = vpack.c.b16 %v2051, %v2047
      %v2476 = vpack.c.b16 %v2056, %v2052
      %v2477 = vpack.c.b16 %v2057, %v2053
      %v2478 = vpack.c.b16 %v2058, %v2054
      %v2479 = vpack.c.b16 %v2059, %v2055
      %v2480 = vpack.c.b16 %v2064, %v2060
      %v2481 = vpack.c.b16 %v2065, %v2061
      %v2482 = vpack.c.b16 %v2066, %v2062
      %v2483 = vpack.c.b16 %v2067, %v2063
      %v2484 = vpack.c.b16 %v2072, %v2068
      %v2485 = vpack.c.b16 %v2073, %v2069
      %v2486 = vpack.c.b16 %v2074, %v2070
      %v2487 = vpack.c.b16 %v2075, %v2071
      %v2488 = vpack.c.b16 %v2080, %v2076
      %v2489 = vpack.c.b16 %v2081, %v2077
      %v2490 = vpack.c.b16 %v2082, %v2078
      %v2491 = vpack.c.b16 %v2083, %v2079
      %v2492 = vpack.c.b16 %v2088, %v2084
      %v2493 = vpack.c.b16 %v2089, %v2085
      %v2494 = vpack.c.b16 %v2090, %v2086
      %v2495 = vpack.c.b16 %v2091, %v2087
      %v2496 = vpack.c.b16 %v2096, %v2092
      %v2497 = vpack.c.b16 %v2097, %v2093
      %v2498 = vpack.c.b16 %v2098, %v2094
      %v2499 = vpack.c.b16 %v2099, %v2095
      %v2500 = vpack.c.b16 %v2104, %v2100
      %v2501 = vpack.c.b16 %v2105, %v2101
      %v2502 = vpack.c.b16 %v2106, %v2102
      %v2503 = vpack.c.b16 %v2107, %v2103
      %v2504 = vpack.c.b16 %v2112, %v2108
      %v2505 = vpack.c.b16 %v2113, %v2109
      %v2506 = vpack.c.b16 %v2114, %v2110
      %v2507 = vpack.c.b16 %v2115, %v2111
      %v2508 = vpack.c.b16 %v2120, %v2116
      %v2509 = vpack.c.b16 %v2121, %v2117
      %v2510 = vpack.c.b16 %v2122, %v2118
      %v2511 = vpack.c.b16 %v2123, %v2119
      %v2512 = vpack.c.b16 %v2128, %v2124
      %v2513 = vpack.c.b16 %v2129, %v2125
      %v2514 = vpack.c.b16 %v2130, %v2126
      %v2515 = vpack.c.b16 %v2131, %v2127
      %v2516 = vpack.c.b16 %v2136, %v2132
      %v2517 = vpack.c.b16 %v2137, %v2133
      %v2518 = vpack.c.b16 %v2138, %v2134
      %v2519 = vpack.c.b16 %v2139, %v2135
      %v2520 = vpack.c.b16 %v2144, %v2140
      %v2521 = vpack.c.b16 %v2145, %v2141
      %v2522 = vpack.c.b16 %v2146, %v2142
      %v2523 = vpack.c.b16 %v2147, %v2143
      %v2524 = vpack.c.b16 %v2152, %v2148
      %v2525 = vpack.c.b16 %v2153, %v2149
      %v2526 = vpack.c.b16 %v2154, %v2150
      %v2527 = vpack.c.b16 %v2155, %v2151
      %v2528 = vpack.c.b16 %v2160, %v2156
      %v2529 = vpack.c.b16 %v2161, %v2157
      %v2530 = vpack.c.b16 %v2162, %v2158
      %v2531 = vpack.c.b16 %v2163, %v2159
      %v2532 = vpack.c.b16 %v2168, %v2164
      %v2533 = vpack.c.b16 %v2169, %v2165
      %v2534 = vpack.c.b16 %v2170, %v2166
      %v2535 = vpack.c.b16 %v2171, %v2167
      %v2536 = vpack.c.b16 %v2176, %v2172
      %v2537 = vpack.c.b16 %v2177, %v2173
      %v2538 = vpack.c.b16 %v2178, %v2174
      %v2539 = vpack.c.b16 %v2179, %v2175
      %v2540 = vpack.c.b16 %v2184, %v2180
      %v2541 = vpack.c.b16 %v2185, %v2181
      %v2542 = vpack.c.b16 %v2186, %v2182
      %v2543 = vpack.c.b16 %v2187, %v2183
      %v2544 = vpack.c.b16 %v2192, %v2188
      %v2545 = vpack.c.b16 %v2193, %v2189
      %v2546 = vpack.c.b16 %v2194, %v2190
      %v2547 = vpack.c.b16 %v2195, %v2191
      %v2548 = vpack.c.b16 %v2200, %v2196
      %v2549 = vpack.c.b16 %v2201, %v2197
      %v2550 = vpack.c.b16 %v2202, %v2198
      %v2551 = vpack.c.b16 %v2203, %v2199
      %v2552 = vpack.c.b16 %v2208, %v2204
      %v2553 = vpack.c.b16 %v2209, %v2205
      %v2554 = vpack.c.b16 %v2210, %v2206
      %v2555 = vpack.c.b16 %v2211, %v2207
      %v2556 = vpack.c.b16 %v2216, %v2212
      %v2557 = vpack.c.b16 %v2217, %v2213
      %v2558 = vpack.c.b16 %v2218, %v2214
      %v2559 = vpack.c.b16 %v2219, %v2215
      %v2560 = vpack.c.b16 %v2224, %v2220
      %v2561 = vpack.c.b16 %v2225, %v2221
      %v2562 = vpack.c.b16 %v2226, %v2222
      %v2563 = vpack.c.b16 %v2227, %v2223
      %v2564 = vpack.c.b16 %v2232, %v2228
      %v2565 = vpack.c.b16 %v2233, %v2229
      %v2566 = vpack.c.b16 %v2234, %v2230
      %v2567 = vpack.c.b16 %v2235, %v2231
      %v2568 = vpack.c.b16 %v2240, %v2236
      %v2569 = vpack.c.b16 %v2241, %v2237
      %v2570 = vpack.c.b16 %v2242, %v2238
      %v2571 = vpack.c.b16 %v2243, %v2239
      %v2572 = vpack.c.b16 %v2248, %v2244
      %v2573 = vpack.c.b16 %v2249, %v2245
      %v2574 = vpack.c.b16 %v2250, %v2246
      %v2575 = vpack.c.b16 %v2251, %v2247
      %v2576 = vpack.c.b16 %v2256, %v2252
      %v2577 = vpack.c.b16 %v2257, %v2253
      %v2578 = vpack.c.b16 %v2258, %v2254
      %v2579 = vpack.c.b16 %v2259, %v2255
      %v2580 = vpack.c.b16 %v2264, %v2260
      %v2581 = vpack.c.b16 %v2265, %v2261
      %v2582 = vpack.c.b16 %v2266, %v2262
      %v2583 = vpack.c.b16 %v2267, %v2263
      %v2584 = vpack.c.b16 %v2272, %v2268
      %v2585 = vpack.c.b16 %v2273, %v2269
      %v2586 = vpack.c.b16 %v2274, %v2270
      %v2587 = vpack.c.b16 %v2275, %v2271
      %v2588 = vpack.c.b16 %v2280, %v2276
      %v2589 = vpack.c.b16 %v2281, %v2277
      %v2590 = vpack.c.b16 %v2282, %v2278
      %v2591 = vpack.c.b16 %v2283, %v2279
      %v2592 = vpack.c.b16 %v2288, %v2284
      %v2593 = vpack.c.b16 %v2289, %v2285
      %v2594 = vpack.c.b16 %v2290, %v2286
      %v2595 = vpack.c.b16 %v2291, %v2287
      %v2596 = vpack.c.b16 %v2296, %v2292
      %v2597 = vpack.c.b16 %v2297, %v2293
      %v2598 = vpack.c.b16 %v2298, %v2294
      %v2599 = vpack.c.b16 %v2299, %v2295
      %v2600 = vpack.c.b16 %v2304, %v2300
      %v2601 = vpack.c.b16 %v2305, %v2301
      %v2602 = vpack.c.b16 %v2306, %v2302
      %v2603 = vpack.c.b16 %v2307, %v2303
      %v2604 = vpack.c.b16 %v2312, %v2308
      %v2605 = vpack.c.b16 %v2313, %v2309
      %v2606 = vpack.c.b16 %v2314, %v2310
      %v2607 = vpack.c.b16 %v2315, %v2311
      %v2608 = vpack.c.b16 %v2320, %v2316
      %v2609 = vpack.c.b16 %v2321, %v2317
      %v2610 = vpack.c.b16 %v2322, %v2318
      %v2611 = vpack.c.b16 %v2323, %v2319
      %v2612 = vpack.c.b16 %v2328, %v2324
      %v2613 = vpack.c.b16 %v2329, %v2325
      %v2614 = vpack.c.b16 %v2330, %v2326
      %v2615 = vpack.c.b16 %v2331, %v2327
      %v2616 = vpack.c.b16 %v2336, %v2332
      %v2617 = vpack.c.b16 %v2337, %v2333
      %v2618 = vpack.c.b16 %v2338, %v2334
      %v2619 = vpack.c.b16 %v2339, %v2335
      %v2620 = vpack.c.b16 %v2344, %v2340
      %v2621 = vpack.c.b16 %v2345, %v2341
      %v2622 = vpack.c.b16 %v2346, %v2342
      %v2623 = vpack.c.b16 %v2347, %v2343
      %v2624 = vpack.c.b16 %v2352, %v2348
      %v2625 = vpack.c.b16 %v2353, %v2349
      %v2626 = vpack.c.b16 %v2354, %v2350
      %v2627 = vpack.c.b16 %v2355, %v2351
      %v2628 = vpack.c.b16 %v2360, %v2356
      %v2629 = vpack.c.b16 %v2361, %v2357
      %v2630 = vpack.c.b16 %v2362, %v2358
      %v2631 = vpack.c.b16 %v2363, %v2359
      %v2632 = vpack.c.b16 %v2368, %v2364
      %v2633 = vpack.c.b16 %v2369, %v2365
      %v2634 = vpack.c.b16 %v2370, %v2366
      %v2635 = vpack.c.b16 %v2371, %v2367
      %v2636 = vpack.c.b16 %v2376, %v2372
      %v2637 = vpack.c.b16 %v2377, %v2373
      %v2638 = vpack.c.b16 %v2378, %v2374
      %v2639 = vpack.c.b16 %v2379, %v2375
      %v2640 = vpack.c.b16 %v2384, %v2380
      %v2641 = vpack.c.b16 %v2385, %v2381
      %v2642 = vpack.c.b16 %v2386, %v2382
      %v2643 = vpack.c.b16 %v2387, %v2383
      %2900 = vmatprep.subr.bf16.mxu0 %v2389
      %2901 = vmatpush1.bf16.msra.mxu0 %v2388
      %2902 = vmatprep.subr.bf16.mxu0 %v2393
      %2903 = vmatpush1.bf16.msra.mxu0 %v2392
      %2904 = vmatprep.subr.bf16.mxu0 %v2397
      %2905 = vmatpush1.bf16.msra.mxu0 %v2396
      %2906 = vmatprep.subr.bf16.mxu0 %v2401
      %2907 = vmatpush1.bf16.msra.mxu0 %v2400
      %2908 = vmatprep.subr.bf16.mxu0 %v2405
      %2909 = vmatpush1.bf16.msra.mxu0 %v2404
      %2910 = vmatprep.subr.bf16.mxu0 %v2409
      %2911 = vmatpush1.bf16.msra.mxu0 %v2408
      %2912 = vmatprep.subr.bf16.mxu0 %v2413
      %2913 = vmatpush1.bf16.msra.mxu0 %v2412
      %2914 = vmatprep.subr.bf16.mxu0 %v2417
      %2915 = vmatpush1.bf16.msra.mxu0 %v2416
      %2916 = vmatprep.subr.bf16.mxu0 %v2421
      %2917 = vmatpush1.bf16.msra.mxu0 %v2420
      %2918 = vmatprep.subr.bf16.mxu0 %v2425
      %2919 = vmatpush1.bf16.msra.mxu0 %v2424
      %2920 = vmatprep.subr.bf16.mxu0 %v2429
      %2921 = vmatpush1.bf16.msra.mxu0 %v2428
      %2922 = vmatprep.subr.bf16.mxu0 %v2433
      %2923 = vmatpush1.bf16.msra.mxu0 %v2432
      %2924 = vmatprep.subr.bf16.mxu0 %v2437
      %2925 = vmatpush1.bf16.msra.mxu0 %v2436
      %2926 = vmatprep.subr.bf16.mxu0 %v2441
      %2927 = vmatpush1.bf16.msra.mxu0 %v2440
      %2928 = vmatprep.subr.bf16.mxu0 %v2445
      %2929 = vmatpush1.bf16.msra.mxu0 %v2444
      %2930 = vmatprep.subr.bf16.mxu0 %v2449
      %2931 = vmatpush1.bf16.msra.mxu0 %v2448
      %2932 = vmatprep.mubr.bf16.mxu0 %v1357
      %2933 = vmatmul.mubr.bf16.gmra.mrb[0].mxu0 %v1356
      %v2934 = vpop.f32.mrb[0].mxu0
      %v2935 = vadd.f32 0.0, %v2934
      %v2936 = vpop.f32.mrb[0].mxu0
      %v2937 = vadd.f32 0.0, %v2936
      %v2938 = vpop.f32.mrb[0].mxu0
      %v2939 = vpop.f32.mrb[0].mxu0
      %2940 = vdwg.mxu0
      %2941 = vmatprep.subr.bf16.mxu0 %v2453
      %2942 = vmatpush1.bf16.msra.mxu0 %v2452
      %2943 = vmatprep.subr.bf16.mxu0 %v2457
      %2944 = vmatpush1.bf16.msra.mxu0 %v2456
      %2945 = vmatprep.subr.bf16.mxu0 %v2461
      %2946 = vmatpush1.bf16.msra.mxu0 %v2460
      %2947 = vmatprep.subr.bf16.mxu0 %v2465
      %2948 = vmatpush1.bf16.msra.mxu0 %v2464
      %2949 = vmatprep.subr.bf16.mxu0 %v2469
      %2950 = vmatpush1.bf16.msra.mxu0 %v2468
      %2951 = vmatprep.subr.bf16.mxu0 %v2473
      %2952 = vmatpush1.bf16.msra.mxu0 %v2472
      %2953 = vmatprep.subr.bf16.mxu0 %v2477
      %2954 = vmatpush1.bf16.msra.mxu0 %v2476
      %2955 = vmatprep.subr.bf16.mxu0 %v2481
      %2956 = vmatpush1.bf16.msra.mxu0 %v2480
      %2957 = vmatprep.subr.bf16.mxu0 %v2485
      %2958 = vmatpush1.bf16.msra.mxu0 %v2484
      %2959 = vmatprep.subr.bf16.mxu0 %v2489
      %2960 = vmatpush1.bf16.msra.mxu0 %v2488
      %2961 = vmatprep.subr.bf16.mxu0 %v2493
      %2962 = vmatpush1.bf16.msra.mxu0 %v2492
      %2963 = vmatprep.subr.bf16.mxu0 %v2497
      %2964 = vmatpush1.bf16.msra.mxu0 %v2496
      %2965 = vmatprep.subr.bf16.mxu0 %v2501
      %2966 = vmatpush1.bf16.msra.mxu0 %v2500
      %2967 = vmatprep.subr.bf16.mxu0 %v2505
      %2968 = vmatpush1.bf16.msra.mxu0 %v2504
      %2969 = vmatprep.subr.bf16.mxu0 %v2509
      %2970 = vmatpush1.bf16.msra.mxu0 %v2508
      %2971 = vmatprep.subr.bf16.mxu0 %v2513
      %2972 = vmatpush1.bf16.msra.mxu0 %v2512
      %2973 = vmatprep.mubr.bf16.mxu0 %v1359
      %2974 = vmatmul.mubr.bf16.gmra.mrb[0].mxu0 %v1358
      %v2975 = vpop.f32.mrb[0].mxu0
      %v2976 = vadd.f32 %v2935, %v2975
      %v2977 = vpop.f32.mrb[0].mxu0
      %v2978 = vadd.f32 %v2937, %v2977
      %v2979 = vpop.f32.mrb[0].mxu0
      %v2980 = vpop.f32.mrb[0].mxu0
      %2981 = vdwg.mxu0
      %2982 = vmatprep.subr.bf16.mxu0 %v2517
      %2983 = vmatpush1.bf16.msra.mxu0 %v2516
      %2984 = vmatprep.subr.bf16.mxu0 %v2521
      %2985 = vmatpush1.bf16.msra.mxu0 %v2520
      %2986 = vmatprep.subr.bf16.mxu0 %v2525
      %2987 = vmatpush1.bf16.msra.mxu0 %v2524
      %2988 = vmatprep.subr.bf16.mxu0 %v2529
      %2989 = vmatpush1.bf16.msra.mxu0 %v2528
      %2990 = vmatprep.subr.bf16.mxu0 %v2533
      %2991 = vmatpush1.bf16.msra.mxu0 %v2532
      %2992 = vmatprep.subr.bf16.mxu0 %v2537
      %2993 = vmatpush1.bf16.msra.mxu0 %v2536
      %2994 = vmatprep.subr.bf16.mxu0 %v2541
      %2995 = vmatpush1.bf16.msra.mxu0 %v2540
      %2996 = vmatprep.subr.bf16.mxu0 %v2545
      %2997 = vmatpush1.bf16.msra.mxu0 %v2544
      %2998 = vmatprep.subr.bf16.mxu0 %v2549
      %2999 = vmatpush1.bf16.msra.mxu0 %v2548
      %3000 = vmatprep.subr.bf16.mxu0 %v2553
      %3001 = vmatpush1.bf16.msra.mxu0 %v2552
      %3002 = vmatprep.subr.bf16.mxu0 %v2557
      %3003 = vmatpush1.bf16.msra.mxu0 %v2556
      %3004 = vmatprep.subr.bf16.mxu0 %v2561
      %3005 = vmatpush1.bf16.msra.mxu0 %v2560
      %3006 = vmatprep.subr.bf16.mxu0 %v2565
      %3007 = vmatpush1.bf16.msra.mxu0 %v2564
      %3008 = vmatprep.subr.bf16.mxu0 %v2569
      %3009 = vmatpush1.bf16.msra.mxu0 %v2568
      %3010 = vmatprep.subr.bf16.mxu0 %v2573
      %3011 = vmatpush1.bf16.msra.mxu0 %v2572
      %3012 = vmatprep.subr.bf16.mxu0 %v2577
      %3013 = vmatpush1.bf16.msra.mxu0 %v2576
      %3014 = vmatprep.mubr.bf16.mxu0 %v1361
      %3015 = vmatmul.mubr.bf16.gmra.mrb[0].mxu0 %v1360
      %v3016 = vpop.f32.mrb[0].mxu0
      %v3017 = vadd.f32 %v2976, %v3016
      %v3018 = vpop.f32.mrb[0].mxu0
      %v3019 = vadd.f32 %v2978, %v3018
      %v3020 = vpop.f32.mrb[0].mxu0
      %v3021 = vpop.f32.mrb[0].mxu0
      %3022 = vdwg.mxu0
      %3023 = vmatprep.subr.bf16.mxu0 %v2581
      %3024 = vmatpush1.bf16.msra.mxu0 %v2580
      %3025 = vmatprep.subr.bf16.mxu0 %v2585
      %3026 = vmatpush1.bf16.msra.mxu0 %v2584
      %3027 = vmatprep.subr.bf16.mxu0 %v2589
      %3028 = vmatpush1.bf16.msra.mxu0 %v2588
      %3029 = vmatprep.subr.bf16.mxu0 %v2593
      %3030 = vmatpush1.bf16.msra.mxu0 %v2592
      %3031 = vmatprep.subr.bf16.mxu0 %v2597
      %3032 = vmatpush1.bf16.msra.mxu0 %v2596
      %3033 = vmatprep.subr.bf16.mxu0 %v2601
      %3034 = vmatpush1.bf16.msra.mxu0 %v2600
      %3035 = vmatprep.subr.bf16.mxu0 %v2605
      %3036 = vmatpush1.bf16.msra.mxu0 %v2604
      %3037 = vmatprep.subr.bf16.mxu0 %v2609
      %3038 = vmatpush1.bf16.msra.mxu0 %v2608
      %3039 = vmatprep.subr.bf16.mxu0 %v2613
      %3040 = vmatpush1.bf16.msra.mxu0 %v2612
      %3041 = vmatprep.subr.bf16.mxu0 %v2617
      %3042 = vmatpush1.bf16.msra.mxu0 %v2616
      %3043 = vmatprep.subr.bf16.mxu0 %v2621
      %3044 = vmatpush1.bf16.msra.mxu0 %v2620
      %3045 = vmatprep.subr.bf16.mxu0 %v2625
      %3046 = vmatpush1.bf16.msra.mxu0 %v2624
      %3047 = vmatprep.subr.bf16.mxu0 %v2629
      %3048 = vmatpush1.bf16.msra.mxu0 %v2628
      %3049 = vmatprep.subr.bf16.mxu0 %v2633
      %3050 = vmatpush1.bf16.msra.mxu0 %v2632
      %3051 = vmatprep.subr.bf16.mxu0 %v2637
      %3052 = vmatpush1.bf16.msra.mxu0 %v2636
      %3053 = vmatprep.subr.bf16.mxu0 %v2641
      %3054 = vmatpush1.bf16.msra.mxu0 %v2640
      %3055 = vmatprep.mubr.bf16.mxu0 %v1363
      %3056 = vmatmul.mubr.bf16.gmra.mrb[0].mxu0 %v1362
      %v3057 = vpop.f32.mrb[0].mxu0
      %v3058 = vadd.f32 %v3017, %v3057
      %v3059 = vpop.f32.mrb[0].mxu0
      %v3060 = vadd.f32 %v3019, %v3059
      %v3061 = vpop.f32.mrb[0].mxu0
      %v3062 = vpop.f32.mrb[0].mxu0
      %3063 = vdwg.mxu0
      %3064 = vmatprep.subr.bf16.mxu0 %v2391
      %3065 = vmatpush1.bf16.msra.mxu0 %v2390
      %3066 = vmatprep.subr.bf16.mxu0 %v2395
      %3067 = vmatpush1.bf16.msra.mxu0 %v2394
      %3068 = vmatprep.subr.bf16.mxu0 %v2399
      %3069 = vmatpush1.bf16.msra.mxu0 %v2398
      %3070 = vmatprep.subr.bf16.mxu0 %v2403
      %3071 = vmatpush1.bf16.msra.mxu0 %v2402
      %3072 = vmatprep.subr.bf16.mxu0 %v2407
      %3073 = vmatpush1.bf16.msra.mxu0 %v2406
      %3074 = vmatprep.subr.bf16.mxu0 %v2411
      %3075 = vmatpush1.bf16.msra.mxu0 %v2410
      %3076 = vmatprep.subr.bf16.mxu0 %v2415
      %3077 = vmatpush1.bf16.msra.mxu0 %v2414
      %3078 = vmatprep.subr.bf16.mxu0 %v2419
      %3079 = vmatpush1.bf16.msra.mxu0 %v2418
      %3080 = vmatprep.subr.bf16.mxu0 %v2423
      %3081 = vmatpush1.bf16.msra.mxu0 %v2422
      %3082 = vmatprep.subr.bf16.mxu0 %v2427
      %3083 = vmatpush1.bf16.msra.mxu0 %v2426
      %3084 = vmatprep.subr.bf16.mxu0 %v2431
      %3085 = vmatpush1.bf16.msra.mxu0 %v2430
      %3086 = vmatprep.subr.bf16.mxu0 %v2435
      %3087 = vmatpush1.bf16.msra.mxu0 %v2434
      %3088 = vmatprep.subr.bf16.mxu0 %v2439
      %3089 = vmatpush1.bf16.msra.mxu0 %v2438
      %3090 = vmatprep.subr.bf16.mxu0 %v2443
      %3091 = vmatpush1.bf16.msra.mxu0 %v2442
      %3092 = vmatprep.subr.bf16.mxu0 %v2447
      %3093 = vmatpush1.bf16.msra.mxu0 %v2446
      %3094 = vmatprep.subr.bf16.mxu0 %v2451
      %3095 = vmatpush1.bf16.msra.mxu0 %v2450
      %3096 = vmatprep.mubr.bf16.mxu0 %v1357
      %3097 = vmatmul.mubr.bf16.gmra.mrb[0].mxu0 %v1356
      %v3098 = vpop.f32.mrb[0].mxu0
      %v3099 = vadd.f32 0.0, %v3098
      %v3100 = vpop.f32.mrb[0].mxu0
      %v3101 = vadd.f32 0.0, %v3100
      %v3102 = vpop.f32.mrb[0].mxu0
      %v3103 = vpop.f32.mrb[0].mxu0
      %3104 = vdwg.mxu0
      %3105 = vmatprep.subr.bf16.mxu0 %v2455
      %3106 = vmatpush1.bf16.msra.mxu0 %v2454
      %3107 = vmatprep.subr.bf16.mxu0 %v2459
      %3108 = vmatpush1.bf16.msra.mxu0 %v2458
      %3109 = vmatprep.subr.bf16.mxu0 %v2463
      %3110 = vmatpush1.bf16.msra.mxu0 %v2462
      %3111 = vmatprep.subr.bf16.mxu0 %v2467
      %3112 = vmatpush1.bf16.msra.mxu0 %v2466
      %3113 = vmatprep.subr.bf16.mxu0 %v2471
      %3114 = vmatpush1.bf16.msra.mxu0 %v2470
      %3115 = vmatprep.subr.bf16.mxu0 %v2475
      %3116 = vmatpush1.bf16.msra.mxu0 %v2474
      %3117 = vmatprep.subr.bf16.mxu0 %v2479
      %3118 = vmatpush1.bf16.msra.mxu0 %v2478
      %3119 = vmatprep.subr.bf16.mxu0 %v2483
      %3120 = vmatpush1.bf16.msra.mxu0 %v2482
      %3121 = vmatprep.subr.bf16.mxu0 %v2487
      %3122 = vmatpush1.bf16.msra.mxu0 %v2486
      %3123 = vmatprep.subr.bf16.mxu0 %v2491
      %3124 = vmatpush1.bf16.msra.mxu0 %v2490
      %3125 = vmatprep.subr.bf16.mxu0 %v2495
      %3126 = vmatpush1.bf16.msra.mxu0 %v2494
      %3127 = vmatprep.subr.bf16.mxu0 %v2499
      %3128 = vmatpush1.bf16.msra.mxu0 %v2498
      %3129 = vmatprep.subr.bf16.mxu0 %v2503
      %3130 = vmatpush1.bf16.msra.mxu0 %v2502
      %3131 = vmatprep.subr.bf16.mxu0 %v2507
      %3132 = vmatpush1.bf16.msra.mxu0 %v2506
      %3133 = vmatprep.subr.bf16.mxu0 %v2511
      %3134 = vmatpush1.bf16.msra.mxu0 %v2510
      %3135 = vmatprep.subr.bf16.mxu0 %v2515
      %3136 = vmatpush1.bf16.msra.mxu0 %v2514
      %3137 = vmatprep.mubr.bf16.mxu0 %v1359
      %3138 = vmatmul.mubr.bf16.gmra.mrb[0].mxu0 %v1358
      %v3139 = vpop.f32.mrb[0].mxu0
      %v3140 = vadd.f32 %v3099, %v3139
      %v3141 = vpop.f32.mrb[0].mxu0
      %v3142 = vadd.f32 %v3101, %v3141
      %v3143 = vpop.f32.mrb[0].mxu0
      %v3144 = vpop.f32.mrb[0].mxu0
      %3145 = vdwg.mxu0
      %3146 = vmatprep.subr.bf16.mxu0 %v2519
      %3147 = vmatpush1.bf16.msra.mxu0 %v2518
      %3148 = vmatprep.subr.bf16.mxu0 %v2523
      %3149 = vmatpush1.bf16.msra.mxu0 %v2522
      %3150 = vmatprep.subr.bf16.mxu0 %v2527
      %3151 = vmatpush1.bf16.msra.mxu0 %v2526
      %3152 = vmatprep.subr.bf16.mxu0 %v2531
      %3153 = vmatpush1.bf16.msra.mxu0 %v2530
      %3154 = vmatprep.subr.bf16.mxu0 %v2535
      %3155 = vmatpush1.bf16.msra.mxu0 %v2534
      %3156 = vmatprep.subr.bf16.mxu0 %v2539
      %3157 = vmatpush1.bf16.msra.mxu0 %v2538
      %3158 = vmatprep.subr.bf16.mxu0 %v2543
      %3159 = vmatpush1.bf16.msra.mxu0 %v2542
      %3160 = vmatprep.subr.bf16.mxu0 %v2547
      %3161 = vmatpush1.bf16.msra.mxu0 %v2546
      %3162 = vmatprep.subr.bf16.mxu0 %v2551
      %3163 = vmatpush1.bf16.msra.mxu0 %v2550
      %3164 = vmatprep.subr.bf16.mxu0 %v2555
      %3165 = vmatpush1.bf16.msra.mxu0 %v2554
      %3166 = vmatprep.subr.bf16.mxu0 %v2559
      %3167 = vmatpush1.bf16.msra.mxu0 %v2558
      %3168 = vmatprep.subr.bf16.mxu0 %v2563
      %3169 = vmatpush1.bf16.msra.mxu0 %v2562
      %3170 = vmatprep.subr.bf16.mxu0 %v2567
      %3171 = vmatpush1.bf16.msra.mxu0 %v2566
      %3172 = vmatprep.subr.bf16.mxu0 %v2571
      %3173 = vmatpush1.bf16.msra.mxu0 %v2570
      %3174 = vmatprep.subr.bf16.mxu0 %v2575
      %3175 = vmatpush1.bf16.msra.mxu0 %v2574
      %3176 = vmatprep.subr.bf16.mxu0 %v2579
      %3177 = vmatpush1.bf16.msra.mxu0 %v2578
      %3178 = vmatprep.mubr.bf16.mxu0 %v1361
      %3179 = vmatmul.mubr.bf16.gmra.mrb[0].mxu0 %v1360
      %v3180 = vpop.f32.mrb[0].mxu0
      %v3181 = vadd.f32 %v3140, %v3180
      %v3182 = vpop.f32.mrb[0].mxu0
      %v3183 = vadd.f32 %v3142, %v3182
      %v3184 = vpop.f32.mrb[0].mxu0
      %v3185 = vpop.f32.mrb[0].mxu0
      %3186 = vdwg.mxu0
      %3187 = vmatprep.subr.bf16.mxu0 %v2583
      %3188 = vmatpush1.bf16.msra.mxu0 %v2582
      %3189 = vmatprep.subr.bf16.mxu0 %v2587
      %3190 = vmatpush1.bf16.msra.mxu0 %v2586
      %3191 = vmatprep.subr.bf16.mxu0 %v2591
      %3192 = vmatpush1.bf16.msra.mxu0 %v2590
      %3193 = vmatprep.subr.bf16.mxu0 %v2595
      %3194 = vmatpush1.bf16.msra.mxu0 %v2594
      %3195 = vmatprep.subr.bf16.mxu0 %v2599
      %3196 = vmatpush1.bf16.msra.mxu0 %v2598
      %3197 = vmatprep.subr.bf16.mxu0 %v2603
      %3198 = vmatpush1.bf16.msra.mxu0 %v2602
      %3199 = vmatprep.subr.bf16.mxu0 %v2607
      %3200 = vmatpush1.bf16.msra.mxu0 %v2606
      %3201 = vmatprep.subr.bf16.mxu0 %v2611
      %3202 = vmatpush1.bf16.msra.mxu0 %v2610
      %3203 = vmatprep.subr.bf16.mxu0 %v2615
      %3204 = vmatpush1.bf16.msra.mxu0 %v2614
      %3205 = vmatprep.subr.bf16.mxu0 %v2619
      %3206 = vmatpush1.bf16.msra.mxu0 %v2618
      %3207 = vmatprep.subr.bf16.mxu0 %v2623
      %3208 = vmatpush1.bf16.msra.mxu0 %v2622
      %3209 = vmatprep.subr.bf16.mxu0 %v2627
      %3210 = vmatpush1.bf16.msra.mxu0 %v2626
      %3211 = vmatprep.subr.bf16.mxu0 %v2631
      %3212 = vmatpush1.bf16.msra.mxu0 %v2630
      %3213 = vmatprep.subr.bf16.mxu0 %v2635
      %3214 = vmatpush1.bf16.msra.mxu0 %v2634
      %3215 = vmatprep.subr.bf16.mxu0 %v2639
      %3216 = vmatpush1.bf16.msra.mxu0 %v2638
      %3217 = vmatprep.subr.bf16.mxu0 %v2643
      %3218 = vmatpush1.bf16.msra.mxu0 %v2642
      %3219 = vmatprep.mubr.bf16.mxu0 %v1363
      %3220 = vmatmul.mubr.bf16.gmra.mrb[0].mxu0 %v1362
      %v3221 = vpop.f32.mrb[0].mxu0
      %v3222 = vadd.f32 %v3181, %v3221
      %v3223 = vpop.f32.mrb[0].mxu0
      %v3224 = vadd.f32 %v3183, %v3223
      %v3225 = vpop.f32.mrb[0].mxu0
      %v3226 = vpop.f32.mrb[0].mxu0
      %3227 = vdwg.mxu0
      %s3228 = scalar_lea.vmem [#allocation12], 2
      %v3229 = vld [vmem:[%s3228] ss:$8 sm:$0xf]
      %s3230 = scalar_lea.vmem [#allocation12], 3
      %v3231 = vld [vmem:[%s3230] ss:$8 sm:$0xf]
      %v3232 = vrot.slane %v3058, 4
      %v3233 = vadd.f32 %v3058, %v3232
      %v3234 = vrot.slane %v3233, 2
      %v3235 = vadd.f32 %v3233, %v3234
      %v3236 = vrot.slane %v3235, 1
      %v3237 = vadd.f32 %v3235, %v3236
      %v3238 = vrot.slane %v3060, 4
      %v3239 = vadd.f32 %v3060, %v3238
      %v3240 = vrot.slane %v3239, 2
      %v3241 = vadd.f32 %v3239, %v3240
      %v3242 = vrot.slane %v3241, 1
      %v3243 = vadd.f32 %v3241, %v3242
      %v3244 = vrot.slane %v3222, 4
      %v3245 = vadd.f32 %v3222, %v3244
      %v3246 = vrot.slane %v3245, 2
      %v3247 = vadd.f32 %v3245, %v3246
      %v3248 = vrot.slane %v3247, 1
      %v3249 = vadd.f32 %v3247, %v3248
      %v3250 = vrot.slane %v3224, 4
      %v3251 = vadd.f32 %v3224, %v3250
      %v3252 = vrot.slane %v3251, 2
      %v3253 = vadd.f32 %v3251, %v3252
      %v3254 = vrot.slane %v3253, 1
      %v3255 = vadd.f32 %v3253, %v3254
      %v3256 = vmul.f32 %v3237, %v1145
      %v3257 = vmul.f32 %v3243, %v1145
      %v3258 = vmul.f32 %v3249, %v1145
      %v3259 = vmul.f32 %v3255, %v1145
      %v3260 = vsub.f32 %v3058, %v3256
      %v3261 = vsub.f32 %v3060, %v3257
      %v3262 = vsub.f32 %v3222, %v3258
      %v3263 = vsub.f32 %v3224, %v3259
      %v3264 = vmul.f32 %v3260, %v3260
      %v3265 = vmul.f32 %v3261, %v3261
      %v3266 = vmul.f32 %v3262, %v3262
      %v3267 = vmul.f32 %v3263, %v3263
      %v3268 = vrot.slane %v3264, 4
      %v3269 = vadd.f32 %v3264, %v3268
      %v3270 = vrot.slane %v3269, 2
      %v3271 = vadd.f32 %v3269, %v3270
      %v3272 = vrot.slane %v3271, 1
      %v3273 = vadd.f32 %v3271, %v3272
      %v3274 = vrot.slane %v3265, 4
      %v3275 = vadd.f32 %v3265, %v3274
      %v3276 = vrot.slane %v3275, 2
      %v3277 = vadd.f32 %v3275, %v3276
      %v3278 = vrot.slane %v3277, 1
      %v3279 = vadd.f32 %v3277, %v3278
      %v3280 = vrot.slane %v3266, 4
      %v3281 = vadd.f32 %v3266, %v3280
      %v3282 = vrot.slane %v3281, 2
      %v3283 = vadd.f32 %v3281, %v3282
      %v3284 = vrot.slane %v3283, 1
      %v3285 = vadd.f32 %v3283, %v3284
      %v3286 = vrot.slane %v3267, 4
      %v3287 = vadd.f32 %v3267, %v3286
      %v3288 = vrot.slane %v3287, 2
      %v3289 = vadd.f32 %v3287, %v3288
      %v3290 = vrot.slane %v3289, 1
      %v3291 = vadd.f32 %v3289, %v3290
      %v3292 = vmul.f32 %v3273, %v1145
      %v3293 = vmul.f32 %v3279, %v1145
      %v3294 = vmul.f32 %v3285, %v1145
      %v3295 = vmul.f32 %v3291, %v1145
      %v3296 = vadd.f32 %v3292, 1e-05
      %v3297 = vadd.f32 %v3293, 1e-05
      %v3298 = vadd.f32 %v3294, 1e-05
      %v3299 = vadd.f32 %v3295, 1e-05
      %v3300 = vrsqrt.pop %v3296
      %v3301 = vrsqrt.pop %v3297
      %v3302 = vrsqrt.pop %v3298
      %v3303 = vrsqrt.pop %v3299
      %v3304 = vmul.f32 %v3260, %v3300
      %v3305 = vmul.f32 %v3261, %v3301
      %v3306 = vmul.f32 %v3262, %v3302
      %v3307 = vmul.f32 %v3263, %v3303
      %v3309 = vlaneseq
      %v3310 = vshrl.u32 %v3309, 7
      %v3311 = vsub.s32 0, %v3310
      %v3312 = vrot.slane %v3229, %v3311
      %v3313 = vlaneseq
      %v3314 = vshrl.u32 %v3313, 7
      %v3315 = vsub.s32 1, %v3314
      %v3316 = vrot.slane %v3229, %v3315
      %v3317 = vlaneseq
      %v3318 = vshrl.u32 %v3317, 7
      %v3319 = vsub.s32 2, %v3318
      %v3320 = vrot.slane %v3229, %v3319
      %v3321 = vlaneseq
      %v3322 = vshrl.u32 %v3321, 7
      %v3323 = vsub.s32 3, %v3322
      %v3324 = vrot.slane %v3229, %v3323
      %v3329 = vmul.f32 %v3304, %v3312
      %v3330 = vmul.f32 %v3305, %v3316
      %v3331 = vmul.f32 %v3306, %v3320
      %v3332 = vmul.f32 %v3307, %v3324
      %v3334 = vlaneseq
      %v3335 = vshrl.u32 %v3334, 7
      %v3336 = vsub.s32 0, %v3335
      %v3337 = vrot.slane %v3231, %v3336
      %v3338 = vlaneseq
      %v3339 = vshrl.u32 %v3338, 7
      %v3340 = vsub.s32 1, %v3339
      %v3341 = vrot.slane %v3231, %v3340
      %v3342 = vlaneseq
      %v3343 = vshrl.u32 %v3342, 7
      %v3344 = vsub.s32 2, %v3343
      %v3345 = vrot.slane %v3231, %v3344
      %v3346 = vlaneseq
      %v3347 = vshrl.u32 %v3346, 7
      %v3348 = vsub.s32 3, %v3347
      %v3349 = vrot.slane %v3231, %v3348
      %v3354 = vadd.f32 %v3329, %v3337
      %v3355 = vadd.f32 %v3330, %v3341
      %v3356 = vadd.f32 %v3331, %v3345
      %v3357 = vadd.f32 %v3332, %v3349
      %v3358 = vmax.f32 %v3354, 0.0
      %v3359 = vmax.f32 %v3355, 0.0
      %v3360 = vmax.f32 %v3356, 0.0
      %v3361 = vmax.f32 %v3357, 0.0
      %v3362 = vpack.c.bf16 %v3358, %v3358
      %v3363 = vpack.c.bf16 %v3359, %v3359
      %v3364 = vpack.c.bf16 %v3360, %v3360
      %v3365 = vpack.c.bf16 %v3361, %v3361
      %v3366 = vld [vmem:[#allocation9] sm:$0xf]
      %v3367 = vld [vmem:[#allocation9 + $0x4] sm:$0xf]
      %v3368 = vld [vmem:[#allocation9 + $0x8] sm:$0xf]
      %v3369 = vld [vmem:[#allocation9 + $0xc] sm:$0xf]
      %v3370 = vld [vmem:[#allocation9 + $0x10] sm:$0xf]
      %v3371 = vld [vmem:[#allocation9 + $0x14] sm:$0xf]
      %v3372 = vld [vmem:[#allocation9 + $0x18] sm:$0xf]
      %v3373 = vld [vmem:[#allocation9 + $0x1c] sm:$0xf]
      %v3374 = vld [vmem:[#allocation9 + $0x20] sm:$0xf]
      %v3375 = vld [vmem:[#allocation9 + $0x24] sm:$0xf]
      %v3376 = vld [vmem:[#allocation9 + $0x28] sm:$0xf]
      %v3377 = vld [vmem:[#allocation9 + $0x2c] sm:$0xf]
      %v3378 = vld [vmem:[#allocation9 + $0x30] sm:$0xf]
      %v3379 = vld [vmem:[#allocation9 + $0x34] sm:$0xf]
      %v3380 = vld [vmem:[#allocation9 + $0x38] sm:$0xf]
      %v3381 = vld [vmem:[#allocation9 + $0x3c] sm:$0xf]
      %v3382 = vld [vmem:[#allocation9 + $0x40] sm:$0xf]
      %v3383 = vld [vmem:[#allocation9 + $0x44] sm:$0xf]
      %v3384 = vld [vmem:[#allocation9 + $0x48] sm:$0xf]
      %v3385 = vld [vmem:[#allocation9 + $0x4c] sm:$0xf]
      %v3386 = vld [vmem:[#allocation9 + $0x50] sm:$0xf]
      %v3387 = vld [vmem:[#allocation9 + $0x54] sm:$0xf]
      %v3388 = vld [vmem:[#allocation9 + $0x58] sm:$0xf]
      %v3389 = vld [vmem:[#allocation9 + $0x5c] sm:$0xf]
      %v3390 = vld [vmem:[#allocation9 + $0x60] sm:$0xf]
      %v3391 = vld [vmem:[#allocation9 + $0x64] sm:$0xf]
      %v3392 = vld [vmem:[#allocation9 + $0x68] sm:$0xf]
      %v3393 = vld [vmem:[#allocation9 + $0x6c] sm:$0xf]
      %v3394 = vld [vmem:[#allocation9 + $0x70] sm:$0xf]
      %v3395 = vld [vmem:[#allocation9 + $0x74] sm:$0xf]
      %v3396 = vld [vmem:[#allocation9 + $0x78] sm:$0xf]
      %v3397 = vld [vmem:[#allocation9 + $0x7c] sm:$0xf]
      %v3398 = vld [vmem:[#allocation9 + $0x80] sm:$0xf]
      %v3399 = vld [vmem:[#allocation9 + $0x84] sm:$0xf]
      %v3400 = vld [vmem:[#allocation9 + $0x88] sm:$0xf]
      %v3401 = vld [vmem:[#allocation9 + $0x8c] sm:$0xf]
      %v3402 = vld [vmem:[#allocation9 + $0x90] sm:$0xf]
      %v3403 = vld [vmem:[#allocation9 + $0x94] sm:$0xf]
      %v3404 = vld [vmem:[#allocation9 + $0x98] sm:$0xf]
      %v3405 = vld [vmem:[#allocation9 + $0x9c] sm:$0xf]
      %v3406 = vld [vmem:[#allocation9 + $0xa0] sm:$0xf]
      %v3407 = vld [vmem:[#allocation9 + $0xa4] sm:$0xf]
      %v3408 = vld [vmem:[#allocation9 + $0xa8] sm:$0xf]
      %v3409 = vld [vmem:[#allocation9 + $0xac] sm:$0xf]
      %v3410 = vld [vmem:[#allocation9 + $0xb0] sm:$0xf]
      %v3411 = vld [vmem:[#allocation9 + $0xb4] sm:$0xf]
      %v3412 = vld [vmem:[#allocation9 + $0xb8] sm:$0xf]
      %v3413 = vld [vmem:[#allocation9 + $0xbc] sm:$0xf]
      %v3414 = vld [vmem:[#allocation9 + $0xc0] sm:$0xf]
      %v3415 = vld [vmem:[#allocation9 + $0xc4] sm:$0xf]
      %v3416 = vld [vmem:[#allocation9 + $0xc8] sm:$0xf]
      %v3417 = vld [vmem:[#allocation9 + $0xcc] sm:$0xf]
      %v3418 = vld [vmem:[#allocation9 + $0xd0] sm:$0xf]
      %v3419 = vld [vmem:[#allocation9 + $0xd4] sm:$0xf]
      %v3420 = vld [vmem:[#allocation9 + $0xd8] sm:$0xf]
      %v3421 = vld [vmem:[#allocation9 + $0xdc] sm:$0xf]
      %v3422 = vld [vmem:[#allocation9 + $0xe0] sm:$0xf]
      %v3423 = vld [vmem:[#allocation9 + $0xe4] sm:$0xf]
      %v3424 = vld [vmem:[#allocation9 + $0xe8] sm:$0xf]
      %v3425 = vld [vmem:[#allocation9 + $0xec] sm:$0xf]
      %v3426 = vld [vmem:[#allocation9 + $0xf0] sm:$0xf]
      %v3427 = vld [vmem:[#allocation9 + $0xf4] sm:$0xf]
      %v3428 = vld [vmem:[#allocation9 + $0xf8] sm:$0xf]
      %v3429 = vld [vmem:[#allocation9 + $0xfc] sm:$0xf]
      %v3494 = vunpack.c.l.b16 %v3366
      %v3495 = vunpack.c.l.b16 %v3367
      %v3496 = vunpack.c.l.b16 %v3368
      %v3497 = vunpack.c.l.b16 %v3369
      %v3498 = vunpack.c.l.b16 %v3370
      %v3499 = vunpack.c.l.b16 %v3371
      %v3500 = vunpack.c.l.b16 %v3372
      %v3501 = vunpack.c.l.b16 %v3373
      %v3502 = vunpack.c.l.b16 %v3374
      %v3503 = vunpack.c.l.b16 %v3375
      %v3504 = vunpack.c.l.b16 %v3376
      %v3505 = vunpack.c.l.b16 %v3377
      %v3506 = vunpack.c.l.b16 %v3378
      %v3507 = vunpack.c.l.b16 %v3379
      %v3508 = vunpack.c.l.b16 %v3380
      %v3509 = vunpack.c.l.b16 %v3381
      %v3510 = vunpack.c.l.b16 %v3382
      %v3511 = vunpack.c.l.b16 %v3383
      %v3512 = vunpack.c.l.b16 %v3384
      %v3513 = vunpack.c.l.b16 %v3385
      %v3514 = vunpack.c.l.b16 %v3386
      %v3515 = vunpack.c.l.b16 %v3387
      %v3516 = vunpack.c.l.b16 %v3388
      %v3517 = vunpack.c.l.b16 %v3389
      %v3518 = vunpack.c.l.b16 %v3390
      %v3519 = vunpack.c.l.b16 %v3391
      %v3520 = vunpack.c.l.b16 %v3392
      %v3521 = vunpack.c.l.b16 %v3393
      %v3522 = vunpack.c.l.b16 %v3394
      %v3523 = vunpack.c.l.b16 %v3395
      %v3524 = vunpack.c.l.b16 %v3396
      %v3525 = vunpack.c.l.b16 %v3397
      %v3526 = vunpack.c.l.b16 %v3398
      %v3527 = vunpack.c.l.b16 %v3399
      %v3528 = vunpack.c.l.b16 %v3400
      %v3529 = vunpack.c.l.b16 %v3401
      %v3530 = vunpack.c.l.b16 %v3402
      %v3531 = vunpack.c.l.b16 %v3403
      %v3532 = vunpack.c.l.b16 %v3404
      %v3533 = vunpack.c.l.b16 %v3405
      %v3534 = vunpack.c.l.b16 %v3406
      %v3535 = vunpack.c.l.b16 %v3407
      %v3536 = vunpack.c.l.b16 %v3408
      %v3537 = vunpack.c.l.b16 %v3409
      %v3538 = vunpack.c.l.b16 %v3410
      %v3539 = vunpack.c.l.b16 %v3411
      %v3540 = vunpack.c.l.b16 %v3412
      %v3541 = vunpack.c.l.b16 %v3413
      %v3542 = vunpack.c.l.b16 %v3414
      %v3543 = vunpack.c.l.b16 %v3415
      %v3544 = vunpack.c.l.b16 %v3416
      %v3545 = vunpack.c.l.b16 %v3417
      %v3546 = vunpack.c.l.b16 %v3418
      %v3547 = vunpack.c.l.b16 %v3419
      %v3548 = vunpack.c.l.b16 %v3420
      %v3549 = vunpack.c.l.b16 %v3421
      %v3550 = vunpack.c.l.b16 %v3422
      %v3551 = vunpack.c.l.b16 %v3423
      %v3552 = vunpack.c.l.b16 %v3424
      %v3553 = vunpack.c.l.b16 %v3425
      %v3554 = vunpack.c.l.b16 %v3426
      %v3555 = vunpack.c.l.b16 %v3427
      %v3556 = vunpack.c.l.b16 %v3428
      %v3557 = vunpack.c.l.b16 %v3429
      %v3558 = vpack.c.b16 %v3495, %v3494
      %v3559 = vpack.c.b16 %v3497, %v3496
      %v3560 = vpack.c.b16 %v3499, %v3498
      %v3561 = vpack.c.b16 %v3501, %v3500
      %v3562 = vpack.c.b16 %v3503, %v3502
      %v3563 = vpack.c.b16 %v3505, %v3504
      %v3564 = vpack.c.b16 %v3507, %v3506
      %v3565 = vpack.c.b16 %v3509, %v3508
      %v3566 = vpack.c.b16 %v3511, %v3510
      %v3567 = vpack.c.b16 %v3513, %v3512
      %v3568 = vpack.c.b16 %v3515, %v3514
      %v3569 = vpack.c.b16 %v3517, %v3516
      %v3570 = vpack.c.b16 %v3519, %v3518
      %v3571 = vpack.c.b16 %v3521, %v3520
      %v3572 = vpack.c.b16 %v3523, %v3522
      %v3573 = vpack.c.b16 %v3525, %v3524
      %v3574 = vpack.c.b16 %v3527, %v3526
      %v3575 = vpack.c.b16 %v3529, %v3528
      %v3576 = vpack.c.b16 %v3531, %v3530
      %v3577 = vpack.c.b16 %v3533, %v3532
      %v3578 = vpack.c.b16 %v3535, %v3534
      %v3579 = vpack.c.b16 %v3537, %v3536
      %v3580 = vpack.c.b16 %v3539, %v3538
      %v3581 = vpack.c.b16 %v3541, %v3540
      %v3582 = vpack.c.b16 %v3543, %v3542
      %v3583 = vpack.c.b16 %v3545, %v3544
      %v3584 = vpack.c.b16 %v3547, %v3546
      %v3585 = vpack.c.b16 %v3549, %v3548
      %v3586 = vpack.c.b16 %v3551, %v3550
      %v3587 = vpack.c.b16 %v3553, %v3552
      %v3588 = vpack.c.b16 %v3555, %v3554
      %v3589 = vpack.c.b16 %v3557, %v3556
      %3622 = vmatprep.subr.bf16.mxu0 0
      %3623 = vmatpush1.bf16.msra.mxu0 %v3558
      %3624 = vmatprep.subr.bf16.mxu0 0
      %3625 = vmatpush1.bf16.msra.mxu0 %v3559
      %3626 = vmatprep.subr.bf16.mxu0 0
      %3627 = vmatpush1.bf16.msra.mxu0 %v3560
      %3628 = vmatprep.subr.bf16.mxu0 0
      %3629 = vmatpush1.bf16.msra.mxu0 %v3561
      %3630 = vmatprep.subr.bf16.mxu0 0
      %3631 = vmatpush1.bf16.msra.mxu0 %v3562
      %3632 = vmatprep.subr.bf16.mxu0 0
      %3633 = vmatpush1.bf16.msra.mxu0 %v3563
      %3634 = vmatprep.subr.bf16.mxu0 0
      %3635 = vmatpush1.bf16.msra.mxu0 %v3564
      %3636 = vmatprep.subr.bf16.mxu0 0
      %3637 = vmatpush1.bf16.msra.mxu0 %v3565
      %3638 = vmatprep.subr.bf16.mxu0 0
      %3639 = vmatpush1.bf16.msra.mxu0 %v3566
      %3640 = vmatprep.subr.bf16.mxu0 0
      %3641 = vmatpush1.bf16.msra.mxu0 %v3567
      %3642 = vmatprep.subr.bf16.mxu0 0
      %3643 = vmatpush1.bf16.msra.mxu0 %v3568
      %3644 = vmatprep.subr.bf16.mxu0 0
      %3645 = vmatpush1.bf16.msra.mxu0 %v3569
      %3646 = vmatprep.subr.bf16.mxu0 0
      %3647 = vmatpush1.bf16.msra.mxu0 %v3570
      %3648 = vmatprep.subr.bf16.mxu0 0
      %3649 = vmatpush1.bf16.msra.mxu0 %v3571
      %3650 = vmatprep.subr.bf16.mxu0 0
      %3651 = vmatpush1.bf16.msra.mxu0 %v3572
      %3652 = vmatprep.subr.bf16.mxu0 0
      %3653 = vmatpush1.bf16.msra.mxu0 %v3573
      %3654 = vmatprep.mubr.bf16.mxu0 %v3363
      %3655 = vmatmul.mubr.bf16.gmra.mrb[0].mxu0 %v3362
      %v3656 = vpop.f32.mrb[0].mxu0
      %v3657 = vadd.f32 0.0, %v3656
      %v3658 = vpop.f32.mrb[0].mxu0
      %v3659 = vpop.f32.mrb[0].mxu0
      %v3660 = vpop.f32.mrb[0].mxu0
      %3661 = vdwg.mxu0
      %3662 = vmatprep.subr.bf16.mxu0 0
      %3663 = vmatpush1.bf16.msra.mxu0 %v3574
      %3664 = vmatprep.subr.bf16.mxu0 0
      %3665 = vmatpush1.bf16.msra.mxu0 %v3575
      %3666 = vmatprep.subr.bf16.mxu0 0
      %3667 = vmatpush1.bf16.msra.mxu0 %v3576
      %3668 = vmatprep.subr.bf16.mxu0 0
      %3669 = vmatpush1.bf16.msra.mxu0 %v3577
      %3670 = vmatprep.subr.bf16.mxu0 0
      %3671 = vmatpush1.bf16.msra.mxu0 %v3578
      %3672 = vmatprep.subr.bf16.mxu0 0
      %3673 = vmatpush1.bf16.msra.mxu0 %v3579
      %3674 = vmatprep.subr.bf16.mxu0 0
      %3675 = vmatpush1.bf16.msra.mxu0 %v3580
      %3676 = vmatprep.subr.bf16.mxu0 0
      %3677 = vmatpush1.bf16.msra.mxu0 %v3581
      %3678 = vmatprep.subr.bf16.mxu0 0
      %3679 = vmatpush1.bf16.msra.mxu0 %v3582
      %3680 = vmatprep.subr.bf16.mxu0 0
      %3681 = vmatpush1.bf16.msra.mxu0 %v3583
      %3682 = vmatprep.subr.bf16.mxu0 0
      %3683 = vmatpush1.bf16.msra.mxu0 %v3584
      %3684 = vmatprep.subr.bf16.mxu0 0
      %3685 = vmatpush1.bf16.msra.mxu0 %v3585
      %3686 = vmatprep.subr.bf16.mxu0 0
      %3687 = vmatpush1.bf16.msra.mxu0 %v3586
      %3688 = vmatprep.subr.bf16.mxu0 0
      %3689 = vmatpush1.bf16.msra.mxu0 %v3587
      %3690 = vmatprep.subr.bf16.mxu0 0
      %3691 = vmatpush1.bf16.msra.mxu0 %v3588
      %3692 = vmatprep.subr.bf16.mxu0 0
      %3693 = vmatpush1.bf16.msra.mxu0 %v3589
      %3694 = vmatprep.mubr.bf16.mxu0 %v3365
      %3695 = vmatmul.mubr.bf16.gmra.mrb[0].mxu0 %v3364
      %v3696 = vpop.f32.mrb[0].mxu0
      %v3697 = vadd.f32 %v3657, %v3696
      %v3698 = vpop.f32.mrb[0].mxu0
      %v3699 = vpop.f32.mrb[0].mxu0
      %v3700 = vpop.f32.mrb[0].mxu0
      %3701 = vdwg.mxu0
      %v3702 = vld [vmem:[#allocation12 + $0x4] ss:$0 sm:$0xff]
      %v3703 = vld [vmem:[#allocation12 + $0x5] ss:$0 sm:$0xff]
      %v3704 = vrot.slane %v3697, 4
      %v3705 = vadd.f32 %v3697, %v3704
      %v3706 = vrot.slane %v3705, 2
      %v3707 = vadd.f32 %v3705, %v3706
      %v3708 = vrot.slane %v3707, 1
      %v3709 = vadd.f32 %v3707, %v3708
      %v3710 = vmul.f32 %v3709, %v1145
      %v3711 = vsub.f32 %v3697, %v3710
      %v3712 = vmul.f32 %v3711, %v3711
      %v3713 = vrot.slane %v3712, 4
      %v3714 = vadd.f32 %v3712, %v3713
      %v3715 = vrot.slane %v3714, 2
      %v3716 = vadd.f32 %v3714, %v3715
      %v3717 = vrot.slane %v3716, 1
      %v3718 = vadd.f32 %v3716, %v3717
      %v3719 = vmul.f32 %v3718, %v1145
      %v3720 = vadd.f32 %v3719, 1e-05
      %v3721 = vrsqrt.pop %v3720
      %v3722 = vmul.f32 %v3711, %v3721
      %v3723 = vmul.f32 %v3722, %v3702
      %v3724 = vadd.f32 %v3723, %v3703
      %v3725 = vmax.f32 %v3724, 0.0
      %v3726 = vpack.c.bf16 %v3725, %v3725
      %v3727 = vld [vmem:[#allocation11] sm:$0xf]
      %v3728 = vld [vmem:[#allocation11 + $0x4] sm:$0xf]
      %v3729 = vld [vmem:[#allocation11 + $0x8] sm:$0xf]
      %v3730 = vld [vmem:[#allocation11 + $0xc] sm:$0xf]
      %v3731 = vld [vmem:[#allocation11 + $0x10] sm:$0xf]
      %v3732 = vld [vmem:[#allocation11 + $0x14] sm:$0xf]
      %v3733 = vld [vmem:[#allocation11 + $0x18] sm:$0xf]
      %v3734 = vld [vmem:[#allocation11 + $0x1c] sm:$0xf]
      %v3735 = vld [vmem:[#allocation11 + $0x20] sm:$0xf]
      %v3736 = vld [vmem:[#allocation11 + $0x24] sm:$0xf]
      %v3737 = vld [vmem:[#allocation11 + $0x28] sm:$0xf]
      %v3738 = vld [vmem:[#allocation11 + $0x2c] sm:$0xf]
      %v3739 = vld [vmem:[#allocation11 + $0x30] sm:$0xf]
      %v3740 = vld [vmem:[#allocation11 + $0x34] sm:$0xf]
      %v3741 = vld [vmem:[#allocation11 + $0x38] sm:$0xf]
      %v3742 = vld [vmem:[#allocation11 + $0x3c] sm:$0xf]
      %v3743 = vld [vmem:[#allocation12 + $0x6] ss:$0 sm:$0xff]
      %v3760 = vunpack.c.l.b16 %v3727
      %v3761 = vunpack.c.l.b16 %v3728
      %v3762 = vunpack.c.l.b16 %v3729
      %v3763 = vunpack.c.l.b16 %v3730
      %v3764 = vunpack.c.l.b16 %v3731
      %v3765 = vunpack.c.l.b16 %v3732
      %v3766 = vunpack.c.l.b16 %v3733
      %v3767 = vunpack.c.l.b16 %v3734
      %v3768 = vunpack.c.l.b16 %v3735
      %v3769 = vunpack.c.l.b16 %v3736
      %v3770 = vunpack.c.l.b16 %v3737
      %v3771 = vunpack.c.l.b16 %v3738
      %v3772 = vunpack.c.l.b16 %v3739
      %v3773 = vunpack.c.l.b16 %v3740
      %v3774 = vunpack.c.l.b16 %v3741
      %v3775 = vunpack.c.l.b16 %v3742
      %v3776 = vpack.c.b16 %v3761, %v3760
      %v3777 = vpack.c.b16 %v3763, %v3762
      %v3778 = vpack.c.b16 %v3765, %v3764
      %v3779 = vpack.c.b16 %v3767, %v3766
      %v3780 = vpack.c.b16 %v3769, %v3768
      %v3781 = vpack.c.b16 %v3771, %v3770
      %v3782 = vpack.c.b16 %v3773, %v3772
      %v3783 = vpack.c.b16 %v3775, %v3774
      %3792 = vmatprep.subr.bf16.mxu0 0
      %3793 = vmatpush1.bf16.msra.mxu0 %v3776
      %3794 = vmatprep.subr.bf16.mxu0 0
      %3795 = vmatpush1.bf16.msra.mxu0 %v3777
      %3796 = vmatprep.subr.bf16.mxu0 0
      %3797 = vmatpush1.bf16.msra.mxu0 %v3778
      %3798 = vmatprep.subr.bf16.mxu0 0
      %3799 = vmatpush1.bf16.msra.mxu0 %v3779
      %3800 = vmatprep.subr.bf16.mxu0 0
      %3801 = vmatpush1.bf16.msra.mxu0 %v3780
      %3802 = vmatprep.subr.bf16.mxu0 0
      %3803 = vmatpush1.bf16.msra.mxu0 %v3781
      %3804 = vmatprep.subr.bf16.mxu0 0
      %3805 = vmatpush1.bf16.msra.mxu0 %v3782
      %3806 = vmatprep.subr.bf16.mxu0 0
      %3807 = vmatpush1.bf16.msra.mxu0 %v3783
      %3808 = vmatprep.subr.bf16.mxu0 0
      %3809 = vmatpush1.bf16.msra.mxu0 0
      %3810 = vmatprep.subr.bf16.mxu0 0
      %3811 = vmatpush1.bf16.msra.mxu0 0
      %3812 = vmatprep.subr.bf16.mxu0 0
      %3813 = vmatpush1.bf16.msra.mxu0 0
      %3814 = vmatprep.subr.bf16.mxu0 0
      %3815 = vmatpush1.bf16.msra.mxu0 0
      %3816 = vmatprep.subr.bf16.mxu0 0
      %3817 = vmatpush1.bf16.msra.mxu0 0
      %3818 = vmatprep.subr.bf16.mxu0 0
      %3819 = vmatpush1.bf16.msra.mxu0 0
      %3820 = vmatprep.subr.bf16.mxu0 0
      %3821 = vmatpush1.bf16.msra.mxu0 0
      %3822 = vmatprep.subr.bf16.mxu0 0
      %3823 = vmatpush1.bf16.msra.mxu0 0
      %3824 = vmatprep.mubr.bf16.mxu0 0
      %3825 = vmatmul.mubr.bf16.gmra.mrb[0].mxu0 %v3726
      %v3826 = vpop.f32.mrb[0].mxu0
      %v3827 = vadd.f32 %v3743, %v3826
      %v3828 = vpop.f32.mrb[0].mxu0
      %v3829 = vpop.f32.mrb[0].mxu0
      %v3830 = vpop.f32.mrb[0].mxu0
      %3831 = vdwg.mxu0
      %v3832 = vlaneseq
      %v3833 = vand.u32 %v3832, 127
      %vm3834 = vcmp.ge.s32.totalorder %v3833, 32
      %vm3835 = vcmp.lt.s32.totalorder %v3833, 42
      %vm3836 = vmand %vm3834, %vm3835
      %v3837 = vsel %vm3836, %v3827, -1e+30
      %3838 = vmax.xlane.f32.xlu0 %v3837
      %v3839 = vpop.xlane.xlu0 %3838
      %v3840 = vsub.f32 %v3827, %v3839
      %v3841 = vmul.f32 %v3840, 1.442695
      %v3842 = vpow.pop %v3841
      %v3843 = vsel %vm3836, %v3842, 0.0
      %3844 = vadd.xlane.f32.xlu0 %v3843
      %v3845 = vpop.xlane.xlu0 %3844
      %v3846 = vrcp.pop %v3845
      %v3847 = vmul.f32 %v3843, %v3846
      %vm3848 = vcmp.lt.s32.totalorder %v3833, 32
      %v3849 = vsel %vm3848, %v3827, %v3847
      %3850 = vst [vmem:[#allocation14] sm:$0xff] %v3849
    $region57: #{tpu_custom_call.1} parent=1 // pred_fallthru
      _
    // Predicated region
    $region58: #{tpu_custom_call.1} parent=1 // pred_check
      _
    $region59: #{tpu_custom_call.1} parent=1 // pred_check_branch
      %3852 = sbr.rel (0) target = $region61
    $region60: #{tpu_custom_call.1} parent=1 // pred_region
      %s3854 = ssub.s32 128, 128
      %3855 = vsyncadd [#allocation5], %s3854
      %s3857 = sshll.u32 [#allocation14], 4
      %s3858 = int_to_ptr.vmem [resolvable:$true] %s3857
      %3860 = dma.vmem_to_hbm [thread:$0]  %s3858, 128, %s6, [#allocation5]
    $region61: #{tpu_custom_call.1} parent=1 // pred_fallthru
      _
    // Predicated region
    $region62: #{tpu_custom_call.1} parent=1 // pred_check
      _
    $region63: #{tpu_custom_call.1} parent=1 // pred_check_branch
      %3862 = sbr.rel (0) target = $region65
    $region64: #{tpu_custom_call.1} parent=1 // pred_region
      %3863 = dma.done [#allocation5], 128
    $region65: #{tpu_custom_call.1} parent=1 // pred_fallthru
      _
    %3864 = vsyncpa [#allocation4], 1
    %3865 = vsyncpa [#allocation7], 1
    %3866 = vsyncpa [#allocation10], 1
    %3867 = vsyncpa [#allocation13], 1
    %3868 = vsyncpa [#allocation5], 1

</llo_original>
